<compile_context>
chip_gen: v7x
topology: tpu7x:2x2x1
jax: 0.10.0
libtpu: 0.0.40
codegen_flags: <defaults>
</compile_context>

<pallas_src>
import jax
import jax.numpy as jnp
from jax.experimental import pallas as pl
from jax.experimental.pallas import tpu as pltpu


def _round_up(x, m):
    return ((x + m - 1) // m) * m


# ----------------------------- Pallas kernels ------------------------------

def _node_kernel(rowsum_ref, a_ref, w0_ref, b0_ref, w1_ref, b1_ref,
                 w2_ref, b2_ref, w3_ref, b3_ref, out_ref):
    """Node pipeline for one destination-row tile of A_hat.

    conv_1's aggregation collapses algebraically (all h0 rows identical), so the
    only A_hat matmul left is conv_2's (tm, N) @ (N, 32) with bf16 operands and
    f32 accumulation.
    """
    r = w0_ref[...] + b0_ref[...]                                   # (1, 8): h0 row
    # conv_1 + ReLU for ALL source nodes:  (rowsum ⊙ h0) @ W1 == rowsum ⊙ (h0 @ W1)
    h0s = rowsum_ref[...] * r                                       # (Np, 8)
    h1 = jnp.maximum(
        jnp.dot(h0s, w1_ref[...], preferred_element_type=jnp.float32)
        + b1_ref[...], 0.0)                                         # (Np, 16)
    m1 = jnp.dot(h1, w2_ref[...], preferred_element_type=jnp.float32)  # (Np, 32)

    # conv_2 + ReLU: bf16 A_hat row-tile @ bf16 m1, f32 accumulation.
    h2 = jnp.maximum(
        jnp.dot(a_ref[...], m1.astype(jnp.bfloat16),
                preferred_element_type=jnp.float32) + b2_ref[...], 0.0)  # (tm, 32)

    # fully_connected_nodes + ReLU.
    out_ref[...] = jnp.maximum(
        jnp.dot(h2, w3_ref[...], preferred_element_type=jnp.float32)
        + b3_ref[...], 0.0)                                         # (tm, 32)


def _edge_kernel(ew_ref, ce_ref, ns_ref, nd_ref,
                 w4e_ref, w4c_ref, w4s_ref, w4d_ref, b4_ref,
                 w5_ref, b5_ref, out_ref):
    """Edge head on one tile of edges without materializing the 66-wide concat.

    fully_connected_edges_1 has NO activation (matches the reference), then
    fully_connected_edges_2.  Output head is padded to 128 lanes (lane-dense
    stores); the wrapper slices the true 2 columns.
    """
    h = (ew_ref[...] * w4e_ref[...]
         + ce_ref[...] * w4c_ref[...]
         + jnp.dot(ns_ref[...], w4s_ref[...], preferred_element_type=jnp.float32)
         + jnp.dot(nd_ref[...], w4d_ref[...], preferred_element_type=jnp.float32)
         + b4_ref[...])                                             # (te, 32)
    out_ref[...] = (jnp.dot(h, w5_ref[...], preferred_element_type=jnp.float32)
                    + b5_ref[...])                                  # (te, 128)


# ------------------------------ wrappers ------------------------------------

def _choose_row_tile(n_pad):
    """Largest row tile (multiple of 8, divides n_pad) whose double-buffered
    bf16 A_hat slab stays under ~8 MiB (safe on v5e/v6e/v7x scoped VMEM)."""
    tm = min(256, n_pad)
    while tm > 8 and 2 * tm * n_pad * 2 > 8 * 1024 * 1024:
        tm //= 2
    return tm


def node_pipeline(a_hat, rowsum, params):
    n_pad = a_hat.shape[0]
    out_dim = params["w3"].shape[1]
    tm = _choose_row_tile(n_pad)
    full = lambda i: (0, 0)
    row = lambda i: (i, 0)
    weights = (params["w0"], params["b0"], params["w1"], params["b1"],
               params["w2"], params["b2"], params["w3"], params["b3"])
    return pl.pallas_call(
        _node_kernel,
        out_shape=jax.ShapeDtypeStruct((n_pad, out_dim), jnp.float32),
        grid=(n_pad // tm,),
        in_specs=[pl.BlockSpec((n_pad, 1), full),        # rowsum (resident)
                  pl.BlockSpec((tm, n_pad), row)]        # A_hat row tile (bf16)
                 + [pl.BlockSpec(w.shape, full) for w in weights],
        out_specs=pl.BlockSpec((tm, out_dim), row),
        compiler_params=pltpu.CompilerParams(
            dimension_semantics=("parallel",),
            vmem_limit_bytes=32 * 1024 * 1024),
    )(rowsum, a_hat, *weights)


def edge_head(ew, ce, nsrc, ndst, params, te):
    e_pad = ew.shape[0]
    w4, b4, w5, b5 = params["w4"], params["b4"], params["w5"], params["b5"]
    half = (w4.shape[0] - 2) // 2                        # 32
    w4_ew, w4_ce = w4[0:1], w4[1:2]
    w4_src, w4_dst = w4[2:2 + half], w4[2 + half:2 + 2 * half]
    out_w = 128                                          # lane-dense store width
    w5p = jnp.zeros((w5.shape[0], out_w), jnp.float32).at[:, :w5.shape[1]].set(w5)
    b5p = jnp.zeros((1, out_w), jnp.float32).at[:, :b5.shape[1]].set(b5)
    full = lambda i: (0, 0)
    row = lambda i: (i, 0)
    consts = (w4_ew, w4_ce, w4_src, w4_dst, b4, w5p, b5p)
    return pl.pallas_call(
        _edge_kernel,
        out_shape=jax.ShapeDtypeStruct((e_pad, out_w), jnp.float32),
        grid=(e_pad // te,),
        in_specs=[pl.BlockSpec((te, 1), row), pl.BlockSpec((te, 1), row),
                  pl.BlockSpec((te, nsrc.shape[1]), row),
                  pl.BlockSpec((te, ndst.shape[1]), row)]
                 + [pl.BlockSpec(c.shape, full) for c in consts],
        out_specs=pl.BlockSpec((te, out_w), row),
        compiler_params=pltpu.CompilerParams(dimension_semantics=("parallel",)),
    )(ew, ce, nsrc, ndst, *consts)


# ------------------------------ JAX glue ------------------------------------

def gcn_norm_dense(edge_index, num_nodes, n_pad):
    """Dense D^-1/2 (A + I) D^-1/2 (PyG gcn_norm, unit weights, self loops),
    zero-padded to n_pad, cast to bf16; plus analytic row-sum (no N^2 reduce)."""
    src, dst = edge_index[0], edge_index[1]
    loop = jnp.arange(num_nodes, dtype=src.dtype)
    src_all = jnp.concatenate([src, loop])
    dst_all = jnp.concatenate([dst, loop])
    deg = jnp.zeros((num_nodes,), jnp.float32).at[dst_all].add(1.0)
    dinv = jnp.where(deg > 0, jax.lax.rsqrt(deg), 0.0)
    norm = dinv[src_all] * dinv[dst_all]
    a_hat = (jnp.zeros((n_pad, n_pad), jnp.float32)
             .at[dst_all, src_all].add(norm)
             .astype(jnp.bfloat16))
    # rowsum(A_hat)[i] = dinv[i] * (dinv[i] + sum_{edges j->i} dinv[j])
    s = jnp.zeros((num_nodes,), jnp.float32).at[dst].add(dinv[src])
    rowsum = dinv * (dinv + s)
    rowsum = jnp.pad(rowsum, (0, n_pad - num_nodes)).reshape(n_pad, 1)
    return a_hat, rowsum


def init_params(key):
    node_sizes = [8, 16, 32, 32]
    edge_in = node_sizes[-1] * 2 + 2           # 66
    edge_sizes = [edge_in, 32, 2]
    shapes = {
        "w0": (1, node_sizes[0]),              "b0": (1, node_sizes[0]),
        "w1": (node_sizes[0], node_sizes[1]),  "b1": (1, node_sizes[1]),
        "w2": (node_sizes[1], node_sizes[2]),  "b2": (1, node_sizes[2]),
        "w3": (node_sizes[2], node_sizes[3]),  "b3": (1, node_sizes[3]),
        "w4": (edge_sizes[0], edge_sizes[1]),  "b4": (1, edge_sizes[1]),
        "w5": (edge_sizes[1], edge_sizes[2]),  "b5": (1, edge_sizes[2]),
    }
    params = {}
    names = sorted(shapes)
    keys = jax.random.split(key, len(names))
    for k, name in zip(keys, names):
        shp = shapes[name]
        scale = 1.0 / float(max(shp[0], 1)) ** 0.5
        params[name] = jax.random.uniform(k, shp, jnp.float32, -1.0, 1.0) * scale
    return params


def kepce_gcn_forward(params, edge_index, edge_weights, counter_edge, num_nodes):
    n_pad = _round_up(max(num_nodes, 1), 256)
    a_hat, rowsum = gcn_norm_dense(edge_index, num_nodes, n_pad)
    node_feat = node_pipeline(a_hat, rowsum, params)               # [n_pad, 32]

    src, dst = edge_index[0], edge_index[1]
    e = edge_index.shape[1]
    te = 256
    e_pad = _round_up(max(e, 1), te)
    pad_e = e_pad - e
    # TODO(synk): data-dependent row gather stays in plain JAX; could be fused into
    # the edge kernel via scalar-prefetch indices if it ever dominates.
    nsrc = node_feat[src]                                          # [E, 32]
    ndst = node_feat[dst]                                          # [E, 32]
    ew = edge_weights.reshape(-1, 1).astype(jnp.float32)
    ce = counter_edge.reshape(-1, 1).astype(jnp.float32)
    if pad_e:
        pad2 = ((0, pad_e), (0, 0))
        ew, ce = jnp.pad(ew, pad2), jnp.pad(ce, pad2)
        nsrc, ndst = jnp.pad(nsrc, pad2), jnp.pad(ndst, pad2)

    scores_pad = edge_head(ew, ce, nsrc, ndst, params, te)         # [e_pad, 128]
    return scores_pad[:e, :2]                                      # [E, 2]


# ------------------------------- demo ---------------------------------------

if __name__ == "__main__":
    key = jax.random.PRNGKey(0)
    pkey, skey, okey, wkey, ckey = jax.random.split(key, 5)

    num_nodes = 16
    num_edges = 32

    params = init_params(pkey)

    src = jax.random.randint(skey, (num_edges,), 0, num_nodes, dtype=jnp.int32)
    off = jax.random.randint(okey, (num_edges,), 1, num_nodes, dtype=jnp.int32)
    dst = (src + off) % num_nodes                                  # no self-loops
    edge_index = jnp.stack([src, dst]).astype(jnp.int32)           # [2, E]
    edge_weights = jax.random.uniform(wkey, (num_edges,), jnp.float32)
    counter_edge = jax.random.bernoulli(ckey, 0.5, (num_edges,)).astype(jnp.float32)

    fwd = jax.jit(kepce_gcn_forward, static_argnums=4)
    scores = fwd(params, edge_index, edge_weights, counter_edge, num_nodes)
    jax.block_until_ready(scores)

    assert scores.shape == (num_edges, 2)
    assert scores.dtype == jnp.float32
    print("KERNEL_OK")
</pallas_src>

<mosaic_0001>
module attributes {stable_mosaic.version = 11 : i64} {
  func.func private @main(%arg0: i32) attributes {dimension_semantics = [#tpu.dimension_semantics<core_parallel>], iteration_bounds = array<i64: 2>, tpu.core_type = #tpu.core_type<sc_scalar_subcore>, window_params = []} {
    return
  }
}

module attributes {stable_mosaic.version = 11 : i64} {
  func.func private @main(%arg0: i32) attributes {dimension_semantics = [#tpu.dimension_semantics<core_parallel>], iteration_bounds = array<i64: 2>, tpu.core_type = #tpu.core_type<sc_scalar_subcore>, window_params = []} {
    return
  }
}

module attributes {stable_mosaic.version = 11 : i64} {
  func.func @_node_kernel(%arg0: i32, %arg1: memref<256x1xf32, #tpu.memory_space<vmem>>, %arg2: memref<256x256xbf16, #tpu.memory_space<vmem>>, %arg3: memref<1x8xf32, #tpu.memory_space<vmem>>, %arg4: memref<1x8xf32, #tpu.memory_space<vmem>>, %arg5: memref<8x16xf32, #tpu.memory_space<vmem>>, %arg6: memref<1x16xf32, #tpu.memory_space<vmem>>, %arg7: memref<16x32xf32, #tpu.memory_space<vmem>>, %arg8: memref<1x32xf32, #tpu.memory_space<vmem>>, %arg9: memref<32x32xf32, #tpu.memory_space<vmem>>, %arg10: memref<1x32xf32, #tpu.memory_space<vmem>>, %arg11: memref<256x32xf32, #tpu.memory_space<vmem>>) attributes {dimension_semantics = [#tpu.dimension_semantics<parallel>], iteration_bounds = array<i64: 1>, scalar_prefetch = 0 : i64, scratch_operands = 0 : i64, tpu.core_type = #tpu.core_type<tc>, window_params = [{pipeline_mode = #tpu.pipeline_mode<synchronous>, transform_indices = @transform_0, window_bounds = array<i64: 256, 1>}, {transform_indices = @transform_1, window_bounds = array<i64: 256, 256>}, {pipeline_mode = #tpu.pipeline_mode<synchronous>, transform_indices = @transform_2, window_bounds = array<i64: 1, 8>}, {pipeline_mode = #tpu.pipeline_mode<synchronous>, transform_indices = @transform_3, window_bounds = array<i64: 1, 8>}, {pipeline_mode = #tpu.pipeline_mode<synchronous>, transform_indices = @transform_4, window_bounds = array<i64: 8, 16>}, {pipeline_mode = #tpu.pipeline_mode<synchronous>, transform_indices = @transform_5, window_bounds = array<i64: 1, 16>}, {pipeline_mode = #tpu.pipeline_mode<synchronous>, transform_indices = @transform_6, window_bounds = array<i64: 16, 32>}, {pipeline_mode = #tpu.pipeline_mode<synchronous>, transform_indices = @transform_7, window_bounds = array<i64: 1, 32>}, {pipeline_mode = #tpu.pipeline_mode<synchronous>, transform_indices = @transform_8, window_bounds = array<i64: 32, 32>}, {pipeline_mode = #tpu.pipeline_mode<synchronous>, transform_indices = @transform_9, window_bounds = array<i64: 1, 32>}, {transform_indices = @transform_10, window_bounds = array<i64: 256, 32>}]} {
    %c0 = arith.constant 0 : index
    %c0_0 = arith.constant 0 : index
    %0 = vector.load %arg3[%c0, %c0_0] : memref<1x8xf32, #tpu.memory_space<vmem>>, vector<1x8xf32>
    %c0_1 = arith.constant 0 : index
    %c0_2 = arith.constant 0 : index
    %1 = vector.load %arg4[%c0_1, %c0_2] : memref<1x8xf32, #tpu.memory_space<vmem>>, vector<1x8xf32>
    %2 = arith.addf %0, %1 : vector<1x8xf32>
    %c0_3 = arith.constant 0 : index
    %c0_4 = arith.constant 0 : index
    %3 = vector.load %arg1[%c0_3, %c0_4] : memref<256x1xf32, #tpu.memory_space<vmem>>, vector<256x1xf32>
    %4 = vector.broadcast %3 : vector<256x1xf32> to vector<256x8xf32>
    %5 = vector.broadcast %2 : vector<1x8xf32> to vector<256x8xf32>
    %6 = arith.mulf %4, %5 : vector<256x8xf32>
    %c0_5 = arith.constant 0 : index
    %c0_6 = arith.constant 0 : index
    %7 = vector.load %arg5[%c0_5, %c0_6] : memref<8x16xf32, #tpu.memory_space<vmem>>, vector<8x16xf32>
    %cst = arith.constant dense<0.000000e+00> : vector<256x16xf32>
    %8 = tpu.matmul %6, %7, %cst {dimension_numbers = #tpu.dot_dimension_numbers<[1], [0], [0], [1], [0, 0, 1, 1], [], []>} : vector<256x8xf32>, vector<8x16xf32>, vector<256x16xf32> -> vector<256x16xf32>
    %c0_7 = arith.constant 0 : index
    %c0_8 = arith.constant 0 : index
    %9 = vector.load %arg6[%c0_7, %c0_8] : memref<1x16xf32, #tpu.memory_space<vmem>>, vector<1x16xf32>
    %10 = vector.broadcast %9 : vector<1x16xf32> to vector<256x16xf32>
    %11 = arith.addf %8, %10 : vector<256x16xf32>
    %cst_9 = arith.constant 0.000000e+00 : f32
    %12 = vector.broadcast %cst_9 : f32 to vector<256x16xf32>
    %13 = arith.maximumf %11, %12 : vector<256x16xf32>
    %c0_10 = arith.constant 0 : index
    %c0_11 = arith.constant 0 : index
    %14 = vector.load %arg7[%c0_10, %c0_11] : memref<16x32xf32, #tpu.memory_space<vmem>>, vector<16x32xf32>
    %cst_12 = arith.constant dense<0.000000e+00> : vector<256x32xf32>
    %15 = tpu.matmul %13, %14, %cst_12 {dimension_numbers = #tpu.dot_dimension_numbers<[1], [0], [0], [1], [0, 0, 1, 1], [], []>} : vector<256x16xf32>, vector<16x32xf32>, vector<256x32xf32> -> vector<256x32xf32>
    %c0_13 = arith.constant 0 : index
    %c0_14 = arith.constant 0 : index
    %16 = vector.load %arg2[%c0_13, %c0_14] : memref<256x256xbf16, #tpu.memory_space<vmem>>, vector<256x256xbf16>
    %17 = arith.truncf %15 : vector<256x32xf32> to vector<256x32xbf16>
    %cst_15 = arith.constant dense<0.000000e+00> : vector<256x32xf32>
    %18 = tpu.matmul %16, %17, %cst_15 {dimension_numbers = #tpu.dot_dimension_numbers<[1], [0], [0], [1], [0, 0, 1, 1], [], []>} : vector<256x256xbf16>, vector<256x32xbf16>, vector<256x32xf32> -> vector<256x32xf32>
    %c0_16 = arith.constant 0 : index
    %c0_17 = arith.constant 0 : index
    %19 = vector.load %arg8[%c0_16, %c0_17] : memref<1x32xf32, #tpu.memory_space<vmem>>, vector<1x32xf32>
    %20 = vector.broadcast %19 : vector<1x32xf32> to vector<256x32xf32>
    %21 = arith.addf %18, %20 : vector<256x32xf32>
    %cst_18 = arith.constant 0.000000e+00 : f32
    %22 = vector.broadcast %cst_18 : f32 to vector<256x32xf32>
    %23 = arith.maximumf %21, %22 : vector<256x32xf32>
    %c0_19 = arith.constant 0 : index
    %c0_20 = arith.constant 0 : index
    %24 = vector.load %arg9[%c0_19, %c0_20] : memref<32x32xf32, #tpu.memory_space<vmem>>, vector<32x32xf32>
    %cst_21 = arith.constant dense<0.000000e+00> : vector<256x32xf32>
    %25 = tpu.matmul %23, %24, %cst_21 {dimension_numbers = #tpu.dot_dimension_numbers<[1], [0], [0], [1], [0, 0, 1, 1], [], []>} : vector<256x32xf32>, vector<32x32xf32>, vector<256x32xf32> -> vector<256x32xf32>
    %c0_22 = arith.constant 0 : index
    %c0_23 = arith.constant 0 : index
    %26 = vector.load %arg10[%c0_22, %c0_23] : memref<1x32xf32, #tpu.memory_space<vmem>>, vector<1x32xf32>
    %27 = vector.broadcast %26 : vector<1x32xf32> to vector<256x32xf32>
    %28 = arith.addf %25, %27 : vector<256x32xf32>
    %cst_24 = arith.constant 0.000000e+00 : f32
    %29 = vector.broadcast %cst_24 : f32 to vector<256x32xf32>
    %30 = arith.maximumf %28, %29 : vector<256x32xf32>
    %c0_25 = arith.constant 0 : index
    %c0_26 = arith.constant 0 : index
    %31 = vector.load %arg11[%c0_25, %c0_26] : memref<256x32xf32, #tpu.memory_space<vmem>>, vector<256x32xf32>
    tpu.vector_store %arg11[%c0_25, %c0_26], %30 {strides = array<i32>} : memref<256x32xf32, #tpu.memory_space<vmem>>, vector<256x32xf32>,
    return
  }
  func.func @transform_0(%arg0: i32) -> (i32, i32) {
    %c0_i32 = arith.constant 0 : i32
    %c0_i32_0 = arith.constant 0 : i32
    %c0_i32_1 = arith.constant 0 : i32
    return %c0_i32, %c0_i32_0 : i32, i32
  }
  func.func @transform_1(%arg0: i32) -> (i32, i32) {
    %c0_i32 = arith.constant 0 : i32
    %c0_i32_0 = arith.constant 0 : i32
    return %arg0, %c0_i32 : i32, i32
  }
  func.func @transform_2(%arg0: i32) -> (i32, i32) {
    %c0_i32 = arith.constant 0 : i32
    %c0_i32_0 = arith.constant 0 : i32
    %c0_i32_1 = arith.constant 0 : i32
    return %c0_i32, %c0_i32_0 : i32, i32
  }
  func.func @transform_3(%arg0: i32) -> (i32, i32) {
    %c0_i32 = arith.constant 0 : i32
    %c0_i32_0 = arith.constant 0 : i32
    %c0_i32_1 = arith.constant 0 : i32
    return %c0_i32, %c0_i32_0 : i32, i32
  }
  func.func @transform_4(%arg0: i32) -> (i32, i32) {
    %c0_i32 = arith.constant 0 : i32
    %c0_i32_0 = arith.constant 0 : i32
    %c0_i32_1 = arith.constant 0 : i32
    return %c0_i32, %c0_i32_0 : i32, i32
  }
  func.func @transform_5(%arg0: i32) -> (i32, i32) {
    %c0_i32 = arith.constant 0 : i32
    %c0_i32_0 = arith.constant 0 : i32
    %c0_i32_1 = arith.constant 0 : i32
    return %c0_i32, %c0_i32_0 : i32, i32
  }
  func.func @transform_6(%arg0: i32) -> (i32, i32) {
    %c0_i32 = arith.constant 0 : i32
    %c0_i32_0 = arith.constant 0 : i32
    %c0_i32_1 = arith.constant 0 : i32
    return %c0_i32, %c0_i32_0 : i32, i32
  }
  func.func @transform_7(%arg0: i32) -> (i32, i32) {
    %c0_i32 = arith.constant 0 : i32
    %c0_i32_0 = arith.constant 0 : i32
    %c0_i32_1 = arith.constant 0 : i32
    return %c0_i32, %c0_i32_0 : i32, i32
  }
  func.func @transform_8(%arg0: i32) -> (i32, i32) {
    %c0_i32 = arith.constant 0 : i32
    %c0_i32_0 = arith.constant 0 : i32
    %c0_i32_1 = arith.constant 0 : i32
    return %c0_i32, %c0_i32_0 : i32, i32
  }
  func.func @transform_9(%arg0: i32) -> (i32, i32) {
    %c0_i32 = arith.constant 0 : i32
    %c0_i32_0 = arith.constant 0 : i32
    %c0_i32_1 = arith.constant 0 : i32
    return %c0_i32, %c0_i32_0 : i32, i32
  }
  func.func @transform_10(%arg0: i32) -> (i32, i32) {
    %c0_i32 = arith.constant 0 : i32
    %c0_i32_0 = arith.constant 0 : i32
    return %arg0, %c0_i32 : i32, i32
  }
}

module attributes {stable_mosaic.version = 11 : i64} {
  func.func @_edge_kernel(%arg0: i32, %arg1: memref<256x1xf32, #tpu.memory_space<vmem>>, %arg2: memref<256x1xf32, #tpu.memory_space<vmem>>, %arg3: memref<256x32xf32, #tpu.memory_space<vmem>>, %arg4: memref<256x32xf32, #tpu.memory_space<vmem>>, %arg5: memref<1x32xf32, #tpu.memory_space<vmem>>, %arg6: memref<1x32xf32, #tpu.memory_space<vmem>>, %arg7: memref<32x32xf32, #tpu.memory_space<vmem>>, %arg8: memref<32x32xf32, #tpu.memory_space<vmem>>, %arg9: memref<1x32xf32, #tpu.memory_space<vmem>>, %arg10: memref<32x128xf32, #tpu.memory_space<vmem>>, %arg11: memref<1x128xf32, #tpu.memory_space<vmem>>, %arg12: memref<256x128xf32, #tpu.memory_space<vmem>>) attributes {dimension_semantics = [#tpu.dimension_semantics<parallel>], iteration_bounds = array<i64: 1>, scalar_prefetch = 0 : i64, scratch_operands = 0 : i64, tpu.core_type = #tpu.core_type<tc>, window_params = [{transform_indices = @transform_0, window_bounds = array<i64: 256, 1>}, {transform_indices = @transform_1, window_bounds = array<i64: 256, 1>}, {transform_indices = @transform_2, window_bounds = array<i64: 256, 32>}, {transform_indices = @transform_3, window_bounds = array<i64: 256, 32>}, {pipeline_mode = #tpu.pipeline_mode<synchronous>, transform_indices = @transform_4, window_bounds = array<i64: 1, 32>}, {pipeline_mode = #tpu.pipeline_mode<synchronous>, transform_indices = @transform_5, window_bounds = array<i64: 1, 32>}, {pipeline_mode = #tpu.pipeline_mode<synchronous>, transform_indices = @transform_6, window_bounds = array<i64: 32, 32>}, {pipeline_mode = #tpu.pipeline_mode<synchronous>, transform_indices = @transform_7, window_bounds = array<i64: 32, 32>}, {pipeline_mode = #tpu.pipeline_mode<synchronous>, transform_indices = @transform_8, window_bounds = array<i64: 1, 32>}, {pipeline_mode = #tpu.pipeline_mode<synchronous>, transform_indices = @transform_9, window_bounds = array<i64: 32, 128>}, {pipeline_mode = #tpu.pipeline_mode<synchronous>, transform_indices = @transform_10, window_bounds = array<i64: 1, 128>}, {transform_indices = @transform_11, window_bounds = array<i64: 256, 128>}]} {
    %c0 = arith.constant 0 : index
    %c0_0 = arith.constant 0 : index
    %0 = vector.load %arg1[%c0, %c0_0] : memref<256x1xf32, #tpu.memory_space<vmem>>, vector<256x1xf32>
    %c0_1 = arith.constant 0 : index
    %c0_2 = arith.constant 0 : index
    %1 = vector.load %arg5[%c0_1, %c0_2] : memref<1x32xf32, #tpu.memory_space<vmem>>, vector<1x32xf32>
    %2 = vector.broadcast %0 : vector<256x1xf32> to vector<256x32xf32>
    %3 = vector.broadcast %1 : vector<1x32xf32> to vector<256x32xf32>
    %4 = arith.mulf %2, %3 : vector<256x32xf32>
    %c0_3 = arith.constant 0 : index
    %c0_4 = arith.constant 0 : index
    %5 = vector.load %arg2[%c0_3, %c0_4] : memref<256x1xf32, #tpu.memory_space<vmem>>, vector<256x1xf32>
    %c0_5 = arith.constant 0 : index
    %c0_6 = arith.constant 0 : index
    %6 = vector.load %arg6[%c0_5, %c0_6] : memref<1x32xf32, #tpu.memory_space<vmem>>, vector<1x32xf32>
    %7 = vector.broadcast %5 : vector<256x1xf32> to vector<256x32xf32>
    %8 = vector.broadcast %6 : vector<1x32xf32> to vector<256x32xf32>
    %9 = arith.mulf %7, %8 : vector<256x32xf32>
    %10 = arith.addf %4, %9 : vector<256x32xf32>
    %c0_7 = arith.constant 0 : index
    %c0_8 = arith.constant 0 : index
    %11 = vector.load %arg3[%c0_7, %c0_8] : memref<256x32xf32, #tpu.memory_space<vmem>>, vector<256x32xf32>
    %c0_9 = arith.constant 0 : index
    %c0_10 = arith.constant 0 : index
    %12 = vector.load %arg7[%c0_9, %c0_10] : memref<32x32xf32, #tpu.memory_space<vmem>>, vector<32x32xf32>
    %cst = arith.constant dense<0.000000e+00> : vector<256x32xf32>
    %13 = tpu.matmul %11, %12, %cst {dimension_numbers = #tpu.dot_dimension_numbers<[1], [0], [0], [1], [0, 0, 1, 1], [], []>} : vector<256x32xf32>, vector<32x32xf32>, vector<256x32xf32> -> vector<256x32xf32>
    %14 = arith.addf %10, %13 : vector<256x32xf32>
    %c0_11 = arith.constant 0 : index
    %c0_12 = arith.constant 0 : index
    %15 = vector.load %arg4[%c0_11, %c0_12] : memref<256x32xf32, #tpu.memory_space<vmem>>, vector<256x32xf32>
    %c0_13 = arith.constant 0 : index
    %c0_14 = arith.constant 0 : index
    %16 = vector.load %arg8[%c0_13, %c0_14] : memref<32x32xf32, #tpu.memory_space<vmem>>, vector<32x32xf32>
    %cst_15 = arith.constant dense<0.000000e+00> : vector<256x32xf32>
    %17 = tpu.matmul %15, %16, %cst_15 {dimension_numbers = #tpu.dot_dimension_numbers<[1], [0], [0], [1], [0, 0, 1, 1], [], []>} : vector<256x32xf32>, vector<32x32xf32>, vector<256x32xf32> -> vector<256x32xf32>
    %18 = arith.addf %14, %17 : vector<256x32xf32>
    %c0_16 = arith.constant 0 : index
    %c0_17 = arith.constant 0 : index
    %19 = vector.load %arg9[%c0_16, %c0_17] : memref<1x32xf32, #tpu.memory_space<vmem>>, vector<1x32xf32>
    %20 = vector.broadcast %19 : vector<1x32xf32> to vector<256x32xf32>
    %21 = arith.addf %18, %20 : vector<256x32xf32>
    %c0_18 = arith.constant 0 : index
    %c0_19 = arith.constant 0 : index
    %22 = vector.load %arg10[%c0_18, %c0_19] : memref<32x128xf32, #tpu.memory_space<vmem>>, vector<32x128xf32>
    %cst_20 = arith.constant dense<0.000000e+00> : vector<256x128xf32>
    %23 = tpu.matmul %21, %22, %cst_20 {dimension_numbers = #tpu.dot_dimension_numbers<[1], [0], [0], [1], [0, 0, 1, 1], [], []>} : vector<256x32xf32>, vector<32x128xf32>, vector<256x128xf32> -> vector<256x128xf32>
    %c0_21 = arith.constant 0 : index
    %c0_22 = arith.constant 0 : index
    %24 = vector.load %arg11[%c0_21, %c0_22] : memref<1x128xf32, #tpu.memory_space<vmem>>, vector<1x128xf32>
    %25 = vector.broadcast %24 : vector<1x128xf32> to vector<256x128xf32>
    %26 = arith.addf %23, %25 : vector<256x128xf32>
    %c0_23 = arith.constant 0 : index
    %c0_24 = arith.constant 0 : index
    %27 = vector.load %arg12[%c0_23, %c0_24] : memref<256x128xf32, #tpu.memory_space<vmem>>, vector<256x128xf32>
    tpu.vector_store %arg12[%c0_23, %c0_24], %26 {strides = array<i32>} : memref<256x128xf32, #tpu.memory_space<vmem>>, vector<256x128xf32>,
    return
  }
  func.func @transform_0(%arg0: i32) -> (i32, i32) {
    %c0_i32 = arith.constant 0 : i32
    %c0_i32_0 = arith.constant 0 : i32
    return %arg0, %c0_i32 : i32, i32
  }
  func.func @transform_1(%arg0: i32) -> (i32, i32) {
    %c0_i32 = arith.constant 0 : i32
    %c0_i32_0 = arith.constant 0 : i32
    return %arg0, %c0_i32 : i32, i32
  }
  func.func @transform_2(%arg0: i32) -> (i32, i32) {
    %c0_i32 = arith.constant 0 : i32
    %c0_i32_0 = arith.constant 0 : i32
    return %arg0, %c0_i32 : i32, i32
  }
  func.func @transform_3(%arg0: i32) -> (i32, i32) {
    %c0_i32 = arith.constant 0 : i32
    %c0_i32_0 = arith.constant 0 : i32
    return %arg0, %c0_i32 : i32, i32
  }
  func.func @transform_4(%arg0: i32) -> (i32, i32) {
    %c0_i32 = arith.constant 0 : i32
    %c0_i32_0 = arith.constant 0 : i32
    %c0_i32_1 = arith.constant 0 : i32
    return %c0_i32, %c0_i32_0 : i32, i32
  }
  func.func @transform_5(%arg0: i32) -> (i32, i32) {
    %c0_i32 = arith.constant 0 : i32
    %c0_i32_0 = arith.constant 0 : i32
    %c0_i32_1 = arith.constant 0 : i32
    return %c0_i32, %c0_i32_0 : i32, i32
  }
  func.func @transform_6(%arg0: i32) -> (i32, i32) {
    %c0_i32 = arith.constant 0 : i32
    %c0_i32_0 = arith.constant 0 : i32
    %c0_i32_1 = arith.constant 0 : i32
    return %c0_i32, %c0_i32_0 : i32, i32
  }
  func.func @transform_7(%arg0: i32) -> (i32, i32) {
    %c0_i32 = arith.constant 0 : i32
    %c0_i32_0 = arith.constant 0 : i32
    %c0_i32_1 = arith.constant 0 : i32
    return %c0_i32, %c0_i32_0 : i32, i32
  }
  func.func @transform_8(%arg0: i32) -> (i32, i32) {
    %c0_i32 = arith.constant 0 : i32
    %c0_i32_0 = arith.constant 0 : i32
    %c0_i32_1 = arith.constant 0 : i32
    return %c0_i32, %c0_i32_0 : i32, i32
  }
  func.func @transform_9(%arg0: i32) -> (i32, i32) {
    %c0_i32 = arith.constant 0 : i32
    %c0_i32_0 = arith.constant 0 : i32
    %c0_i32_1 = arith.constant 0 : i32
    return %c0_i32, %c0_i32_0 : i32, i32
  }
  func.func @transform_10(%arg0: i32) -> (i32, i32) {
    %c0_i32 = arith.constant 0 : i32
    %c0_i32_0 = arith.constant 0 : i32
    %c0_i32_1 = arith.constant 0 : i32
    return %c0_i32, %c0_i32_0 : i32, i32
  }
  func.func @transform_11(%arg0: i32) -> (i32, i32) {
    %c0_i32 = arith.constant 0 : i32
    %c0_i32_0 = arith.constant 0 : i32
    return %arg0, %c0_i32 : i32, i32
  }
}

</mosaic_0001>

<llo_original>
// kernel: mul.2
$region0: #{mul.2}
  #allocation0 [shape = 's32[1]{0}', space=sflag, size = 0x4, scoped, tag = 'scoped memory for mul.2']
  %s0 = inlined_call_operand.vmem [shape: f32[48], index: 0, kind: input, shape index: {}]
  %s1 = inlined_call_operand.vmem [shape: f32[48], index: 1, kind: input, shape index: {}]
  %s2 = inlined_call_operand.vmem [shape: f32[48], index: 2, kind: output, shape index: {}]
  %v3 = vld [vmem:[%s0] sm:$0x1]
  %v4 = vld [vmem:[%s1] sm:$0x1]
  %5 = xla_tuple %v3, %v4
  %6 = xla_tuple %5
  %v7 = vmul.f32 %v3, %v4
  %8 = xla_tuple %v7
  %9 = vst [vmem:[%s2] sm:$0x1] %v7

// kernel: kepce_gcn_forward.2
$region0: #{kepce_gcn_forward.2}
  #allocation0 [shape = 'u32[]', space=smem, size = 0x4, offset = 0x4, fixed_abs, tag = 'smem constant byte address 0x4 - core index']
  #allocation1 [shape = 'u32[144,128]{1,0:T(1,128)}', space=vmem, size = 0x12000, scoped, tag = 'internal scratch']
  %s0 = inlined_call_operand.vmem [shape: f32[256,1], index: 0, kind: input, shape index: {}]
  %s1 = inlined_call_operand.vmem [shape: bf16[256,256], index: 1, kind: input, shape index: {}]
  %s2 = inlined_call_operand.vmem [shape: f32[1,8], index: 2, kind: input, shape index: {}]
  %s3 = inlined_call_operand.vmem [shape: f32[1,8], index: 3, kind: input, shape index: {}]
  %s4 = inlined_call_operand.vmem [shape: f32[8,16], index: 4, kind: input, shape index: {}]
  %s5 = inlined_call_operand.vmem [shape: f32[1,16], index: 5, kind: input, shape index: {}]
  %s6 = inlined_call_operand.vmem [shape: f32[16,32], index: 6, kind: input, shape index: {}]
  %s7 = inlined_call_operand.vmem [shape: f32[1,32], index: 7, kind: input, shape index: {}]
  %s8 = inlined_call_operand.vmem [shape: f32[32,32], index: 8, kind: input, shape index: {}]
  %s9 = inlined_call_operand.vmem [shape: f32[1,32], index: 9, kind: input, shape index: {}]
  %s10 = inlined_call_operand.vmem [shape: f32[256,32], index: 10, kind: output, shape index: {}]
  %s11 = sld [smem:[#allocation0]]
  $region50: #{kepce_gcn_forward.2} parent=0
    _
  %s13 = ssub.s32 1, %s11
  %s14 = scalar_select 0, %s13, %s11
  // Predicated region
  $region2: #{kepce_gcn_forward.2} parent=0 // pred_check
    _
  $region3: #{kepce_gcn_forward.2} parent=0 // pred_check_branch
    %16 = sbr.rel (0) target = $region5
  $region4: #{kepce_gcn_forward.2} parent=0 // pred_region
    _
  $region5: #{kepce_gcn_forward.2} parent=0 // pred_fallthru
    _
  // Predicated region
  $region6: #{kepce_gcn_forward.2} parent=0 // pred_check
    _
  $region7: #{kepce_gcn_forward.2} parent=0 // pred_check_branch
    %18 = sbr.rel (0) target = $region9
  $region8: #{kepce_gcn_forward.2} parent=0 // pred_region
    _
  $region9: #{kepce_gcn_forward.2} parent=0 // pred_fallthru
    _
  // Predicated region
  $region10: #{kepce_gcn_forward.2} parent=0 // pred_check
    _
  $region11: #{kepce_gcn_forward.2} parent=0 // pred_check_branch
    %20 = sbr.rel (0) target = $region13
  $region12: #{kepce_gcn_forward.2} parent=0 // pred_region
    _
  $region13: #{kepce_gcn_forward.2} parent=0 // pred_fallthru
    _
  // Predicated region
  $region14: #{kepce_gcn_forward.2} parent=0 // pred_check
    _
  $region15: #{kepce_gcn_forward.2} parent=0 // pred_check_branch
    %22 = sbr.rel (0) target = $region17
  $region16: #{kepce_gcn_forward.2} parent=0 // pred_region
    _
  $region17: #{kepce_gcn_forward.2} parent=0 // pred_fallthru
    _
  // Predicated region
  $region18: #{kepce_gcn_forward.2} parent=0 // pred_check
    _
  $region19: #{kepce_gcn_forward.2} parent=0 // pred_check_branch
    %24 = sbr.rel (0) target = $region21
  $region20: #{kepce_gcn_forward.2} parent=0 // pred_region
    _
  $region21: #{kepce_gcn_forward.2} parent=0 // pred_fallthru
    _
  // Predicated region
  $region22: #{kepce_gcn_forward.2} parent=0 // pred_check
    _
  $region23: #{kepce_gcn_forward.2} parent=0 // pred_check_branch
    %26 = sbr.rel (0) target = $region25
  $region24: #{kepce_gcn_forward.2} parent=0 // pred_region
    _
  $region25: #{kepce_gcn_forward.2} parent=0 // pred_fallthru
    _
  // Predicated region
  $region26: #{kepce_gcn_forward.2} parent=0 // pred_check
    _
  $region27: #{kepce_gcn_forward.2} parent=0 // pred_check_branch
    %28 = sbr.rel (0) target = $region29
  $region28: #{kepce_gcn_forward.2} parent=0 // pred_region
    _
  $region29: #{kepce_gcn_forward.2} parent=0 // pred_fallthru
    _
  // Predicated region
  $region30: #{kepce_gcn_forward.2} parent=0 // pred_check
    _
  $region31: #{kepce_gcn_forward.2} parent=0 // pred_check_branch
    %30 = sbr.rel (0) target = $region33
  $region32: #{kepce_gcn_forward.2} parent=0 // pred_region
    _
  $region33: #{kepce_gcn_forward.2} parent=0 // pred_fallthru
    _
  // Predicated region
  $region34: #{kepce_gcn_forward.2} parent=0 // pred_check
    _
  $region35: #{kepce_gcn_forward.2} parent=0 // pred_check_branch
    %32 = sbr.rel (0) target = $region37
  $region36: #{kepce_gcn_forward.2} parent=0 // pred_region
    _
  $region37: #{kepce_gcn_forward.2} parent=0 // pred_fallthru
    _
  // Predicated region
  $region38: #{kepce_gcn_forward.2} parent=0 // pred_check
    _
  $region39: #{kepce_gcn_forward.2} parent=0 // pred_check_branch
    %34 = sbr.rel (0) target = $region41
  $region40: #{kepce_gcn_forward.2} parent=0 // pred_region
    _
  $region41: #{kepce_gcn_forward.2} parent=0 // pred_fallthru
    _
  %v36 = vld [vmem:[%s2] sm:$0x1]
  %v37 = vld [vmem:[%s3] sm:$0x1]
  %v38 = vadd.f32 %v36, %v37
  %v39 = vld [vmem:[%s0] sm:$0xff]
  %v40 = vld [vmem:[%s0 + $0x8] sm:$0xff]
  %v41 = vld [vmem:[%s0 + $0x10] sm:$0xff]
  %v42 = vld [vmem:[%s0 + $0x18] sm:$0xff]
  %v43 = vld [vmem:[%s0 + $0x20] sm:$0xff]
  %v44 = vld [vmem:[%s0 + $0x28] sm:$0xff]
  %v45 = vld [vmem:[%s0 + $0x30] sm:$0xff]
  %v46 = vld [vmem:[%s0 + $0x38] sm:$0xff]
  %v47 = vld [vmem:[%s0 + $0x40] sm:$0xff]
  %v48 = vld [vmem:[%s0 + $0x48] sm:$0xff]
  %v49 = vld [vmem:[%s0 + $0x50] sm:$0xff]
  %v50 = vld [vmem:[%s0 + $0x58] sm:$0xff]
  %v51 = vld [vmem:[%s0 + $0x60] sm:$0xff]
  %v52 = vld [vmem:[%s0 + $0x68] sm:$0xff]
  %v53 = vld [vmem:[%s0 + $0x70] sm:$0xff]
  %v54 = vld [vmem:[%s0 + $0x78] sm:$0xff]
  %v55 = vld [vmem:[%s0 + $0x80] sm:$0xff]
  %v56 = vld [vmem:[%s0 + $0x88] sm:$0xff]
  %v57 = vld [vmem:[%s0 + $0x90] sm:$0xff]
  %v58 = vld [vmem:[%s0 + $0x98] sm:$0xff]
  %v59 = vld [vmem:[%s0 + $0xa0] sm:$0xff]
  %v60 = vld [vmem:[%s0 + $0xa8] sm:$0xff]
  %v61 = vld [vmem:[%s0 + $0xb0] sm:$0xff]
  %v62 = vld [vmem:[%s0 + $0xb8] sm:$0xff]
  %v63 = vld [vmem:[%s0 + $0xc0] sm:$0xff]
  %v64 = vld [vmem:[%s0 + $0xc8] sm:$0xff]
  %v65 = vld [vmem:[%s0 + $0xd0] sm:$0xff]
  %v66 = vld [vmem:[%s0 + $0xd8] sm:$0xff]
  %v67 = vld [vmem:[%s0 + $0xe0] sm:$0xff]
  %v68 = vld [vmem:[%s0 + $0xe8] sm:$0xff]
  %v69 = vld [vmem:[%s0 + $0xf0] sm:$0xff]
  %v70 = vld [vmem:[%s0 + $0xf8] sm:$0xff]
  %72 = vset.pattern.permute.xlu0 0
  %73 = vperm.xlu0 %72, %v39
  %v74 = vpop.permute.xlu0 %73
  %77 = vset.pattern.permute.xlu0 0
  %78 = vperm.xlu0 %77, %v40
  %v79 = vpop.permute.xlu0 %78
  %82 = vset.pattern.permute.xlu0 0
  %83 = vperm.xlu0 %82, %v41
  %v84 = vpop.permute.xlu0 %83
  %87 = vset.pattern.permute.xlu0 0
  %88 = vperm.xlu0 %87, %v42
  %v89 = vpop.permute.xlu0 %88
  %92 = vset.pattern.permute.xlu0 0
  %93 = vperm.xlu0 %92, %v43
  %v94 = vpop.permute.xlu0 %93
  %97 = vset.pattern.permute.xlu0 0
  %98 = vperm.xlu0 %97, %v44
  %v99 = vpop.permute.xlu0 %98
  %102 = vset.pattern.permute.xlu0 0
  %103 = vperm.xlu0 %102, %v45
  %v104 = vpop.permute.xlu0 %103
  %107 = vset.pattern.permute.xlu0 0
  %108 = vperm.xlu0 %107, %v46
  %v109 = vpop.permute.xlu0 %108
  %112 = vset.pattern.permute.xlu0 0
  %113 = vperm.xlu0 %112, %v47
  %v114 = vpop.permute.xlu0 %113
  %117 = vset.pattern.permute.xlu0 0
  %118 = vperm.xlu0 %117, %v48
  %v119 = vpop.permute.xlu0 %118
  %122 = vset.pattern.permute.xlu0 0
  %123 = vperm.xlu0 %122, %v49
  %v124 = vpop.permute.xlu0 %123
  %127 = vset.pattern.permute.xlu0 0
  %128 = vperm.xlu0 %127, %v50
  %v129 = vpop.permute.xlu0 %128
  %132 = vset.pattern.permute.xlu0 0
  %133 = vperm.xlu0 %132, %v51
  %v134 = vpop.permute.xlu0 %133
  %137 = vset.pattern.permute.xlu0 0
  %138 = vperm.xlu0 %137, %v52
  %v139 = vpop.permute.xlu0 %138
  %142 = vset.pattern.permute.xlu0 0
  %143 = vperm.xlu0 %142, %v53
  %v144 = vpop.permute.xlu0 %143
  %147 = vset.pattern.permute.xlu0 0
  %148 = vperm.xlu0 %147, %v54
  %v149 = vpop.permute.xlu0 %148
  %152 = vset.pattern.permute.xlu0 0
  %153 = vperm.xlu0 %152, %v55
  %v154 = vpop.permute.xlu0 %153
  %157 = vset.pattern.permute.xlu0 0
  %158 = vperm.xlu0 %157, %v56
  %v159 = vpop.permute.xlu0 %158
  %162 = vset.pattern.permute.xlu0 0
  %163 = vperm.xlu0 %162, %v57
  %v164 = vpop.permute.xlu0 %163
  %167 = vset.pattern.permute.xlu0 0
  %168 = vperm.xlu0 %167, %v58
  %v169 = vpop.permute.xlu0 %168
  %172 = vset.pattern.permute.xlu0 0
  %173 = vperm.xlu0 %172, %v59
  %v174 = vpop.permute.xlu0 %173
  %177 = vset.pattern.permute.xlu0 0
  %178 = vperm.xlu0 %177, %v60
  %v179 = vpop.permute.xlu0 %178
  %182 = vset.pattern.permute.xlu0 0
  %183 = vperm.xlu0 %182, %v61
  %v184 = vpop.permute.xlu0 %183
  %187 = vset.pattern.permute.xlu0 0
  %188 = vperm.xlu0 %187, %v62
  %v189 = vpop.permute.xlu0 %188
  %192 = vset.pattern.permute.xlu0 0
  %193 = vperm.xlu0 %192, %v63
  %v194 = vpop.permute.xlu0 %193
  %197 = vset.pattern.permute.xlu0 0
  %198 = vperm.xlu0 %197, %v64
  %v199 = vpop.permute.xlu0 %198
  %202 = vset.pattern.permute.xlu0 0
  %203 = vperm.xlu0 %202, %v65
  %v204 = vpop.permute.xlu0 %203
  %207 = vset.pattern.permute.xlu0 0
  %208 = vperm.xlu0 %207, %v66
  %v209 = vpop.permute.xlu0 %208
  %212 = vset.pattern.permute.xlu0 0
  %213 = vperm.xlu0 %212, %v67
  %v214 = vpop.permute.xlu0 %213
  %217 = vset.pattern.permute.xlu0 0
  %218 = vperm.xlu0 %217, %v68
  %v219 = vpop.permute.xlu0 %218
  %222 = vset.pattern.permute.xlu0 0
  %223 = vperm.xlu0 %222, %v69
  %v224 = vpop.permute.xlu0 %223
  %227 = vset.pattern.permute.xlu0 0
  %228 = vperm.xlu0 %227, %v70
  %v229 = vpop.permute.xlu0 %228
  %v232 = vlaneseq
  %v233 = vshrl.u32 %v232, 7
  %v234 = vsub.s32 0, %v233
  %v235 = vrot.slane %v38, %v234
  %v237 = vmul.f32 %v74, %v235
  %v238 = vmul.f32 %v79, %v235
  %v239 = vmul.f32 %v84, %v235
  %v240 = vmul.f32 %v89, %v235
  %v241 = vmul.f32 %v94, %v235
  %v242 = vmul.f32 %v99, %v235
  %v243 = vmul.f32 %v104, %v235
  %v244 = vmul.f32 %v109, %v235
  %v245 = vmul.f32 %v114, %v235
  %v246 = vmul.f32 %v119, %v235
  %v247 = vmul.f32 %v124, %v235
  %v248 = vmul.f32 %v129, %v235
  %v249 = vmul.f32 %v134, %v235
  %v250 = vmul.f32 %v139, %v235
  %v251 = vmul.f32 %v144, %v235
  %v252 = vmul.f32 %v149, %v235
  %v253 = vmul.f32 %v154, %v235
  %v254 = vmul.f32 %v159, %v235
  %v255 = vmul.f32 %v164, %v235
  %v256 = vmul.f32 %v169, %v235
  %v257 = vmul.f32 %v174, %v235
  %v258 = vmul.f32 %v179, %v235
  %v259 = vmul.f32 %v184, %v235
  %v260 = vmul.f32 %v189, %v235
  %v261 = vmul.f32 %v194, %v235
  %v262 = vmul.f32 %v199, %v235
  %v263 = vmul.f32 %v204, %v235
  %v264 = vmul.f32 %v209, %v235
  %v265 = vmul.f32 %v214, %v235
  %v266 = vmul.f32 %v219, %v235
  %v267 = vmul.f32 %v224, %v235
  %v268 = vmul.f32 %v229, %v235
  %v269 = vld [vmem:[%s4] sm:$0xff]
  %v270 = vld [vmem:[%s5] sm:$0x1]
  %v272 = vlaneseq
  %v273 = vshrl.u32 %v272, 7
  %v274 = vsub.s32 0, %v273
  %v275 = vrot.slane %v270, %v274
  %vm277 = vcmask 64512
  %v279 = vsel %vm277, %v237, 0
  %v282 = vsel %vm277, %v238, 0
  %v285 = vsel %vm277, %v239, 0
  %v288 = vsel %vm277, %v240, 0
  %v291 = vsel %vm277, %v241, 0
  %v294 = vsel %vm277, %v242, 0
  %v297 = vsel %vm277, %v243, 0
  %v300 = vsel %vm277, %v244, 0
  %v303 = vsel %vm277, %v245, 0
  %v306 = vsel %vm277, %v246, 0
  %v309 = vsel %vm277, %v247, 0
  %v312 = vsel %vm277, %v248, 0
  %v315 = vsel %vm277, %v249, 0
  %v318 = vsel %vm277, %v250, 0
  %v321 = vsel %vm277, %v251, 0
  %v324 = vsel %vm277, %v252, 0
  %v327 = vsel %vm277, %v253, 0
  %v330 = vsel %vm277, %v254, 0
  %v333 = vsel %vm277, %v255, 0
  %v336 = vsel %vm277, %v256, 0
  %v339 = vsel %vm277, %v257, 0
  %v342 = vsel %vm277, %v258, 0
  %v345 = vsel %vm277, %v259, 0
  %v348 = vsel %vm277, %v260, 0
  %v351 = vsel %vm277, %v261, 0
  %v354 = vsel %vm277, %v262, 0
  %v357 = vsel %vm277, %v263, 0
  %v360 = vsel %vm277, %v264, 0
  %v363 = vsel %vm277, %v265, 0
  %v366 = vsel %vm277, %v266, 0
  %v369 = vsel %vm277, %v267, 0
  %v372 = vsel %vm277, %v268, 0
  %374 = vmatprep.subr.mxu0 0.0
  %375 = vmatpush1.msra.mxu0 %v269
  %376 = vmatprep.subr.mxu0 0.0
  %377 = vmatpush1.msra.mxu0 0.0
  %378 = vmatprep.subr.mxu0 0.0
  %379 = vmatpush1.msra.mxu0 0.0
  %380 = vmatprep.subr.mxu0 0.0
  %381 = vmatpush1.msra.mxu0 0.0
  %382 = vmatprep.subr.mxu0 0.0
  %383 = vmatpush1.msra.mxu0 0.0
  %384 = vmatprep.subr.mxu0 0.0
  %385 = vmatpush1.msra.mxu0 0.0
  %386 = vmatprep.subr.mxu0 0.0
  %387 = vmatpush1.msra.mxu0 0.0
  %388 = vmatprep.subr.mxu0 0.0
  %389 = vmatpush1.msra.mxu0 0.0
  %390 = vmatprep.subr.mxu0 0.0
  %391 = vmatpush1.msra.mxu0 0.0
  %392 = vmatprep.subr.mxu0 0.0
  %393 = vmatpush1.msra.mxu0 0.0
  %394 = vmatprep.subr.mxu0 0.0
  %395 = vmatpush1.msra.mxu0 0.0
  %396 = vmatprep.subr.mxu0 0.0
  %397 = vmatpush1.msra.mxu0 0.0
  %398 = vmatprep.subr.mxu0 0.0
  %399 = vmatpush1.msra.mxu0 0.0
  %400 = vmatprep.subr.mxu0 0.0
  %401 = vmatpush1.msra.mxu0 0.0
  %402 = vmatprep.subr.mxu0 0.0
  %403 = vmatpush1.msra.mxu0 0.0
  %404 = vmatprep.subr.mxu0 0.0
  %405 = vmatpush1.msra.mxu0 0.0
  %406 = vmatprep.subr.mxu0 0.0
  %407 = vmatpush1.msra.mxu0 0.0
  %408 = vmatprep.subr.mxu0 0.0
  %409 = vmatpush1.msra.mxu0 0.0
  %410 = vmatprep.subr.mxu0 0.0
  %411 = vmatpush1.msra.mxu0 0.0
  %412 = vmatprep.subr.mxu0 0.0
  %413 = vmatpush1.msra.mxu0 0.0
  %414 = vmatprep.subr.mxu0 0.0
  %415 = vmatpush1.msra.mxu0 0.0
  %416 = vmatprep.subr.mxu0 0.0
  %417 = vmatpush1.msra.mxu0 0.0
  %418 = vmatprep.subr.mxu0 0.0
  %419 = vmatpush1.msra.mxu0 0.0
  %420 = vmatprep.subr.mxu0 0.0
  %421 = vmatpush1.msra.mxu0 0.0
  %422 = vmatprep.subr.mxu0 0.0
  %423 = vmatpush1.msra.mxu0 0.0
  %424 = vmatprep.subr.mxu0 0.0
  %425 = vmatpush1.msra.mxu0 0.0
  %426 = vmatprep.subr.mxu0 0.0
  %427 = vmatpush1.msra.mxu0 0.0
  %428 = vmatprep.subr.mxu0 0.0
  %429 = vmatpush1.msra.mxu0 0.0
  %430 = vmatprep.subr.mxu0 0.0
  %431 = vmatpush1.msra.mxu0 0.0
  %432 = vmatprep.subr.mxu0 0.0
  %433 = vmatpush1.msra.mxu0 0.0
  %434 = vmatprep.subr.mxu0 0.0
  %435 = vmatpush1.msra.mxu0 0.0
  %436 = vmatprep.subr.mxu0 0.0
  %437 = vmatpush1.msra.mxu0 0.0
  %438 = vmatprep.mubr.f32.mxu0 0.0
  %439 = vmatmul.mubr.f32.gmra.mrb[0].mxu0 %v279
  %v440 = vpop.f32.mrb[0].mxu0
  %v441 = vadd.f32 %v275, %v440
  %v442 = vpop.f32.mrb[0].mxu0
  %443 = vmatprep.mubr.f32.mxu0 0.0
  %444 = vmatmul.mubr.f32.gmra.mrb[0].mxu0 %v282
  %v445 = vpop.f32.mrb[0].mxu0
  %v446 = vadd.f32 %v275, %v445
  %v447 = vpop.f32.mrb[0].mxu0
  %448 = vmatprep.mubr.f32.mxu0 0.0
  %449 = vmatmul.mubr.f32.gmra.mrb[0].mxu0 %v285
  %v450 = vpop.f32.mrb[0].mxu0
  %v451 = vadd.f32 %v275, %v450
  %v452 = vpop.f32.mrb[0].mxu0
  %453 = vmatprep.mubr.f32.mxu0 0.0
  %454 = vmatmul.mubr.f32.gmra.mrb[0].mxu0 %v288
  %v455 = vpop.f32.mrb[0].mxu0
  %v456 = vadd.f32 %v275, %v455
  %v457 = vpop.f32.mrb[0].mxu0
  %458 = vmatprep.mubr.f32.mxu0 0.0
  %459 = vmatmul.mubr.f32.gmra.mrb[0].mxu0 %v291
  %v460 = vpop.f32.mrb[0].mxu0
  %v461 = vadd.f32 %v275, %v460
  %v462 = vpop.f32.mrb[0].mxu0
  %463 = vmatprep.mubr.f32.mxu0 0.0
  %464 = vmatmul.mubr.f32.gmra.mrb[0].mxu0 %v294
  %v465 = vpop.f32.mrb[0].mxu0
  %v466 = vadd.f32 %v275, %v465
  %v467 = vpop.f32.mrb[0].mxu0
  %468 = vmatprep.mubr.f32.mxu0 0.0
  %469 = vmatmul.mubr.f32.gmra.mrb[0].mxu0 %v297
  %v470 = vpop.f32.mrb[0].mxu0
  %v471 = vadd.f32 %v275, %v470
  %v472 = vpop.f32.mrb[0].mxu0
  %473 = vmatprep.mubr.f32.mxu0 0.0
  %474 = vmatmul.mubr.f32.gmra.mrb[0].mxu0 %v300
  %v475 = vpop.f32.mrb[0].mxu0
  %v476 = vadd.f32 %v275, %v475
  %v477 = vpop.f32.mrb[0].mxu0
  %478 = vmatprep.mubr.f32.mxu0 0.0
  %479 = vmatmul.mubr.f32.gmra.mrb[0].mxu0 %v303
  %v480 = vpop.f32.mrb[0].mxu0
  %v481 = vadd.f32 %v275, %v480
  %v482 = vpop.f32.mrb[0].mxu0
  %483 = vmatprep.mubr.f32.mxu0 0.0
  %484 = vmatmul.mubr.f32.gmra.mrb[0].mxu0 %v306
  %v485 = vpop.f32.mrb[0].mxu0
  %v486 = vadd.f32 %v275, %v485
  %v487 = vpop.f32.mrb[0].mxu0
  %488 = vmatprep.mubr.f32.mxu0 0.0
  %489 = vmatmul.mubr.f32.gmra.mrb[0].mxu0 %v309
  %v490 = vpop.f32.mrb[0].mxu0
  %v491 = vadd.f32 %v275, %v490
  %v492 = vpop.f32.mrb[0].mxu0
  %493 = vmatprep.mubr.f32.mxu0 0.0
  %494 = vmatmul.mubr.f32.gmra.mrb[0].mxu0 %v312
  %v495 = vpop.f32.mrb[0].mxu0
  %v496 = vadd.f32 %v275, %v495
  %v497 = vpop.f32.mrb[0].mxu0
  %498 = vmatprep.mubr.f32.mxu0 0.0
  %499 = vmatmul.mubr.f32.gmra.mrb[0].mxu0 %v315
  %v500 = vpop.f32.mrb[0].mxu0
  %v501 = vadd.f32 %v275, %v500
  %v502 = vpop.f32.mrb[0].mxu0
  %503 = vmatprep.mubr.f32.mxu0 0.0
  %504 = vmatmul.mubr.f32.gmra.mrb[0].mxu0 %v318
  %v505 = vpop.f32.mrb[0].mxu0
  %v506 = vadd.f32 %v275, %v505
  %v507 = vpop.f32.mrb[0].mxu0
  %508 = vmatprep.mubr.f32.mxu0 0.0
  %509 = vmatmul.mubr.f32.gmra.mrb[0].mxu0 %v321
  %v510 = vpop.f32.mrb[0].mxu0
  %v511 = vadd.f32 %v275, %v510
  %v512 = vpop.f32.mrb[0].mxu0
  %513 = vmatprep.mubr.f32.mxu0 0.0
  %514 = vmatmul.mubr.f32.gmra.mrb[0].mxu0 %v324
  %v515 = vpop.f32.mrb[0].mxu0
  %v516 = vadd.f32 %v275, %v515
  %v517 = vpop.f32.mrb[0].mxu0
  %518 = vmatprep.mubr.f32.mxu0 0.0
  %519 = vmatmul.mubr.f32.gmra.mrb[0].mxu0 %v327
  %v520 = vpop.f32.mrb[0].mxu0
  %v521 = vadd.f32 %v275, %v520
  %v522 = vpop.f32.mrb[0].mxu0
  %523 = vmatprep.mubr.f32.mxu0 0.0
  %524 = vmatmul.mubr.f32.gmra.mrb[0].mxu0 %v330
  %v525 = vpop.f32.mrb[0].mxu0
  %v526 = vadd.f32 %v275, %v525
  %v527 = vpop.f32.mrb[0].mxu0
  %528 = vmatprep.mubr.f32.mxu0 0.0
  %529 = vmatmul.mubr.f32.gmra.mrb[0].mxu0 %v333
  %v530 = vpop.f32.mrb[0].mxu0
  %v531 = vadd.f32 %v275, %v530
  %v532 = vpop.f32.mrb[0].mxu0
  %533 = vmatprep.mubr.f32.mxu0 0.0
  %534 = vmatmul.mubr.f32.gmra.mrb[0].mxu0 %v336
  %v535 = vpop.f32.mrb[0].mxu0
  %v536 = vadd.f32 %v275, %v535
  %v537 = vpop.f32.mrb[0].mxu0
  %538 = vmatprep.mubr.f32.mxu0 0.0
  %539 = vmatmul.mubr.f32.gmra.mrb[0].mxu0 %v339
  %v540 = vpop.f32.mrb[0].mxu0
  %v541 = vadd.f32 %v275, %v540
  %v542 = vpop.f32.mrb[0].mxu0
  %543 = vmatprep.mubr.f32.mxu0 0.0
  %544 = vmatmul.mubr.f32.gmra.mrb[0].mxu0 %v342
  %v545 = vpop.f32.mrb[0].mxu0
  %v546 = vadd.f32 %v275, %v545
  %v547 = vpop.f32.mrb[0].mxu0
  %548 = vmatprep.mubr.f32.mxu0 0.0
  %549 = vmatmul.mubr.f32.gmra.mrb[0].mxu0 %v345
  %v550 = vpop.f32.mrb[0].mxu0
  %v551 = vadd.f32 %v275, %v550
  %v552 = vpop.f32.mrb[0].mxu0
  %553 = vmatprep.mubr.f32.mxu0 0.0
  %554 = vmatmul.mubr.f32.gmra.mrb[0].mxu0 %v348
  %v555 = vpop.f32.mrb[0].mxu0
  %v556 = vadd.f32 %v275, %v555
  %v557 = vpop.f32.mrb[0].mxu0
  %558 = vmatprep.mubr.f32.mxu0 0.0
  %559 = vmatmul.mubr.f32.gmra.mrb[0].mxu0 %v351
  %v560 = vpop.f32.mrb[0].mxu0
  %v561 = vadd.f32 %v275, %v560
  %v562 = vpop.f32.mrb[0].mxu0
  %563 = vmatprep.mubr.f32.mxu0 0.0
  %564 = vmatmul.mubr.f32.gmra.mrb[0].mxu0 %v354
  %v565 = vpop.f32.mrb[0].mxu0
  %v566 = vadd.f32 %v275, %v565
  %v567 = vpop.f32.mrb[0].mxu0
  %568 = vmatprep.mubr.f32.mxu0 0.0
  %569 = vmatmul.mubr.f32.gmra.mrb[0].mxu0 %v357
  %v570 = vpop.f32.mrb[0].mxu0
  %v571 = vadd.f32 %v275, %v570
  %v572 = vpop.f32.mrb[0].mxu0
  %573 = vmatprep.mubr.f32.mxu0 0.0
  %574 = vmatmul.mubr.f32.gmra.mrb[0].mxu0 %v360
  %v575 = vpop.f32.mrb[0].mxu0
  %v576 = vadd.f32 %v275, %v575
  %v577 = vpop.f32.mrb[0].mxu0
  %578 = vmatprep.mubr.f32.mxu0 0.0
  %579 = vmatmul.mubr.f32.gmra.mrb[0].mxu0 %v363
  %v580 = vpop.f32.mrb[0].mxu0
  %v581 = vadd.f32 %v275, %v580
  %v582 = vpop.f32.mrb[0].mxu0
  %583 = vmatprep.mubr.f32.mxu0 0.0
  %584 = vmatmul.mubr.f32.gmra.mrb[0].mxu0 %v366
  %v585 = vpop.f32.mrb[0].mxu0
  %v586 = vadd.f32 %v275, %v585
  %v587 = vpop.f32.mrb[0].mxu0
  %588 = vmatprep.mubr.f32.mxu0 0.0
  %589 = vmatmul.mubr.f32.gmra.mrb[0].mxu0 %v369
  %v590 = vpop.f32.mrb[0].mxu0
  %v591 = vadd.f32 %v275, %v590
  %v592 = vpop.f32.mrb[0].mxu0
  %593 = vmatprep.mubr.f32.mxu0 0.0
  %594 = vmatmul.mubr.f32.gmra.mrb[0].mxu0 %v372
  %v595 = vpop.f32.mrb[0].mxu0
  %v596 = vadd.f32 %v275, %v595
  %v597 = vpop.f32.mrb[0].mxu0
  %598 = vdwg.mxu0
  %v599 = vmax.f32 %v441, 0.0
  %v600 = vmax.f32 %v446, 0.0
  %v601 = vmax.f32 %v451, 0.0
  %v602 = vmax.f32 %v456, 0.0
  %v603 = vmax.f32 %v461, 0.0
  %v604 = vmax.f32 %v466, 0.0
  %v605 = vmax.f32 %v471, 0.0
  %v606 = vmax.f32 %v476, 0.0
  %v607 = vmax.f32 %v481, 0.0
  %v608 = vmax.f32 %v486, 0.0
  %v609 = vmax.f32 %v491, 0.0
  %v610 = vmax.f32 %v496, 0.0
  %v611 = vmax.f32 %v501, 0.0
  %v612 = vmax.f32 %v506, 0.0
  %v613 = vmax.f32 %v511, 0.0
  %v614 = vmax.f32 %v516, 0.0
  %v615 = vmax.f32 %v521, 0.0
  %v616 = vmax.f32 %v526, 0.0
  %v617 = vmax.f32 %v531, 0.0
  %v618 = vmax.f32 %v536, 0.0
  %v619 = vmax.f32 %v541, 0.0
  %v620 = vmax.f32 %v546, 0.0
  %v621 = vmax.f32 %v551, 0.0
  %v622 = vmax.f32 %v556, 0.0
  %v623 = vmax.f32 %v561, 0.0
  %v624 = vmax.f32 %v566, 0.0
  %v625 = vmax.f32 %v571, 0.0
  %v626 = vmax.f32 %v576, 0.0
  %v627 = vmax.f32 %v581, 0.0
  %v628 = vmax.f32 %v586, 0.0
  %v629 = vmax.f32 %v591, 0.0
  %v630 = vmax.f32 %v596, 0.0
  %v631 = vld [vmem:[%s6] sm:$0xff]
  %v632 = vld [vmem:[%s6 + $0x8] sm:$0xff]
  %vm633 = vcmask 130048
  %v635 = vsel %vm633, %v599, 0
  %v638 = vsel %vm633, %v600, 0
  %v641 = vsel %vm633, %v601, 0
  %v644 = vsel %vm633, %v602, 0
  %v647 = vsel %vm633, %v603, 0
  %v650 = vsel %vm633, %v604, 0
  %v653 = vsel %vm633, %v605, 0
  %v656 = vsel %vm633, %v606, 0
  %v659 = vsel %vm633, %v607, 0
  %v662 = vsel %vm633, %v608, 0
  %v665 = vsel %vm633, %v609, 0
  %v668 = vsel %vm633, %v610, 0
  %v671 = vsel %vm633, %v611, 0
  %v674 = vsel %vm633, %v612, 0
  %v677 = vsel %vm633, %v613, 0
  %v680 = vsel %vm633, %v614, 0
  %v683 = vsel %vm633, %v615, 0
  %v686 = vsel %vm633, %v616, 0
  %v689 = vsel %vm633, %v617, 0
  %v692 = vsel %vm633, %v618, 0
  %v695 = vsel %vm633, %v619, 0
  %v698 = vsel %vm633, %v620, 0
  %v701 = vsel %vm633, %v621, 0
  %v704 = vsel %vm633, %v622, 0
  %v707 = vsel %vm633, %v623, 0
  %v710 = vsel %vm633, %v624, 0
  %v713 = vsel %vm633, %v625, 0
  %v716 = vsel %vm633, %v626, 0
  %v719 = vsel %vm633, %v627, 0
  %v722 = vsel %vm633, %v628, 0
  %v725 = vsel %vm633, %v629, 0
  %v728 = vsel %vm633, %v630, 0
  %730 = vmatprep.subr.mxu0 0.0
  %731 = vmatpush1.msra.mxu0 %v631
  %732 = vmatprep.subr.mxu0 0.0
  %733 = vmatpush1.msra.mxu0 %v632
  %734 = vmatprep.subr.mxu0 0.0
  %735 = vmatpush1.msra.mxu0 0.0
  %736 = vmatprep.subr.mxu0 0.0
  %737 = vmatpush1.msra.mxu0 0.0
  %738 = vmatprep.subr.mxu0 0.0
  %739 = vmatpush1.msra.mxu0 0.0
  %740 = vmatprep.subr.mxu0 0.0
  %741 = vmatpush1.msra.mxu0 0.0
  %742 = vmatprep.subr.mxu0 0.0
  %743 = vmatpush1.msra.mxu0 0.0
  %744 = vmatprep.subr.mxu0 0.0
  %745 = vmatpush1.msra.mxu0 0.0
  %746 = vmatprep.subr.mxu0 0.0
  %747 = vmatpush1.msra.mxu0 0.0
  %748 = vmatprep.subr.mxu0 0.0
  %749 = vmatpush1.msra.mxu0 0.0
  %750 = vmatprep.subr.mxu0 0.0
  %751 = vmatpush1.msra.mxu0 0.0
  %752 = vmatprep.subr.mxu0 0.0
  %753 = vmatpush1.msra.mxu0 0.0
  %754 = vmatprep.subr.mxu0 0.0
  %755 = vmatpush1.msra.mxu0 0.0
  %756 = vmatprep.subr.mxu0 0.0
  %757 = vmatpush1.msra.mxu0 0.0
  %758 = vmatprep.subr.mxu0 0.0
  %759 = vmatpush1.msra.mxu0 0.0
  %760 = vmatprep.subr.mxu0 0.0
  %761 = vmatpush1.msra.mxu0 0.0
  %762 = vmatprep.subr.mxu0 0.0
  %763 = vmatpush1.msra.mxu0 0.0
  %764 = vmatprep.subr.mxu0 0.0
  %765 = vmatpush1.msra.mxu0 0.0
  %766 = vmatprep.subr.mxu0 0.0
  %767 = vmatpush1.msra.mxu0 0.0
  %768 = vmatprep.subr.mxu0 0.0
  %769 = vmatpush1.msra.mxu0 0.0
  %770 = vmatprep.subr.mxu0 0.0
  %771 = vmatpush1.msra.mxu0 0.0
  %772 = vmatprep.subr.mxu0 0.0
  %773 = vmatpush1.msra.mxu0 0.0
  %774 = vmatprep.subr.mxu0 0.0
  %775 = vmatpush1.msra.mxu0 0.0
  %776 = vmatprep.subr.mxu0 0.0
  %777 = vmatpush1.msra.mxu0 0.0
  %778 = vmatprep.subr.mxu0 0.0
  %779 = vmatpush1.msra.mxu0 0.0
  %780 = vmatprep.subr.mxu0 0.0
  %781 = vmatpush1.msra.mxu0 0.0
  %782 = vmatprep.subr.mxu0 0.0
  %783 = vmatpush1.msra.mxu0 0.0
  %784 = vmatprep.subr.mxu0 0.0
  %785 = vmatpush1.msra.mxu0 0.0
  %786 = vmatprep.subr.mxu0 0.0
  %787 = vmatpush1.msra.mxu0 0.0
  %788 = vmatprep.subr.mxu0 0.0
  %789 = vmatpush1.msra.mxu0 0.0
  %790 = vmatprep.subr.mxu0 0.0
  %791 = vmatpush1.msra.mxu0 0.0
  %792 = vmatprep.subr.mxu0 0.0
  %793 = vmatpush1.msra.mxu0 0.0
  %794 = vmatprep.mubr.f32.mxu0 0.0
  %795 = vmatmul.mubr.f32.gmra.mrb[0].mxu0 %v635
  %v796 = vpop.f32.mrb[0].mxu0
  %v797 = vadd.f32 0.0, %v796
  %v798 = vpop.f32.mrb[0].mxu0
  %799 = vmatprep.mubr.f32.mxu0 0.0
  %800 = vmatmul.mubr.f32.gmra.mrb[0].mxu0 %v638
  %v801 = vpop.f32.mrb[0].mxu0
  %v802 = vadd.f32 0.0, %v801
  %v803 = vpop.f32.mrb[0].mxu0
  %804 = vmatprep.mubr.f32.mxu0 0.0
  %805 = vmatmul.mubr.f32.gmra.mrb[0].mxu0 %v641
  %v806 = vpop.f32.mrb[0].mxu0
  %v807 = vadd.f32 0.0, %v806
  %v808 = vpop.f32.mrb[0].mxu0
  %809 = vmatprep.mubr.f32.mxu0 0.0
  %810 = vmatmul.mubr.f32.gmra.mrb[0].mxu0 %v644
  %v811 = vpop.f32.mrb[0].mxu0
  %v812 = vadd.f32 0.0, %v811
  %v813 = vpop.f32.mrb[0].mxu0
  %814 = vmatprep.mubr.f32.mxu0 0.0
  %815 = vmatmul.mubr.f32.gmra.mrb[0].mxu0 %v647
  %v816 = vpop.f32.mrb[0].mxu0
  %v817 = vadd.f32 0.0, %v816
  %v818 = vpop.f32.mrb[0].mxu0
  %819 = vmatprep.mubr.f32.mxu0 0.0
  %820 = vmatmul.mubr.f32.gmra.mrb[0].mxu0 %v650
  %v821 = vpop.f32.mrb[0].mxu0
  %v822 = vadd.f32 0.0, %v821
  %v823 = vpop.f32.mrb[0].mxu0
  %824 = vmatprep.mubr.f32.mxu0 0.0
  %825 = vmatmul.mubr.f32.gmra.mrb[0].mxu0 %v653
  %v826 = vpop.f32.mrb[0].mxu0
  %v827 = vadd.f32 0.0, %v826
  %v828 = vpop.f32.mrb[0].mxu0
  %829 = vmatprep.mubr.f32.mxu0 0.0
  %830 = vmatmul.mubr.f32.gmra.mrb[0].mxu0 %v656
  %v831 = vpop.f32.mrb[0].mxu0
  %v832 = vadd.f32 0.0, %v831
  %v833 = vpop.f32.mrb[0].mxu0
  %834 = vmatprep.mubr.f32.mxu0 0.0
  %835 = vmatmul.mubr.f32.gmra.mrb[0].mxu0 %v659
  %v836 = vpop.f32.mrb[0].mxu0
  %v837 = vadd.f32 0.0, %v836
  %v838 = vpop.f32.mrb[0].mxu0
  %839 = vmatprep.mubr.f32.mxu0 0.0
  %840 = vmatmul.mubr.f32.gmra.mrb[0].mxu0 %v662
  %v841 = vpop.f32.mrb[0].mxu0
  %v842 = vadd.f32 0.0, %v841
  %v843 = vpop.f32.mrb[0].mxu0
  %844 = vmatprep.mubr.f32.mxu0 0.0
  %845 = vmatmul.mubr.f32.gmra.mrb[0].mxu0 %v665
  %v846 = vpop.f32.mrb[0].mxu0
  %v847 = vadd.f32 0.0, %v846
  %v848 = vpop.f32.mrb[0].mxu0
  %849 = vmatprep.mubr.f32.mxu0 0.0
  %850 = vmatmul.mubr.f32.gmra.mrb[0].mxu0 %v668
  %v851 = vpop.f32.mrb[0].mxu0
  %v852 = vadd.f32 0.0, %v851
  %v853 = vpop.f32.mrb[0].mxu0
  %854 = vmatprep.mubr.f32.mxu0 0.0
  %855 = vmatmul.mubr.f32.gmra.mrb[0].mxu0 %v671
  %v856 = vpop.f32.mrb[0].mxu0
  %v857 = vadd.f32 0.0, %v856
  %v858 = vpop.f32.mrb[0].mxu0
  %859 = vmatprep.mubr.f32.mxu0 0.0
  %860 = vmatmul.mubr.f32.gmra.mrb[0].mxu0 %v674
  %v861 = vpop.f32.mrb[0].mxu0
  %v862 = vadd.f32 0.0, %v861
  %v863 = vpop.f32.mrb[0].mxu0
  %864 = vmatprep.mubr.f32.mxu0 0.0
  %865 = vmatmul.mubr.f32.gmra.mrb[0].mxu0 %v677
  %v866 = vpop.f32.mrb[0].mxu0
  %v867 = vadd.f32 0.0, %v866
  %v868 = vpop.f32.mrb[0].mxu0
  %869 = vmatprep.mubr.f32.mxu0 0.0
  %870 = vmatmul.mubr.f32.gmra.mrb[0].mxu0 %v680
  %v871 = vpop.f32.mrb[0].mxu0
  %v872 = vadd.f32 0.0, %v871
  %v873 = vpop.f32.mrb[0].mxu0
  %874 = vmatprep.mubr.f32.mxu0 0.0
  %875 = vmatmul.mubr.f32.gmra.mrb[0].mxu0 %v683
  %v876 = vpop.f32.mrb[0].mxu0
  %v877 = vadd.f32 0.0, %v876
  %v878 = vpop.f32.mrb[0].mxu0
  %879 = vmatprep.mubr.f32.mxu0 0.0
  %880 = vmatmul.mubr.f32.gmra.mrb[0].mxu0 %v686
  %v881 = vpop.f32.mrb[0].mxu0
  %v882 = vadd.f32 0.0, %v881
  %v883 = vpop.f32.mrb[0].mxu0
  %884 = vmatprep.mubr.f32.mxu0 0.0
  %885 = vmatmul.mubr.f32.gmra.mrb[0].mxu0 %v689
  %v886 = vpop.f32.mrb[0].mxu0
  %v887 = vadd.f32 0.0, %v886
  %v888 = vpop.f32.mrb[0].mxu0
  %889 = vmatprep.mubr.f32.mxu0 0.0
  %890 = vmatmul.mubr.f32.gmra.mrb[0].mxu0 %v692
  %v891 = vpop.f32.mrb[0].mxu0
  %v892 = vadd.f32 0.0, %v891
  %v893 = vpop.f32.mrb[0].mxu0
  %894 = vmatprep.mubr.f32.mxu0 0.0
  %895 = vmatmul.mubr.f32.gmra.mrb[0].mxu0 %v695
  %v896 = vpop.f32.mrb[0].mxu0
  %v897 = vadd.f32 0.0, %v896
  %v898 = vpop.f32.mrb[0].mxu0
  %899 = vmatprep.mubr.f32.mxu0 0.0
  %900 = vmatmul.mubr.f32.gmra.mrb[0].mxu0 %v698
  %v901 = vpop.f32.mrb[0].mxu0
  %v902 = vadd.f32 0.0, %v901
  %v903 = vpop.f32.mrb[0].mxu0
  %904 = vmatprep.mubr.f32.mxu0 0.0
  %905 = vmatmul.mubr.f32.gmra.mrb[0].mxu0 %v701
  %v906 = vpop.f32.mrb[0].mxu0
  %v907 = vadd.f32 0.0, %v906
  %v908 = vpop.f32.mrb[0].mxu0
  %909 = vmatprep.mubr.f32.mxu0 0.0
  %910 = vmatmul.mubr.f32.gmra.mrb[0].mxu0 %v704
  %v911 = vpop.f32.mrb[0].mxu0
  %v912 = vadd.f32 0.0, %v911
  %v913 = vpop.f32.mrb[0].mxu0
  %914 = vmatprep.mubr.f32.mxu0 0.0
  %915 = vmatmul.mubr.f32.gmra.mrb[0].mxu0 %v707
  %v916 = vpop.f32.mrb[0].mxu0
  %v917 = vadd.f32 0.0, %v916
  %v918 = vpop.f32.mrb[0].mxu0
  %919 = vmatprep.mubr.f32.mxu0 0.0
  %920 = vmatmul.mubr.f32.gmra.mrb[0].mxu0 %v710
  %v921 = vpop.f32.mrb[0].mxu0
  %v922 = vadd.f32 0.0, %v921
  %v923 = vpop.f32.mrb[0].mxu0
  %924 = vmatprep.mubr.f32.mxu0 0.0
  %925 = vmatmul.mubr.f32.gmra.mrb[0].mxu0 %v713
  %v926 = vpop.f32.mrb[0].mxu0
  %v927 = vadd.f32 0.0, %v926
  %v928 = vpop.f32.mrb[0].mxu0
  %929 = vmatprep.mubr.f32.mxu0 0.0
  %930 = vmatmul.mubr.f32.gmra.mrb[0].mxu0 %v716
  %v931 = vpop.f32.mrb[0].mxu0
  %v932 = vadd.f32 0.0, %v931
  %v933 = vpop.f32.mrb[0].mxu0
  %934 = vmatprep.mubr.f32.mxu0 0.0
  %935 = vmatmul.mubr.f32.gmra.mrb[0].mxu0 %v719
  %v936 = vpop.f32.mrb[0].mxu0
  %v937 = vadd.f32 0.0, %v936
  %v938 = vpop.f32.mrb[0].mxu0
  %939 = vmatprep.mubr.f32.mxu0 0.0
  %940 = vmatmul.mubr.f32.gmra.mrb[0].mxu0 %v722
  %v941 = vpop.f32.mrb[0].mxu0
  %v942 = vadd.f32 0.0, %v941
  %v943 = vpop.f32.mrb[0].mxu0
  %944 = vmatprep.mubr.f32.mxu0 0.0
  %945 = vmatmul.mubr.f32.gmra.mrb[0].mxu0 %v725
  %v946 = vpop.f32.mrb[0].mxu0
  %v947 = vadd.f32 0.0, %v946
  %v948 = vpop.f32.mrb[0].mxu0
  %949 = vmatprep.mubr.f32.mxu0 0.0
  %950 = vmatmul.mubr.f32.gmra.mrb[0].mxu0 %v728
  %v951 = vpop.f32.mrb[0].mxu0
  %v952 = vadd.f32 0.0, %v951
  %v953 = vpop.f32.mrb[0].mxu0
  %954 = vdwg.mxu0
  %v955 = vld [vmem:[%s1] sm:$0xff]
  %v956 = vld [vmem:[%s1 + $0x8] sm:$0xff]
  %v957 = vld [vmem:[%s1 + $0x10] sm:$0xff]
  %v958 = vld [vmem:[%s1 + $0x18] sm:$0xff]
  %v959 = vld [vmem:[%s1 + $0x20] sm:$0xff]
  %v960 = vld [vmem:[%s1 + $0x28] sm:$0xff]
  %v961 = vld [vmem:[%s1 + $0x30] sm:$0xff]
  %v962 = vld [vmem:[%s1 + $0x38] sm:$0xff]
  %v963 = vld [vmem:[%s1 + $0x40] sm:$0xff]
  %v964 = vld [vmem:[%s1 + $0x48] sm:$0xff]
  %v965 = vld [vmem:[%s1 + $0x50] sm:$0xff]
  %v966 = vld [vmem:[%s1 + $0x58] sm:$0xff]
  %v967 = vld [vmem:[%s1 + $0x60] sm:$0xff]
  %v968 = vld [vmem:[%s1 + $0x68] sm:$0xff]
  %v969 = vld [vmem:[%s1 + $0x70] sm:$0xff]
  %v970 = vld [vmem:[%s1 + $0x78] sm:$0xff]
  %v971 = vld [vmem:[%s1 + $0x80] sm:$0xff]
  %v972 = vld [vmem:[%s1 + $0x88] sm:$0xff]
  %v973 = vld [vmem:[%s1 + $0x90] sm:$0xff]
  %v974 = vld [vmem:[%s1 + $0x98] sm:$0xff]
  %v975 = vld [vmem:[%s1 + $0xa0] sm:$0xff]
  %v976 = vld [vmem:[%s1 + $0xa8] sm:$0xff]
  %v977 = vld [vmem:[%s1 + $0xb0] sm:$0xff]
  %v978 = vld [vmem:[%s1 + $0xb8] sm:$0xff]
  %v979 = vld [vmem:[%s1 + $0xc0] sm:$0xff]
  %v980 = vld [vmem:[%s1 + $0xc8] sm:$0xff]
  %v981 = vld [vmem:[%s1 + $0xd0] sm:$0xff]
  %v982 = vld [vmem:[%s1 + $0xd8] sm:$0xff]
  %v983 = vld [vmem:[%s1 + $0xe0] sm:$0xff]
  %v984 = vld [vmem:[%s1 + $0xe8] sm:$0xff]
  %v985 = vld [vmem:[%s1 + $0xf0] sm:$0xff]
  %v986 = vld [vmem:[%s1 + $0xf8] sm:$0xff]
  %v987 = vpack.c.bf16 %v802, %v797
  %v988 = vpack.c.bf16 %v812, %v807
  %v989 = vpack.c.bf16 %v822, %v817
  %v990 = vpack.c.bf16 %v832, %v827
  %v991 = vpack.c.bf16 %v842, %v837
  %v992 = vpack.c.bf16 %v852, %v847
  %v993 = vpack.c.bf16 %v862, %v857
  %v994 = vpack.c.bf16 %v872, %v867
  %v995 = vpack.c.bf16 %v882, %v877
  %v996 = vpack.c.bf16 %v892, %v887
  %v997 = vpack.c.bf16 %v902, %v897
  %v998 = vpack.c.bf16 %v912, %v907
  %v999 = vpack.c.bf16 %v922, %v917
  %v1000 = vpack.c.bf16 %v932, %v927
  %v1001 = vpack.c.bf16 %v942, %v937
  %v1002 = vpack.c.bf16 %v952, %v947
  %v1003 = vld [vmem:[%s7] sm:$0x1]
  %v1005 = vlaneseq
  %v1006 = vshrl.u32 %v1005, 7
  %v1007 = vsub.s32 0, %v1006
  %v1008 = vrot.slane %v1003, %v1007
  %v1042 = vunpack.c.l.b16 %v955
  %v1043 = vunpack.c.h.b16 %v955
  %v1044 = vunpack.c.l.b16 %v956
  %v1045 = vunpack.c.h.b16 %v956
  %v1046 = vunpack.c.l.b16 %v957
  %v1047 = vunpack.c.h.b16 %v957
  %v1048 = vunpack.c.l.b16 %v958
  %v1049 = vunpack.c.h.b16 %v958
  %v1050 = vunpack.c.l.b16 %v959
  %v1051 = vunpack.c.h.b16 %v959
  %v1052 = vunpack.c.l.b16 %v960
  %v1053 = vunpack.c.h.b16 %v960
  %v1054 = vunpack.c.l.b16 %v961
  %v1055 = vunpack.c.h.b16 %v961
  %v1056 = vunpack.c.l.b16 %v962
  %v1057 = vunpack.c.h.b16 %v962
  %v1058 = vunpack.c.l.b16 %v963
  %v1059 = vunpack.c.h.b16 %v963
  %v1060 = vunpack.c.l.b16 %v964
  %v1061 = vunpack.c.h.b16 %v964
  %v1062 = vunpack.c.l.b16 %v965
  %v1063 = vunpack.c.h.b16 %v965
  %v1064 = vunpack.c.l.b16 %v966
  %v1065 = vunpack.c.h.b16 %v966
  %v1066 = vunpack.c.l.b16 %v967
  %v1067 = vunpack.c.h.b16 %v967
  %v1068 = vunpack.c.l.b16 %v968
  %v1069 = vunpack.c.h.b16 %v968
  %v1070 = vunpack.c.l.b16 %v969
  %v1071 = vunpack.c.h.b16 %v969
  %v1072 = vunpack.c.l.b16 %v970
  %v1073 = vunpack.c.h.b16 %v970
  %v1074 = vunpack.c.l.b16 %v971
  %v1075 = vunpack.c.h.b16 %v971
  %v1076 = vunpack.c.l.b16 %v972
  %v1077 = vunpack.c.h.b16 %v972
  %v1078 = vunpack.c.l.b16 %v973
  %v1079 = vunpack.c.h.b16 %v973
  %v1080 = vunpack.c.l.b16 %v974
  %v1081 = vunpack.c.h.b16 %v974
  %v1082 = vunpack.c.l.b16 %v975
  %v1083 = vunpack.c.h.b16 %v975
  %v1084 = vunpack.c.l.b16 %v976
  %v1085 = vunpack.c.h.b16 %v976
  %v1086 = vunpack.c.l.b16 %v977
  %v1087 = vunpack.c.h.b16 %v977
  %v1088 = vunpack.c.l.b16 %v978
  %v1089 = vunpack.c.h.b16 %v978
  %v1090 = vunpack.c.l.b16 %v979
  %v1091 = vunpack.c.h.b16 %v979
  %v1092 = vunpack.c.l.b16 %v980
  %v1093 = vunpack.c.h.b16 %v980
  %v1094 = vunpack.c.l.b16 %v981
  %v1095 = vunpack.c.h.b16 %v981
  %v1096 = vunpack.c.l.b16 %v982
  %v1097 = vunpack.c.h.b16 %v982
  %v1098 = vunpack.c.l.b16 %v983
  %v1099 = vunpack.c.h.b16 %v983
  %v1100 = vunpack.c.l.b16 %v984
  %v1101 = vunpack.c.h.b16 %v984
  %v1102 = vunpack.c.l.b16 %v985
  %v1103 = vunpack.c.h.b16 %v985
  %v1104 = vunpack.c.l.b16 %v986
  %v1105 = vunpack.c.h.b16 %v986
  %v1106 = vpack.c.b16 %v1044, %v1042
  %v1107 = vpack.c.b16 %v1045, %v1043
  %v1108 = vpack.c.b16 %v1048, %v1046
  %v1109 = vpack.c.b16 %v1049, %v1047
  %v1110 = vpack.c.b16 %v1052, %v1050
  %v1111 = vpack.c.b16 %v1053, %v1051
  %v1112 = vpack.c.b16 %v1056, %v1054
  %v1113 = vpack.c.b16 %v1057, %v1055
  %v1114 = vpack.c.b16 %v1060, %v1058
  %v1115 = vpack.c.b16 %v1061, %v1059
  %v1116 = vpack.c.b16 %v1064, %v1062
  %v1117 = vpack.c.b16 %v1065, %v1063
  %v1118 = vpack.c.b16 %v1068, %v1066
  %v1119 = vpack.c.b16 %v1069, %v1067
  %v1120 = vpack.c.b16 %v1072, %v1070
  %v1121 = vpack.c.b16 %v1073, %v1071
  %v1122 = vpack.c.b16 %v1076, %v1074
  %v1123 = vpack.c.b16 %v1077, %v1075
  %v1124 = vpack.c.b16 %v1080, %v1078
  %v1125 = vpack.c.b16 %v1081, %v1079
  %v1126 = vpack.c.b16 %v1084, %v1082
  %v1127 = vpack.c.b16 %v1085, %v1083
  %v1128 = vpack.c.b16 %v1088, %v1086
  %v1129 = vpack.c.b16 %v1089, %v1087
  %v1130 = vpack.c.b16 %v1092, %v1090
  %v1131 = vpack.c.b16 %v1093, %v1091
  %v1132 = vpack.c.b16 %v1096, %v1094
  %v1133 = vpack.c.b16 %v1097, %v1095
  %v1134 = vpack.c.b16 %v1100, %v1098
  %v1135 = vpack.c.b16 %v1101, %v1099
  %v1136 = vpack.c.b16 %v1104, %v1102
  %v1137 = vpack.c.b16 %v1105, %v1103
  %1170 = vmatprep.subr.bf16.mxu0 0
  %1171 = vmatpush1.bf16.msra.mxu0 %v987
  %1172 = vmatprep.subr.bf16.mxu0 0
  %1173 = vmatpush1.bf16.msra.mxu0 %v988
  %1174 = vmatprep.subr.bf16.mxu0 0
  %1175 = vmatpush1.bf16.msra.mxu0 %v989
  %1176 = vmatprep.subr.bf16.mxu0 0
  %1177 = vmatpush1.bf16.msra.mxu0 %v990
  %1178 = vmatprep.subr.bf16.mxu0 0
  %1179 = vmatpush1.bf16.msra.mxu0 %v991
  %1180 = vmatprep.subr.bf16.mxu0 0
  %1181 = vmatpush1.bf16.msra.mxu0 %v992
  %1182 = vmatprep.subr.bf16.mxu0 0
  %1183 = vmatpush1.bf16.msra.mxu0 %v993
  %1184 = vmatprep.subr.bf16.mxu0 0
  %1185 = vmatpush1.bf16.msra.mxu0 %v994
  %1186 = vmatprep.subr.bf16.mxu0 0
  %1187 = vmatpush1.bf16.msra.mxu0 %v995
  %1188 = vmatprep.subr.bf16.mxu0 0
  %1189 = vmatpush1.bf16.msra.mxu0 %v996
  %1190 = vmatprep.subr.bf16.mxu0 0
  %1191 = vmatpush1.bf16.msra.mxu0 %v997
  %1192 = vmatprep.subr.bf16.mxu0 0
  %1193 = vmatpush1.bf16.msra.mxu0 %v998
  %1194 = vmatprep.subr.bf16.mxu0 0
  %1195 = vmatpush1.bf16.msra.mxu0 %v999
  %1196 = vmatprep.subr.bf16.mxu0 0
  %1197 = vmatpush1.bf16.msra.mxu0 %v1000
  %1198 = vmatprep.subr.bf16.mxu0 0
  %1199 = vmatpush1.bf16.msra.mxu0 %v1001
  %1200 = vmatprep.subr.bf16.mxu0 0
  %1201 = vmatpush1.bf16.msra.mxu0 %v1002
  %1202 = vmatprep.mubr.bf16.mxu0 %v1107
  %1203 = vmatmul.mubr.bf16.gmra.mrb[0].mxu0 %v1106
  %v1204 = vpop.f32.mrb[0].mxu0
  %v1205 = vadd.f32 %v1008, %v1204
  %v1206 = vpop.f32.mrb[0].mxu0
  %v1207 = vpop.f32.mrb[0].mxu0
  %v1208 = vadd.f32 %v1008, %v1207
  %v1209 = vpop.f32.mrb[0].mxu0
  %1210 = vmatprep.mubr.bf16.mxu0 %v1109
  %1211 = vmatmul.mubr.bf16.gmra.mrb[0].mxu0 %v1108
  %v1212 = vpop.f32.mrb[0].mxu0
  %v1213 = vadd.f32 %v1008, %v1212
  %v1214 = vpop.f32.mrb[0].mxu0
  %v1215 = vpop.f32.mrb[0].mxu0
  %v1216 = vadd.f32 %v1008, %v1215
  %v1217 = vpop.f32.mrb[0].mxu0
  %1218 = vmatprep.mubr.bf16.mxu0 %v1111
  %1219 = vmatmul.mubr.bf16.gmra.mrb[0].mxu0 %v1110
  %v1220 = vpop.f32.mrb[0].mxu0
  %v1221 = vadd.f32 %v1008, %v1220
  %v1222 = vpop.f32.mrb[0].mxu0
  %v1223 = vpop.f32.mrb[0].mxu0
  %v1224 = vadd.f32 %v1008, %v1223
  %v1225 = vpop.f32.mrb[0].mxu0
  %1226 = vmatprep.mubr.bf16.mxu0 %v1113
  %1227 = vmatmul.mubr.bf16.gmra.mrb[0].mxu0 %v1112
  %v1228 = vpop.f32.mrb[0].mxu0
  %v1229 = vadd.f32 %v1008, %v1228
  %v1230 = vpop.f32.mrb[0].mxu0
  %v1231 = vpop.f32.mrb[0].mxu0
  %v1232 = vadd.f32 %v1008, %v1231
  %v1233 = vpop.f32.mrb[0].mxu0
  %1234 = vmatprep.mubr.bf16.mxu0 %v1115
  %1235 = vmatmul.mubr.bf16.gmra.mrb[0].mxu0 %v1114
  %v1236 = vpop.f32.mrb[0].mxu0
  %v1237 = vadd.f32 %v1008, %v1236
  %v1238 = vpop.f32.mrb[0].mxu0
  %v1239 = vpop.f32.mrb[0].mxu0
  %v1240 = vadd.f32 %v1008, %v1239
  %v1241 = vpop.f32.mrb[0].mxu0
  %1242 = vmatprep.mubr.bf16.mxu0 %v1117
  %1243 = vmatmul.mubr.bf16.gmra.mrb[0].mxu0 %v1116
  %v1244 = vpop.f32.mrb[0].mxu0
  %v1245 = vadd.f32 %v1008, %v1244
  %v1246 = vpop.f32.mrb[0].mxu0
  %v1247 = vpop.f32.mrb[0].mxu0
  %v1248 = vadd.f32 %v1008, %v1247
  %v1249 = vpop.f32.mrb[0].mxu0
  %1250 = vmatprep.mubr.bf16.mxu0 %v1119
  %1251 = vmatmul.mubr.bf16.gmra.mrb[0].mxu0 %v1118
  %v1252 = vpop.f32.mrb[0].mxu0
  %v1253 = vadd.f32 %v1008, %v1252
  %v1254 = vpop.f32.mrb[0].mxu0
  %v1255 = vpop.f32.mrb[0].mxu0
  %v1256 = vadd.f32 %v1008, %v1255
  %v1257 = vpop.f32.mrb[0].mxu0
  %1258 = vmatprep.mubr.bf16.mxu0 %v1121
  %1259 = vmatmul.mubr.bf16.gmra.mrb[0].mxu0 %v1120
  %v1260 = vpop.f32.mrb[0].mxu0
  %v1261 = vadd.f32 %v1008, %v1260
  %v1262 = vpop.f32.mrb[0].mxu0
  %v1263 = vpop.f32.mrb[0].mxu0
  %v1264 = vadd.f32 %v1008, %v1263
  %v1265 = vpop.f32.mrb[0].mxu0
  %1266 = vmatprep.mubr.bf16.mxu0 %v1123
  %1267 = vmatmul.mubr.bf16.gmra.mrb[0].mxu0 %v1122
  %v1268 = vpop.f32.mrb[0].mxu0
  %v1269 = vadd.f32 %v1008, %v1268
  %v1270 = vpop.f32.mrb[0].mxu0
  %v1271 = vpop.f32.mrb[0].mxu0
  %v1272 = vadd.f32 %v1008, %v1271
  %v1273 = vpop.f32.mrb[0].mxu0
  %1274 = vmatprep.mubr.bf16.mxu0 %v1125
  %1275 = vmatmul.mubr.bf16.gmra.mrb[0].mxu0 %v1124
  %v1276 = vpop.f32.mrb[0].mxu0
  %v1277 = vadd.f32 %v1008, %v1276
  %v1278 = vpop.f32.mrb[0].mxu0
  %v1279 = vpop.f32.mrb[0].mxu0
  %v1280 = vadd.f32 %v1008, %v1279
  %v1281 = vpop.f32.mrb[0].mxu0
  %1282 = vmatprep.mubr.bf16.mxu0 %v1127
  %1283 = vmatmul.mubr.bf16.gmra.mrb[0].mxu0 %v1126
  %v1284 = vpop.f32.mrb[0].mxu0
  %v1285 = vadd.f32 %v1008, %v1284
  %v1286 = vpop.f32.mrb[0].mxu0
  %v1287 = vpop.f32.mrb[0].mxu0
  %v1288 = vadd.f32 %v1008, %v1287
  %v1289 = vpop.f32.mrb[0].mxu0
  %1290 = vmatprep.mubr.bf16.mxu0 %v1129
  %1291 = vmatmul.mubr.bf16.gmra.mrb[0].mxu0 %v1128
  %v1292 = vpop.f32.mrb[0].mxu0
  %v1293 = vadd.f32 %v1008, %v1292
  %v1294 = vpop.f32.mrb[0].mxu0
  %v1295 = vpop.f32.mrb[0].mxu0
  %v1296 = vadd.f32 %v1008, %v1295
  %v1297 = vpop.f32.mrb[0].mxu0
  %1298 = vmatprep.mubr.bf16.mxu0 %v1131
  %1299 = vmatmul.mubr.bf16.gmra.mrb[0].mxu0 %v1130
  %v1300 = vpop.f32.mrb[0].mxu0
  %v1301 = vadd.f32 %v1008, %v1300
  %v1302 = vpop.f32.mrb[0].mxu0
  %v1303 = vpop.f32.mrb[0].mxu0
  %v1304 = vadd.f32 %v1008, %v1303
  %v1305 = vpop.f32.mrb[0].mxu0
  %1306 = vmatprep.mubr.bf16.mxu0 %v1133
  %1307 = vmatmul.mubr.bf16.gmra.mrb[0].mxu0 %v1132
  %v1308 = vpop.f32.mrb[0].mxu0
  %v1309 = vadd.f32 %v1008, %v1308
  %v1310 = vpop.f32.mrb[0].mxu0
  %v1311 = vpop.f32.mrb[0].mxu0
  %v1312 = vadd.f32 %v1008, %v1311
  %v1313 = vpop.f32.mrb[0].mxu0
  %1314 = vmatprep.mubr.bf16.mxu0 %v1135
  %1315 = vmatmul.mubr.bf16.gmra.mrb[0].mxu0 %v1134
  %v1316 = vpop.f32.mrb[0].mxu0
  %v1317 = vadd.f32 %v1008, %v1316
  %v1318 = vpop.f32.mrb[0].mxu0
  %v1319 = vpop.f32.mrb[0].mxu0
  %v1320 = vadd.f32 %v1008, %v1319
  %v1321 = vpop.f32.mrb[0].mxu0
  %1322 = vmatprep.mubr.bf16.mxu0 %v1137
  %1323 = vmatmul.mubr.bf16.gmra.mrb[0].mxu0 %v1136
  %v1324 = vpop.f32.mrb[0].mxu0
  %v1325 = vadd.f32 %v1008, %v1324
  %v1326 = vpop.f32.mrb[0].mxu0
  %v1327 = vpop.f32.mrb[0].mxu0
  %v1328 = vadd.f32 %v1008, %v1327
  %v1329 = vpop.f32.mrb[0].mxu0
  %1330 = vdwg.mxu0
  %v1331 = vmax.f32 %v1205, 0.0
  %v1332 = vmax.f32 %v1208, 0.0
  %v1333 = vmax.f32 %v1213, 0.0
  %v1334 = vmax.f32 %v1216, 0.0
  %v1335 = vmax.f32 %v1221, 0.0
  %v1336 = vmax.f32 %v1224, 0.0
  %v1337 = vmax.f32 %v1229, 0.0
  %v1338 = vmax.f32 %v1232, 0.0
  %v1339 = vmax.f32 %v1237, 0.0
  %v1340 = vmax.f32 %v1240, 0.0
  %v1341 = vmax.f32 %v1245, 0.0
  %v1342 = vmax.f32 %v1248, 0.0
  %v1343 = vmax.f32 %v1253, 0.0
  %v1344 = vmax.f32 %v1256, 0.0
  %v1345 = vmax.f32 %v1261, 0.0
  %v1346 = vmax.f32 %v1264, 0.0
  %v1347 = vmax.f32 %v1269, 0.0
  %v1348 = vmax.f32 %v1272, 0.0
  %v1349 = vmax.f32 %v1277, 0.0
  %v1350 = vmax.f32 %v1280, 0.0
  %v1351 = vmax.f32 %v1285, 0.0
  %v1352 = vmax.f32 %v1288, 0.0
  %v1353 = vmax.f32 %v1293, 0.0
  %v1354 = vmax.f32 %v1296, 0.0
  %v1355 = vmax.f32 %v1301, 0.0
  %v1356 = vmax.f32 %v1304, 0.0
  %v1357 = vmax.f32 %v1309, 0.0
  %v1358 = vmax.f32 %v1312, 0.0
  %v1359 = vmax.f32 %v1317, 0.0
  %v1360 = vmax.f32 %v1320, 0.0
  %v1361 = vmax.f32 %v1325, 0.0
  %v1362 = vmax.f32 %v1328, 0.0
  %v1363 = vld [vmem:[%s8] sm:$0xff]
  %v1364 = vld [vmem:[%s8 + $0x8] sm:$0xff]
  %v1365 = vld [vmem:[%s8 + $0x10] sm:$0xff]
  %v1366 = vld [vmem:[%s8 + $0x18] sm:$0xff]
  %v1367 = vld [vmem:[%s9] sm:$0x1]
  %v1369 = vlaneseq
  %v1370 = vshrl.u32 %v1369, 7
  %v1371 = vsub.s32 0, %v1370
  %v1372 = vrot.slane %v1367, %v1371
  %vm1374 = vcmask 261120
  %v1376 = vsel %vm1374, %v1331, 0
  %v1379 = vsel %vm1374, %v1332, 0
  %v1382 = vsel %vm1374, %v1333, 0
  %v1385 = vsel %vm1374, %v1334, 0
  %v1388 = vsel %vm1374, %v1335, 0
  %v1391 = vsel %vm1374, %v1336, 0
  %v1394 = vsel %vm1374, %v1337, 0
  %v1397 = vsel %vm1374, %v1338, 0
  %v1400 = vsel %vm1374, %v1339, 0
  %v1403 = vsel %vm1374, %v1340, 0
  %v1406 = vsel %vm1374, %v1341, 0
  %v1409 = vsel %vm1374, %v1342, 0
  %v1412 = vsel %vm1374, %v1343, 0
  %v1415 = vsel %vm1374, %v1344, 0
  %v1418 = vsel %vm1374, %v1345, 0
  %v1421 = vsel %vm1374, %v1346, 0
  %v1424 = vsel %vm1374, %v1347, 0
  %v1427 = vsel %vm1374, %v1348, 0
  %v1430 = vsel %vm1374, %v1349, 0
  %v1433 = vsel %vm1374, %v1350, 0
  %v1436 = vsel %vm1374, %v1351, 0
  %v1439 = vsel %vm1374, %v1352, 0
  %v1442 = vsel %vm1374, %v1353, 0
  %v1445 = vsel %vm1374, %v1354, 0
  %v1448 = vsel %vm1374, %v1355, 0
  %v1451 = vsel %vm1374, %v1356, 0
  %v1454 = vsel %vm1374, %v1357, 0
  %v1457 = vsel %vm1374, %v1358, 0
  %v1460 = vsel %vm1374, %v1359, 0
  %v1463 = vsel %vm1374, %v1360, 0
  %v1466 = vsel %vm1374, %v1361, 0
  %v1469 = vsel %vm1374, %v1362, 0
  %1471 = vmatprep.subr.mxu0 0.0
  %1472 = vmatpush1.msra.mxu0 %v1363
  %1473 = vmatprep.subr.mxu0 0.0
  %1474 = vmatpush1.msra.mxu0 %v1364
  %1475 = vmatprep.subr.mxu0 0.0
  %1476 = vmatpush1.msra.mxu0 %v1365
  %1477 = vmatprep.subr.mxu0 0.0
  %1478 = vmatpush1.msra.mxu0 %v1366
  %1479 = vmatprep.subr.mxu0 0.0
  %1480 = vmatpush1.msra.mxu0 0.0
  %1481 = vmatprep.subr.mxu0 0.0
  %1482 = vmatpush1.msra.mxu0 0.0
  %1483 = vmatprep.subr.mxu0 0.0
  %1484 = vmatpush1.msra.mxu0 0.0
  %1485 = vmatprep.subr.mxu0 0.0
  %1486 = vmatpush1.msra.mxu0 0.0
  %1487 = vmatprep.subr.mxu0 0.0
  %1488 = vmatpush1.msra.mxu0 0.0
  %1489 = vmatprep.subr.mxu0 0.0
  %1490 = vmatpush1.msra.mxu0 0.0
  %1491 = vmatprep.subr.mxu0 0.0
  %1492 = vmatpush1.msra.mxu0 0.0
  %1493 = vmatprep.subr.mxu0 0.0
  %1494 = vmatpush1.msra.mxu0 0.0
  %1495 = vmatprep.subr.mxu0 0.0
  %1496 = vmatpush1.msra.mxu0 0.0
  %1497 = vmatprep.subr.mxu0 0.0
  %1498 = vmatpush1.msra.mxu0 0.0
  %1499 = vmatprep.subr.mxu0 0.0
  %1500 = vmatpush1.msra.mxu0 0.0
  %1501 = vmatprep.subr.mxu0 0.0
  %1502 = vmatpush1.msra.mxu0 0.0
  %1503 = vmatprep.subr.mxu0 0.0
  %1504 = vmatpush1.msra.mxu0 0.0
  %1505 = vmatprep.subr.mxu0 0.0
  %1506 = vmatpush1.msra.mxu0 0.0
  %1507 = vmatprep.subr.mxu0 0.0
  %1508 = vmatpush1.msra.mxu0 0.0
  %1509 = vmatprep.subr.mxu0 0.0
  %1510 = vmatpush1.msra.mxu0 0.0
  %1511 = vmatprep.subr.mxu0 0.0
  %1512 = vmatpush1.msra.mxu0 0.0
  %1513 = vmatprep.subr.mxu0 0.0
  %1514 = vmatpush1.msra.mxu0 0.0
  %1515 = vmatprep.subr.mxu0 0.0
  %1516 = vmatpush1.msra.mxu0 0.0
  %1517 = vmatprep.subr.mxu0 0.0
  %1518 = vmatpush1.msra.mxu0 0.0
  %1519 = vmatprep.subr.mxu0 0.0
  %1520 = vmatpush1.msra.mxu0 0.0
  %1521 = vmatprep.subr.mxu0 0.0
  %1522 = vmatpush1.msra.mxu0 0.0
  %1523 = vmatprep.subr.mxu0 0.0
  %1524 = vmatpush1.msra.mxu0 0.0
  %1525 = vmatprep.subr.mxu0 0.0
  %1526 = vmatpush1.msra.mxu0 0.0
  %1527 = vmatprep.subr.mxu0 0.0
  %1528 = vmatpush1.msra.mxu0 0.0
  %1529 = vmatprep.subr.mxu0 0.0
  %1530 = vmatpush1.msra.mxu0 0.0
  %1531 = vmatprep.subr.mxu0 0.0
  %1532 = vmatpush1.msra.mxu0 0.0
  %1533 = vmatprep.subr.mxu0 0.0
  %1534 = vmatpush1.msra.mxu0 0.0
  %1535 = vmatprep.mubr.f32.mxu0 0.0
  %1536 = vmatmul.mubr.f32.gmra.mrb[0].mxu0 %v1376
  %v1537 = vpop.f32.mrb[0].mxu0
  %v1538 = vadd.f32 %v1372, %v1537
  %v1539 = vpop.f32.mrb[0].mxu0
  %1540 = vmatprep.mubr.f32.mxu0 0.0
  %1541 = vmatmul.mubr.f32.gmra.mrb[0].mxu0 %v1379
  %v1542 = vpop.f32.mrb[0].mxu0
  %v1543 = vadd.f32 %v1372, %v1542
  %v1544 = vpop.f32.mrb[0].mxu0
  %1545 = vmatprep.mubr.f32.mxu0 0.0
  %1546 = vmatmul.mubr.f32.gmra.mrb[0].mxu0 %v1382
  %v1547 = vpop.f32.mrb[0].mxu0
  %v1548 = vadd.f32 %v1372, %v1547
  %v1549 = vpop.f32.mrb[0].mxu0
  %1550 = vmatprep.mubr.f32.mxu0 0.0
  %1551 = vmatmul.mubr.f32.gmra.mrb[0].mxu0 %v1385
  %v1552 = vpop.f32.mrb[0].mxu0
  %v1553 = vadd.f32 %v1372, %v1552
  %v1554 = vpop.f32.mrb[0].mxu0
  %1555 = vmatprep.mubr.f32.mxu0 0.0
  %1556 = vmatmul.mubr.f32.gmra.mrb[0].mxu0 %v1388
  %v1557 = vpop.f32.mrb[0].mxu0
  %v1558 = vadd.f32 %v1372, %v1557
  %v1559 = vpop.f32.mrb[0].mxu0
  %1560 = vmatprep.mubr.f32.mxu0 0.0
  %1561 = vmatmul.mubr.f32.gmra.mrb[0].mxu0 %v1391
  %v1562 = vpop.f32.mrb[0].mxu0
  %v1563 = vadd.f32 %v1372, %v1562
  %v1564 = vpop.f32.mrb[0].mxu0
  %1565 = vmatprep.mubr.f32.mxu0 0.0
  %1566 = vmatmul.mubr.f32.gmra.mrb[0].mxu0 %v1394
  %v1567 = vpop.f32.mrb[0].mxu0
  %v1568 = vadd.f32 %v1372, %v1567
  %v1569 = vpop.f32.mrb[0].mxu0
  %1570 = vmatprep.mubr.f32.mxu0 0.0
  %1571 = vmatmul.mubr.f32.gmra.mrb[0].mxu0 %v1397
  %v1572 = vpop.f32.mrb[0].mxu0
  %v1573 = vadd.f32 %v1372, %v1572
  %v1574 = vpop.f32.mrb[0].mxu0
  %1575 = vmatprep.mubr.f32.mxu0 0.0
  %1576 = vmatmul.mubr.f32.gmra.mrb[0].mxu0 %v1400
  %v1577 = vpop.f32.mrb[0].mxu0
  %v1578 = vadd.f32 %v1372, %v1577
  %v1579 = vpop.f32.mrb[0].mxu0
  %1580 = vmatprep.mubr.f32.mxu0 0.0
  %1581 = vmatmul.mubr.f32.gmra.mrb[0].mxu0 %v1403
  %v1582 = vpop.f32.mrb[0].mxu0
  %v1583 = vadd.f32 %v1372, %v1582
  %v1584 = vpop.f32.mrb[0].mxu0
  %1585 = vmatprep.mubr.f32.mxu0 0.0
  %1586 = vmatmul.mubr.f32.gmra.mrb[0].mxu0 %v1406
  %v1587 = vpop.f32.mrb[0].mxu0
  %v1588 = vadd.f32 %v1372, %v1587
  %v1589 = vpop.f32.mrb[0].mxu0
  %1590 = vmatprep.mubr.f32.mxu0 0.0
  %1591 = vmatmul.mubr.f32.gmra.mrb[0].mxu0 %v1409
  %v1592 = vpop.f32.mrb[0].mxu0
  %v1593 = vadd.f32 %v1372, %v1592
  %v1594 = vpop.f32.mrb[0].mxu0
  %1595 = vmatprep.mubr.f32.mxu0 0.0
  %1596 = vmatmul.mubr.f32.gmra.mrb[0].mxu0 %v1412
  %v1597 = vpop.f32.mrb[0].mxu0
  %v1598 = vadd.f32 %v1372, %v1597
  %v1599 = vpop.f32.mrb[0].mxu0
  %1600 = vmatprep.mubr.f32.mxu0 0.0
  %1601 = vmatmul.mubr.f32.gmra.mrb[0].mxu0 %v1415
  %v1602 = vpop.f32.mrb[0].mxu0
  %v1603 = vadd.f32 %v1372, %v1602
  %v1604 = vpop.f32.mrb[0].mxu0
  %1605 = vmatprep.mubr.f32.mxu0 0.0
  %1606 = vmatmul.mubr.f32.gmra.mrb[0].mxu0 %v1418
  %v1607 = vpop.f32.mrb[0].mxu0
  %v1608 = vadd.f32 %v1372, %v1607
  %v1609 = vpop.f32.mrb[0].mxu0
  %1610 = vmatprep.mubr.f32.mxu0 0.0
  %1611 = vmatmul.mubr.f32.gmra.mrb[0].mxu0 %v1421
  %v1612 = vpop.f32.mrb[0].mxu0
  %v1613 = vadd.f32 %v1372, %v1612
  %v1614 = vpop.f32.mrb[0].mxu0
  %1615 = vmatprep.mubr.f32.mxu0 0.0
  %1616 = vmatmul.mubr.f32.gmra.mrb[0].mxu0 %v1424
  %v1617 = vpop.f32.mrb[0].mxu0
  %v1618 = vadd.f32 %v1372, %v1617
  %v1619 = vpop.f32.mrb[0].mxu0
  %1620 = vmatprep.mubr.f32.mxu0 0.0
  %1621 = vmatmul.mubr.f32.gmra.mrb[0].mxu0 %v1427
  %v1622 = vpop.f32.mrb[0].mxu0
  %v1623 = vadd.f32 %v1372, %v1622
  %v1624 = vpop.f32.mrb[0].mxu0
  %1625 = vmatprep.mubr.f32.mxu0 0.0
  %1626 = vmatmul.mubr.f32.gmra.mrb[0].mxu0 %v1430
  %v1627 = vpop.f32.mrb[0].mxu0
  %v1628 = vadd.f32 %v1372, %v1627
  %v1629 = vpop.f32.mrb[0].mxu0
  %1630 = vmatprep.mubr.f32.mxu0 0.0
  %1631 = vmatmul.mubr.f32.gmra.mrb[0].mxu0 %v1433
  %v1632 = vpop.f32.mrb[0].mxu0
  %v1633 = vadd.f32 %v1372, %v1632
  %v1634 = vpop.f32.mrb[0].mxu0
  %1635 = vmatprep.mubr.f32.mxu0 0.0
  %1636 = vmatmul.mubr.f32.gmra.mrb[0].mxu0 %v1436
  %v1637 = vpop.f32.mrb[0].mxu0
  %v1638 = vadd.f32 %v1372, %v1637
  %v1639 = vpop.f32.mrb[0].mxu0
  %1640 = vmatprep.mubr.f32.mxu0 0.0
  %1641 = vmatmul.mubr.f32.gmra.mrb[0].mxu0 %v1439
  %v1642 = vpop.f32.mrb[0].mxu0
  %v1643 = vadd.f32 %v1372, %v1642
  %v1644 = vpop.f32.mrb[0].mxu0
  %1645 = vmatprep.mubr.f32.mxu0 0.0
  %1646 = vmatmul.mubr.f32.gmra.mrb[0].mxu0 %v1442
  %v1647 = vpop.f32.mrb[0].mxu0
  %v1648 = vadd.f32 %v1372, %v1647
  %v1649 = vpop.f32.mrb[0].mxu0
  %1650 = vmatprep.mubr.f32.mxu0 0.0
  %1651 = vmatmul.mubr.f32.gmra.mrb[0].mxu0 %v1445
  %v1652 = vpop.f32.mrb[0].mxu0
  %v1653 = vadd.f32 %v1372, %v1652
  %v1654 = vpop.f32.mrb[0].mxu0
  %1655 = vmatprep.mubr.f32.mxu0 0.0
  %1656 = vmatmul.mubr.f32.gmra.mrb[0].mxu0 %v1448
  %v1657 = vpop.f32.mrb[0].mxu0
  %v1658 = vadd.f32 %v1372, %v1657
  %v1659 = vpop.f32.mrb[0].mxu0
  %1660 = vmatprep.mubr.f32.mxu0 0.0
  %1661 = vmatmul.mubr.f32.gmra.mrb[0].mxu0 %v1451
  %v1662 = vpop.f32.mrb[0].mxu0
  %v1663 = vadd.f32 %v1372, %v1662
  %v1664 = vpop.f32.mrb[0].mxu0
  %1665 = vmatprep.mubr.f32.mxu0 0.0
  %1666 = vmatmul.mubr.f32.gmra.mrb[0].mxu0 %v1454
  %v1667 = vpop.f32.mrb[0].mxu0
  %v1668 = vadd.f32 %v1372, %v1667
  %v1669 = vpop.f32.mrb[0].mxu0
  %1670 = vmatprep.mubr.f32.mxu0 0.0
  %1671 = vmatmul.mubr.f32.gmra.mrb[0].mxu0 %v1457
  %v1672 = vpop.f32.mrb[0].mxu0
  %v1673 = vadd.f32 %v1372, %v1672
  %v1674 = vpop.f32.mrb[0].mxu0
  %1675 = vmatprep.mubr.f32.mxu0 0.0
  %1676 = vmatmul.mubr.f32.gmra.mrb[0].mxu0 %v1460
  %v1677 = vpop.f32.mrb[0].mxu0
  %v1678 = vadd.f32 %v1372, %v1677
  %v1679 = vpop.f32.mrb[0].mxu0
  %1680 = vmatprep.mubr.f32.mxu0 0.0
  %1681 = vmatmul.mubr.f32.gmra.mrb[0].mxu0 %v1463
  %v1682 = vpop.f32.mrb[0].mxu0
  %v1683 = vadd.f32 %v1372, %v1682
  %v1684 = vpop.f32.mrb[0].mxu0
  %1685 = vmatprep.mubr.f32.mxu0 0.0
  %1686 = vmatmul.mubr.f32.gmra.mrb[0].mxu0 %v1466
  %v1687 = vpop.f32.mrb[0].mxu0
  %v1688 = vadd.f32 %v1372, %v1687
  %v1689 = vpop.f32.mrb[0].mxu0
  %1690 = vmatprep.mubr.f32.mxu0 0.0
  %1691 = vmatmul.mubr.f32.gmra.mrb[0].mxu0 %v1469
  %v1692 = vpop.f32.mrb[0].mxu0
  %v1693 = vadd.f32 %v1372, %v1692
  %v1694 = vpop.f32.mrb[0].mxu0
  %1695 = vdwg.mxu0
  %v1696 = vmax.f32 %v1538, 0.0
  %v1697 = vmax.f32 %v1543, 0.0
  %v1698 = vmax.f32 %v1548, 0.0
  %v1699 = vmax.f32 %v1553, 0.0
  %v1700 = vmax.f32 %v1558, 0.0
  %v1701 = vmax.f32 %v1563, 0.0
  %v1702 = vmax.f32 %v1568, 0.0
  %v1703 = vmax.f32 %v1573, 0.0
  %v1704 = vmax.f32 %v1578, 0.0
  %v1705 = vmax.f32 %v1583, 0.0
  %v1706 = vmax.f32 %v1588, 0.0
  %v1707 = vmax.f32 %v1593, 0.0
  %v1708 = vmax.f32 %v1598, 0.0
  %v1709 = vmax.f32 %v1603, 0.0
  %v1710 = vmax.f32 %v1608, 0.0
  %v1711 = vmax.f32 %v1613, 0.0
  %v1712 = vmax.f32 %v1618, 0.0
  %v1713 = vmax.f32 %v1623, 0.0
  %v1714 = vmax.f32 %v1628, 0.0
  %v1715 = vmax.f32 %v1633, 0.0
  %v1716 = vmax.f32 %v1638, 0.0
  %v1717 = vmax.f32 %v1643, 0.0
  %v1718 = vmax.f32 %v1648, 0.0
  %v1719 = vmax.f32 %v1653, 0.0
  %v1720 = vmax.f32 %v1658, 0.0
  %v1721 = vmax.f32 %v1663, 0.0
  %v1722 = vmax.f32 %v1668, 0.0
  %v1723 = vmax.f32 %v1673, 0.0
  %v1724 = vmax.f32 %v1678, 0.0
  %v1725 = vmax.f32 %v1683, 0.0
  %v1726 = vmax.f32 %v1688, 0.0
  %v1727 = vmax.f32 %v1693, 0.0
  %1728 = vst.msk [vmem:[%s10] sm:$0xff] %vm1374, %v1696
  %1729 = vst.msk [vmem:[%s10 + $0x8] sm:$0xff] %vm1374, %v1697
  %1730 = vst.msk [vmem:[%s10 + $0x10] sm:$0xff] %vm1374, %v1698
  %1731 = vst.msk [vmem:[%s10 + $0x18] sm:$0xff] %vm1374, %v1699
  %1732 = vst.msk [vmem:[%s10 + $0x20] sm:$0xff] %vm1374, %v1700
  %1733 = vst.msk [vmem:[%s10 + $0x28] sm:$0xff] %vm1374, %v1701
  %1734 = vst.msk [vmem:[%s10 + $0x30] sm:$0xff] %vm1374, %v1702
  %1735 = vst.msk [vmem:[%s10 + $0x38] sm:$0xff] %vm1374, %v1703
  %1736 = vst.msk [vmem:[%s10 + $0x40] sm:$0xff] %vm1374, %v1704
  %1737 = vst.msk [vmem:[%s10 + $0x48] sm:$0xff] %vm1374, %v1705
  %1738 = vst.msk [vmem:[%s10 + $0x50] sm:$0xff] %vm1374, %v1706
  %1739 = vst.msk [vmem:[%s10 + $0x58] sm:$0xff] %vm1374, %v1707
  %1740 = vst.msk [vmem:[%s10 + $0x60] sm:$0xff] %vm1374, %v1708
  %1741 = vst.msk [vmem:[%s10 + $0x68] sm:$0xff] %vm1374, %v1709
  %1742 = vst.msk [vmem:[%s10 + $0x70] sm:$0xff] %vm1374, %v1710
  %1743 = vst.msk [vmem:[%s10 + $0x78] sm:$0xff] %vm1374, %v1711
  %1744 = vst.msk [vmem:[%s10 + $0x80] sm:$0xff] %vm1374, %v1712
  %1745 = vst.msk [vmem:[%s10 + $0x88] sm:$0xff] %vm1374, %v1713
  %1746 = vst.msk [vmem:[%s10 + $0x90] sm:$0xff] %vm1374, %v1714
  %1747 = vst.msk [vmem:[%s10 + $0x98] sm:$0xff] %vm1374, %v1715
  %1748 = vst.msk [vmem:[%s10 + $0xa0] sm:$0xff] %vm1374, %v1716
  %1749 = vst.msk [vmem:[%s10 + $0xa8] sm:$0xff] %vm1374, %v1717
  %1750 = vst.msk [vmem:[%s10 + $0xb0] sm:$0xff] %vm1374, %v1718
  %1751 = vst.msk [vmem:[%s10 + $0xb8] sm:$0xff] %vm1374, %v1719
  %1752 = vst.msk [vmem:[%s10 + $0xc0] sm:$0xff] %vm1374, %v1720
  %1753 = vst.msk [vmem:[%s10 + $0xc8] sm:$0xff] %vm1374, %v1721
  %1754 = vst.msk [vmem:[%s10 + $0xd0] sm:$0xff] %vm1374, %v1722
  %1755 = vst.msk [vmem:[%s10 + $0xd8] sm:$0xff] %vm1374, %v1723
  %1756 = vst.msk [vmem:[%s10 + $0xe0] sm:$0xff] %vm1374, %v1724
  %1757 = vst.msk [vmem:[%s10 + $0xe8] sm:$0xff] %vm1374, %v1725
  %1758 = vst.msk [vmem:[%s10 + $0xf0] sm:$0xff] %vm1374, %v1726
  %1759 = vst.msk [vmem:[%s10 + $0xf8] sm:$0xff] %vm1374, %v1727
  // Predicated region
  $region42: #{kepce_gcn_forward.2} parent=0 // pred_check
    _
  $region43: #{kepce_gcn_forward.2} parent=0 // pred_check_branch
    %1761 = sbr.rel (0) target = $region45
  $region44: #{kepce_gcn_forward.2} parent=0 // pred_region
    _
  $region45: #{kepce_gcn_forward.2} parent=0 // pred_fallthru
    _
  // Predicated region
  $region46: #{kepce_gcn_forward.2} parent=0 // pred_check
    _
  $region47: #{kepce_gcn_forward.2} parent=0 // pred_check_branch
    %1763 = sbr.rel (0) target = $region49
  $region48: #{kepce_gcn_forward.2} parent=0 // pred_region
    _
  $region49: #{kepce_gcn_forward.2} parent=0 // pred_fallthru
    _

// kernel: kepce_gcn_forward.3
$region0: #{kepce_gcn_forward.3}
  #allocation0 [shape = 'u32[]', space=smem, size = 0x4, offset = 0x4, fixed_abs, tag = 'smem constant byte address 0x4 - core index']
  #allocation1 [shape = 'u32[144,128]{1,0:T(1,128)}', space=vmem, size = 0x12000, scoped, tag = 'internal scratch']
  %s0 = inlined_call_operand.vmem [shape: f32[256,1], index: 0, kind: input, shape index: {}]
  %s1 = inlined_call_operand.vmem [shape: f32[256,1], index: 1, kind: input, shape index: {}]
  %s2 = inlined_call_operand.vmem [shape: f32[256,32], index: 2, kind: input, shape index: {}]
  %s3 = inlined_call_operand.vmem [shape: f32[256,32], index: 3, kind: input, shape index: {}]
  %s4 = inlined_call_operand.vmem [shape: f32[1,32], index: 4, kind: input, shape index: {}]
  %s5 = inlined_call_operand.vmem [shape: f32[1,32], index: 5, kind: input, shape index: {}]
  %s6 = inlined_call_operand.vmem [shape: f32[32,32], index: 6, kind: input, shape index: {}]
  %s7 = inlined_call_operand.vmem [shape: f32[32,32], index: 7, kind: input, shape index: {}]
  %s8 = inlined_call_operand.vmem [shape: f32[1,32], index: 8, kind: input, shape index: {}]
  %s9 = inlined_call_operand.vmem [shape: f32[32,128], index: 9, kind: input, shape index: {}]
  %s10 = inlined_call_operand.vmem [shape: f32[1,128], index: 10, kind: input, shape index: {}]
  %s11 = inlined_call_operand.vmem [shape: f32[256,128], index: 11, kind: output, shape index: {}]
  %s12 = sld [smem:[#allocation0]]
  $region54: #{kepce_gcn_forward.3} parent=0
    _
  %s14 = ssub.s32 1, %s12
  %s15 = scalar_select 0, %s14, %s12
  // Predicated region
  $region2: #{kepce_gcn_forward.3} parent=0 // pred_check
    _
  $region3: #{kepce_gcn_forward.3} parent=0 // pred_check_branch
    %17 = sbr.rel (0) target = $region5
  $region4: #{kepce_gcn_forward.3} parent=0 // pred_region
    _
  $region5: #{kepce_gcn_forward.3} parent=0 // pred_fallthru
    _
  // Predicated region
  $region6: #{kepce_gcn_forward.3} parent=0 // pred_check
    _
  $region7: #{kepce_gcn_forward.3} parent=0 // pred_check_branch
    %19 = sbr.rel (0) target = $region9
  $region8: #{kepce_gcn_forward.3} parent=0 // pred_region
    _
  $region9: #{kepce_gcn_forward.3} parent=0 // pred_fallthru
    _
  // Predicated region
  $region10: #{kepce_gcn_forward.3} parent=0 // pred_check
    _
  $region11: #{kepce_gcn_forward.3} parent=0 // pred_check_branch
    %21 = sbr.rel (0) target = $region13
  $region12: #{kepce_gcn_forward.3} parent=0 // pred_region
    _
  $region13: #{kepce_gcn_forward.3} parent=0 // pred_fallthru
    _
  // Predicated region
  $region14: #{kepce_gcn_forward.3} parent=0 // pred_check
    _
  $region15: #{kepce_gcn_forward.3} parent=0 // pred_check_branch
    %23 = sbr.rel (0) target = $region17
  $region16: #{kepce_gcn_forward.3} parent=0 // pred_region
    _
  $region17: #{kepce_gcn_forward.3} parent=0 // pred_fallthru
    _
  // Predicated region
  $region18: #{kepce_gcn_forward.3} parent=0 // pred_check
    _
  $region19: #{kepce_gcn_forward.3} parent=0 // pred_check_branch
    %25 = sbr.rel (0) target = $region21
  $region20: #{kepce_gcn_forward.3} parent=0 // pred_region
    _
  $region21: #{kepce_gcn_forward.3} parent=0 // pred_fallthru
    _
  // Predicated region
  $region22: #{kepce_gcn_forward.3} parent=0 // pred_check
    _
  $region23: #{kepce_gcn_forward.3} parent=0 // pred_check_branch
    %27 = sbr.rel (0) target = $region25
  $region24: #{kepce_gcn_forward.3} parent=0 // pred_region
    _
  $region25: #{kepce_gcn_forward.3} parent=0 // pred_fallthru
    _
  // Predicated region
  $region26: #{kepce_gcn_forward.3} parent=0 // pred_check
    _
  $region27: #{kepce_gcn_forward.3} parent=0 // pred_check_branch
    %29 = sbr.rel (0) target = $region29
  $region28: #{kepce_gcn_forward.3} parent=0 // pred_region
    _
  $region29: #{kepce_gcn_forward.3} parent=0 // pred_fallthru
    _
  // Predicated region
  $region30: #{kepce_gcn_forward.3} parent=0 // pred_check
    _
  $region31: #{kepce_gcn_forward.3} parent=0 // pred_check_branch
    %31 = sbr.rel (0) target = $region33
  $region32: #{kepce_gcn_forward.3} parent=0 // pred_region
    _
  $region33: #{kepce_gcn_forward.3} parent=0 // pred_fallthru
    _
  // Predicated region
  $region34: #{kepce_gcn_forward.3} parent=0 // pred_check
    _
  $region35: #{kepce_gcn_forward.3} parent=0 // pred_check_branch
    %33 = sbr.rel (0) target = $region37
  $region36: #{kepce_gcn_forward.3} parent=0 // pred_region
    _
  $region37: #{kepce_gcn_forward.3} parent=0 // pred_fallthru
    _
  // Predicated region
  $region38: #{kepce_gcn_forward.3} parent=0 // pred_check
    _
  $region39: #{kepce_gcn_forward.3} parent=0 // pred_check_branch
    %35 = sbr.rel (0) target = $region41
  $region40: #{kepce_gcn_forward.3} parent=0 // pred_region
    _
  $region41: #{kepce_gcn_forward.3} parent=0 // pred_fallthru
    _
  // Predicated region
  $region42: #{kepce_gcn_forward.3} parent=0 // pred_check
    _
  $region43: #{kepce_gcn_forward.3} parent=0 // pred_check_branch
    %37 = sbr.rel (0) target = $region45
  $region44: #{kepce_gcn_forward.3} parent=0 // pred_region
    _
  $region45: #{kepce_gcn_forward.3} parent=0 // pred_fallthru
    _
  %v38 = vld [vmem:[%s0] sm:$0xff]
  %v39 = vld [vmem:[%s0 + $0x8] sm:$0xff]
  %v40 = vld [vmem:[%s0 + $0x10] sm:$0xff]
  %v41 = vld [vmem:[%s0 + $0x18] sm:$0xff]
  %v42 = vld [vmem:[%s0 + $0x20] sm:$0xff]
  %v43 = vld [vmem:[%s0 + $0x28] sm:$0xff]
  %v44 = vld [vmem:[%s0 + $0x30] sm:$0xff]
  %v45 = vld [vmem:[%s0 + $0x38] sm:$0xff]
  %v46 = vld [vmem:[%s0 + $0x40] sm:$0xff]
  %v47 = vld [vmem:[%s0 + $0x48] sm:$0xff]
  %v48 = vld [vmem:[%s0 + $0x50] sm:$0xff]
  %v49 = vld [vmem:[%s0 + $0x58] sm:$0xff]
  %v50 = vld [vmem:[%s0 + $0x60] sm:$0xff]
  %v51 = vld [vmem:[%s0 + $0x68] sm:$0xff]
  %v52 = vld [vmem:[%s0 + $0x70] sm:$0xff]
  %v53 = vld [vmem:[%s0 + $0x78] sm:$0xff]
  %v54 = vld [vmem:[%s0 + $0x80] sm:$0xff]
  %v55 = vld [vmem:[%s0 + $0x88] sm:$0xff]
  %v56 = vld [vmem:[%s0 + $0x90] sm:$0xff]
  %v57 = vld [vmem:[%s0 + $0x98] sm:$0xff]
  %v58 = vld [vmem:[%s0 + $0xa0] sm:$0xff]
  %v59 = vld [vmem:[%s0 + $0xa8] sm:$0xff]
  %v60 = vld [vmem:[%s0 + $0xb0] sm:$0xff]
  %v61 = vld [vmem:[%s0 + $0xb8] sm:$0xff]
  %v62 = vld [vmem:[%s0 + $0xc0] sm:$0xff]
  %v63 = vld [vmem:[%s0 + $0xc8] sm:$0xff]
  %v64 = vld [vmem:[%s0 + $0xd0] sm:$0xff]
  %v65 = vld [vmem:[%s0 + $0xd8] sm:$0xff]
  %v66 = vld [vmem:[%s0 + $0xe0] sm:$0xff]
  %v67 = vld [vmem:[%s0 + $0xe8] sm:$0xff]
  %v68 = vld [vmem:[%s0 + $0xf0] sm:$0xff]
  %v69 = vld [vmem:[%s0 + $0xf8] sm:$0xff]
  %v70 = vld [vmem:[%s4] sm:$0x1]
  %72 = vset.pattern.permute.xlu0 0
  %73 = vperm.xlu0 %72, %v38
  %v74 = vpop.permute.xlu0 %73
  %77 = vset.pattern.permute.xlu0 0
  %78 = vperm.xlu0 %77, %v39
  %v79 = vpop.permute.xlu0 %78
  %82 = vset.pattern.permute.xlu0 0
  %83 = vperm.xlu0 %82, %v40
  %v84 = vpop.permute.xlu0 %83
  %87 = vset.pattern.permute.xlu0 0
  %88 = vperm.xlu0 %87, %v41
  %v89 = vpop.permute.xlu0 %88
  %92 = vset.pattern.permute.xlu0 0
  %93 = vperm.xlu0 %92, %v42
  %v94 = vpop.permute.xlu0 %93
  %97 = vset.pattern.permute.xlu0 0
  %98 = vperm.xlu0 %97, %v43
  %v99 = vpop.permute.xlu0 %98
  %102 = vset.pattern.permute.xlu0 0
  %103 = vperm.xlu0 %102, %v44
  %v104 = vpop.permute.xlu0 %103
  %107 = vset.pattern.permute.xlu0 0
  %108 = vperm.xlu0 %107, %v45
  %v109 = vpop.permute.xlu0 %108
  %112 = vset.pattern.permute.xlu0 0
  %113 = vperm.xlu0 %112, %v46
  %v114 = vpop.permute.xlu0 %113
  %117 = vset.pattern.permute.xlu0 0
  %118 = vperm.xlu0 %117, %v47
  %v119 = vpop.permute.xlu0 %118
  %122 = vset.pattern.permute.xlu0 0
  %123 = vperm.xlu0 %122, %v48
  %v124 = vpop.permute.xlu0 %123
  %127 = vset.pattern.permute.xlu0 0
  %128 = vperm.xlu0 %127, %v49
  %v129 = vpop.permute.xlu0 %128
  %132 = vset.pattern.permute.xlu0 0
  %133 = vperm.xlu0 %132, %v50
  %v134 = vpop.permute.xlu0 %133
  %137 = vset.pattern.permute.xlu0 0
  %138 = vperm.xlu0 %137, %v51
  %v139 = vpop.permute.xlu0 %138
  %142 = vset.pattern.permute.xlu0 0
  %143 = vperm.xlu0 %142, %v52
  %v144 = vpop.permute.xlu0 %143
  %147 = vset.pattern.permute.xlu0 0
  %148 = vperm.xlu0 %147, %v53
  %v149 = vpop.permute.xlu0 %148
  %152 = vset.pattern.permute.xlu0 0
  %153 = vperm.xlu0 %152, %v54
  %v154 = vpop.permute.xlu0 %153
  %157 = vset.pattern.permute.xlu0 0
  %158 = vperm.xlu0 %157, %v55
  %v159 = vpop.permute.xlu0 %158
  %162 = vset.pattern.permute.xlu0 0
  %163 = vperm.xlu0 %162, %v56
  %v164 = vpop.permute.xlu0 %163
  %167 = vset.pattern.permute.xlu0 0
  %168 = vperm.xlu0 %167, %v57
  %v169 = vpop.permute.xlu0 %168
  %172 = vset.pattern.permute.xlu0 0
  %173 = vperm.xlu0 %172, %v58
  %v174 = vpop.permute.xlu0 %173
  %177 = vset.pattern.permute.xlu0 0
  %178 = vperm.xlu0 %177, %v59
  %v179 = vpop.permute.xlu0 %178
  %182 = vset.pattern.permute.xlu0 0
  %183 = vperm.xlu0 %182, %v60
  %v184 = vpop.permute.xlu0 %183
  %187 = vset.pattern.permute.xlu0 0
  %188 = vperm.xlu0 %187, %v61
  %v189 = vpop.permute.xlu0 %188
  %192 = vset.pattern.permute.xlu0 0
  %193 = vperm.xlu0 %192, %v62
  %v194 = vpop.permute.xlu0 %193
  %197 = vset.pattern.permute.xlu0 0
  %198 = vperm.xlu0 %197, %v63
  %v199 = vpop.permute.xlu0 %198
  %202 = vset.pattern.permute.xlu0 0
  %203 = vperm.xlu0 %202, %v64
  %v204 = vpop.permute.xlu0 %203
  %207 = vset.pattern.permute.xlu0 0
  %208 = vperm.xlu0 %207, %v65
  %v209 = vpop.permute.xlu0 %208
  %212 = vset.pattern.permute.xlu0 0
  %213 = vperm.xlu0 %212, %v66
  %v214 = vpop.permute.xlu0 %213
  %217 = vset.pattern.permute.xlu0 0
  %218 = vperm.xlu0 %217, %v67
  %v219 = vpop.permute.xlu0 %218
  %222 = vset.pattern.permute.xlu0 0
  %223 = vperm.xlu0 %222, %v68
  %v224 = vpop.permute.xlu0 %223
  %227 = vset.pattern.permute.xlu0 0
  %228 = vperm.xlu0 %227, %v69
  %v229 = vpop.permute.xlu0 %228
  %v232 = vlaneseq
  %v233 = vshrl.u32 %v232, 7
  %v234 = vsub.s32 0, %v233
  %v235 = vrot.slane %v70, %v234
  %v237 = vmul.f32 %v74, %v235
  %v238 = vmul.f32 %v79, %v235
  %v239 = vmul.f32 %v84, %v235
  %v240 = vmul.f32 %v89, %v235
  %v241 = vmul.f32 %v94, %v235
  %v242 = vmul.f32 %v99, %v235
  %v243 = vmul.f32 %v104, %v235
  %v244 = vmul.f32 %v109, %v235
  %v245 = vmul.f32 %v114, %v235
  %v246 = vmul.f32 %v119, %v235
  %v247 = vmul.f32 %v124, %v235
  %v248 = vmul.f32 %v129, %v235
  %v249 = vmul.f32 %v134, %v235
  %v250 = vmul.f32 %v139, %v235
  %v251 = vmul.f32 %v144, %v235
  %v252 = vmul.f32 %v149, %v235
  %v253 = vmul.f32 %v154, %v235
  %v254 = vmul.f32 %v159, %v235
  %v255 = vmul.f32 %v164, %v235
  %v256 = vmul.f32 %v169, %v235
  %v257 = vmul.f32 %v174, %v235
  %v258 = vmul.f32 %v179, %v235
  %v259 = vmul.f32 %v184, %v235
  %v260 = vmul.f32 %v189, %v235
  %v261 = vmul.f32 %v194, %v235
  %v262 = vmul.f32 %v199, %v235
  %v263 = vmul.f32 %v204, %v235
  %v264 = vmul.f32 %v209, %v235
  %v265 = vmul.f32 %v214, %v235
  %v266 = vmul.f32 %v219, %v235
  %v267 = vmul.f32 %v224, %v235
  %v268 = vmul.f32 %v229, %v235
  %v269 = vld [vmem:[%s1] sm:$0xff]
  %v270 = vld [vmem:[%s1 + $0x8] sm:$0xff]
  %v271 = vld [vmem:[%s1 + $0x10] sm:$0xff]
  %v272 = vld [vmem:[%s1 + $0x18] sm:$0xff]
  %v273 = vld [vmem:[%s1 + $0x20] sm:$0xff]
  %v274 = vld [vmem:[%s1 + $0x28] sm:$0xff]
  %v275 = vld [vmem:[%s1 + $0x30] sm:$0xff]
  %v276 = vld [vmem:[%s1 + $0x38] sm:$0xff]
  %v277 = vld [vmem:[%s1 + $0x40] sm:$0xff]
  %v278 = vld [vmem:[%s1 + $0x48] sm:$0xff]
  %v279 = vld [vmem:[%s1 + $0x50] sm:$0xff]
  %v280 = vld [vmem:[%s1 + $0x58] sm:$0xff]
  %v281 = vld [vmem:[%s1 + $0x60] sm:$0xff]
  %v282 = vld [vmem:[%s1 + $0x68] sm:$0xff]
  %v283 = vld [vmem:[%s1 + $0x70] sm:$0xff]
  %v284 = vld [vmem:[%s1 + $0x78] sm:$0xff]
  %v285 = vld [vmem:[%s1 + $0x80] sm:$0xff]
  %v286 = vld [vmem:[%s1 + $0x88] sm:$0xff]
  %v287 = vld [vmem:[%s1 + $0x90] sm:$0xff]
  %v288 = vld [vmem:[%s1 + $0x98] sm:$0xff]
  %v289 = vld [vmem:[%s1 + $0xa0] sm:$0xff]
  %v290 = vld [vmem:[%s1 + $0xa8] sm:$0xff]
  %v291 = vld [vmem:[%s1 + $0xb0] sm:$0xff]
  %v292 = vld [vmem:[%s1 + $0xb8] sm:$0xff]
  %v293 = vld [vmem:[%s1 + $0xc0] sm:$0xff]
  %v294 = vld [vmem:[%s1 + $0xc8] sm:$0xff]
  %v295 = vld [vmem:[%s1 + $0xd0] sm:$0xff]
  %v296 = vld [vmem:[%s1 + $0xd8] sm:$0xff]
  %v297 = vld [vmem:[%s1 + $0xe0] sm:$0xff]
  %v298 = vld [vmem:[%s1 + $0xe8] sm:$0xff]
  %v299 = vld [vmem:[%s1 + $0xf0] sm:$0xff]
  %v300 = vld [vmem:[%s1 + $0xf8] sm:$0xff]
  %v301 = vld [vmem:[%s5] sm:$0x1]
  %303 = vset.pattern.permute.xlu0 0
  %304 = vperm.xlu0 %303, %v269
  %v305 = vpop.permute.xlu0 %304
  %308 = vset.pattern.permute.xlu0 0
  %309 = vperm.xlu0 %308, %v270
  %v310 = vpop.permute.xlu0 %309
  %313 = vset.pattern.permute.xlu0 0
  %314 = vperm.xlu0 %313, %v271
  %v315 = vpop.permute.xlu0 %314
  %318 = vset.pattern.permute.xlu0 0
  %319 = vperm.xlu0 %318, %v272
  %v320 = vpop.permute.xlu0 %319
  %323 = vset.pattern.permute.xlu0 0
  %324 = vperm.xlu0 %323, %v273
  %v325 = vpop.permute.xlu0 %324
  %328 = vset.pattern.permute.xlu0 0
  %329 = vperm.xlu0 %328, %v274
  %v330 = vpop.permute.xlu0 %329
  %333 = vset.pattern.permute.xlu0 0
  %334 = vperm.xlu0 %333, %v275
  %v335 = vpop.permute.xlu0 %334
  %338 = vset.pattern.permute.xlu0 0
  %339 = vperm.xlu0 %338, %v276
  %v340 = vpop.permute.xlu0 %339
  %343 = vset.pattern.permute.xlu0 0
  %344 = vperm.xlu0 %343, %v277
  %v345 = vpop.permute.xlu0 %344
  %348 = vset.pattern.permute.xlu0 0
  %349 = vperm.xlu0 %348, %v278
  %v350 = vpop.permute.xlu0 %349
  %353 = vset.pattern.permute.xlu0 0
  %354 = vperm.xlu0 %353, %v279
  %v355 = vpop.permute.xlu0 %354
  %358 = vset.pattern.permute.xlu0 0
  %359 = vperm.xlu0 %358, %v280
  %v360 = vpop.permute.xlu0 %359
  %363 = vset.pattern.permute.xlu0 0
  %364 = vperm.xlu0 %363, %v281
  %v365 = vpop.permute.xlu0 %364
  %368 = vset.pattern.permute.xlu0 0
  %369 = vperm.xlu0 %368, %v282
  %v370 = vpop.permute.xlu0 %369
  %373 = vset.pattern.permute.xlu0 0
  %374 = vperm.xlu0 %373, %v283
  %v375 = vpop.permute.xlu0 %374
  %378 = vset.pattern.permute.xlu0 0
  %379 = vperm.xlu0 %378, %v284
  %v380 = vpop.permute.xlu0 %379
  %383 = vset.pattern.permute.xlu0 0
  %384 = vperm.xlu0 %383, %v285
  %v385 = vpop.permute.xlu0 %384
  %388 = vset.pattern.permute.xlu0 0
  %389 = vperm.xlu0 %388, %v286
  %v390 = vpop.permute.xlu0 %389
  %393 = vset.pattern.permute.xlu0 0
  %394 = vperm.xlu0 %393, %v287
  %v395 = vpop.permute.xlu0 %394
  %398 = vset.pattern.permute.xlu0 0
  %399 = vperm.xlu0 %398, %v288
  %v400 = vpop.permute.xlu0 %399
  %403 = vset.pattern.permute.xlu0 0
  %404 = vperm.xlu0 %403, %v289
  %v405 = vpop.permute.xlu0 %404
  %408 = vset.pattern.permute.xlu0 0
  %409 = vperm.xlu0 %408, %v290
  %v410 = vpop.permute.xlu0 %409
  %413 = vset.pattern.permute.xlu0 0
  %414 = vperm.xlu0 %413, %v291
  %v415 = vpop.permute.xlu0 %414
  %418 = vset.pattern.permute.xlu0 0
  %419 = vperm.xlu0 %418, %v292
  %v420 = vpop.permute.xlu0 %419
  %423 = vset.pattern.permute.xlu0 0
  %424 = vperm.xlu0 %423, %v293
  %v425 = vpop.permute.xlu0 %424
  %428 = vset.pattern.permute.xlu0 0
  %429 = vperm.xlu0 %428, %v294
  %v430 = vpop.permute.xlu0 %429
  %433 = vset.pattern.permute.xlu0 0
  %434 = vperm.xlu0 %433, %v295
  %v435 = vpop.permute.xlu0 %434
  %438 = vset.pattern.permute.xlu0 0
  %439 = vperm.xlu0 %438, %v296
  %v440 = vpop.permute.xlu0 %439
  %443 = vset.pattern.permute.xlu0 0
  %444 = vperm.xlu0 %443, %v297
  %v445 = vpop.permute.xlu0 %444
  %448 = vset.pattern.permute.xlu0 0
  %449 = vperm.xlu0 %448, %v298
  %v450 = vpop.permute.xlu0 %449
  %453 = vset.pattern.permute.xlu0 0
  %454 = vperm.xlu0 %453, %v299
  %v455 = vpop.permute.xlu0 %454
  %458 = vset.pattern.permute.xlu0 0
  %459 = vperm.xlu0 %458, %v300
  %v460 = vpop.permute.xlu0 %459
  %v463 = vlaneseq
  %v464 = vshrl.u32 %v463, 7
  %v465 = vsub.s32 0, %v464
  %v466 = vrot.slane %v301, %v465
  %v468 = vmul.f32 %v305, %v466
  %v469 = vmul.f32 %v310, %v466
  %v470 = vmul.f32 %v315, %v466
  %v471 = vmul.f32 %v320, %v466
  %v472 = vmul.f32 %v325, %v466
  %v473 = vmul.f32 %v330, %v466
  %v474 = vmul.f32 %v335, %v466
  %v475 = vmul.f32 %v340, %v466
  %v476 = vmul.f32 %v345, %v466
  %v477 = vmul.f32 %v350, %v466
  %v478 = vmul.f32 %v355, %v466
  %v479 = vmul.f32 %v360, %v466
  %v480 = vmul.f32 %v365, %v466
  %v481 = vmul.f32 %v370, %v466
  %v482 = vmul.f32 %v375, %v466
  %v483 = vmul.f32 %v380, %v466
  %v484 = vmul.f32 %v385, %v466
  %v485 = vmul.f32 %v390, %v466
  %v486 = vmul.f32 %v395, %v466
  %v487 = vmul.f32 %v400, %v466
  %v488 = vmul.f32 %v405, %v466
  %v489 = vmul.f32 %v410, %v466
  %v490 = vmul.f32 %v415, %v466
  %v491 = vmul.f32 %v420, %v466
  %v492 = vmul.f32 %v425, %v466
  %v493 = vmul.f32 %v430, %v466
  %v494 = vmul.f32 %v435, %v466
  %v495 = vmul.f32 %v440, %v466
  %v496 = vmul.f32 %v445, %v466
  %v497 = vmul.f32 %v450, %v466
  %v498 = vmul.f32 %v455, %v466
  %v499 = vmul.f32 %v460, %v466
  %v500 = vadd.f32 %v237, %v468
  %v501 = vadd.f32 %v238, %v469
  %v502 = vadd.f32 %v239, %v470
  %v503 = vadd.f32 %v240, %v471
  %v504 = vadd.f32 %v241, %v472
  %v505 = vadd.f32 %v242, %v473
  %v506 = vadd.f32 %v243, %v474
  %v507 = vadd.f32 %v244, %v475
  %v508 = vadd.f32 %v245, %v476
  %v509 = vadd.f32 %v246, %v477
  %v510 = vadd.f32 %v247, %v478
  %v511 = vadd.f32 %v248, %v479
  %v512 = vadd.f32 %v249, %v480
  %v513 = vadd.f32 %v250, %v481
  %v514 = vadd.f32 %v251, %v482
  %v515 = vadd.f32 %v252, %v483
  %v516 = vadd.f32 %v253, %v484
  %v517 = vadd.f32 %v254, %v485
  %v518 = vadd.f32 %v255, %v486
  %v519 = vadd.f32 %v256, %v487
  %v520 = vadd.f32 %v257, %v488
  %v521 = vadd.f32 %v258, %v489
  %v522 = vadd.f32 %v259, %v490
  %v523 = vadd.f32 %v260, %v491
  %v524 = vadd.f32 %v261, %v492
  %v525 = vadd.f32 %v262, %v493
  %v526 = vadd.f32 %v263, %v494
  %v527 = vadd.f32 %v264, %v495
  %v528 = vadd.f32 %v265, %v496
  %v529 = vadd.f32 %v266, %v497
  %v530 = vadd.f32 %v267, %v498
  %v531 = vadd.f32 %v268, %v499
  %v532 = vld [vmem:[%s2] sm:$0xff]
  %v533 = vld [vmem:[%s2 + $0x8] sm:$0xff]
  %v534 = vld [vmem:[%s2 + $0x10] sm:$0xff]
  %v535 = vld [vmem:[%s2 + $0x18] sm:$0xff]
  %v536 = vld [vmem:[%s2 + $0x20] sm:$0xff]
  %v537 = vld [vmem:[%s2 + $0x28] sm:$0xff]
  %v538 = vld [vmem:[%s2 + $0x30] sm:$0xff]
  %v539 = vld [vmem:[%s2 + $0x38] sm:$0xff]
  %v540 = vld [vmem:[%s2 + $0x40] sm:$0xff]
  %v541 = vld [vmem:[%s2 + $0x48] sm:$0xff]
  %v542 = vld [vmem:[%s2 + $0x50] sm:$0xff]
  %v543 = vld [vmem:[%s2 + $0x58] sm:$0xff]
  %v544 = vld [vmem:[%s2 + $0x60] sm:$0xff]
  %v545 = vld [vmem:[%s2 + $0x68] sm:$0xff]
  %v546 = vld [vmem:[%s2 + $0x70] sm:$0xff]
  %v547 = vld [vmem:[%s2 + $0x78] sm:$0xff]
  %v548 = vld [vmem:[%s2 + $0x80] sm:$0xff]
  %v549 = vld [vmem:[%s2 + $0x88] sm:$0xff]
  %v550 = vld [vmem:[%s2 + $0x90] sm:$0xff]
  %v551 = vld [vmem:[%s2 + $0x98] sm:$0xff]
  %v552 = vld [vmem:[%s2 + $0xa0] sm:$0xff]
  %v553 = vld [vmem:[%s2 + $0xa8] sm:$0xff]
  %v554 = vld [vmem:[%s2 + $0xb0] sm:$0xff]
  %v555 = vld [vmem:[%s2 + $0xb8] sm:$0xff]
  %v556 = vld [vmem:[%s2 + $0xc0] sm:$0xff]
  %v557 = vld [vmem:[%s2 + $0xc8] sm:$0xff]
  %v558 = vld [vmem:[%s2 + $0xd0] sm:$0xff]
  %v559 = vld [vmem:[%s2 + $0xd8] sm:$0xff]
  %v560 = vld [vmem:[%s2 + $0xe0] sm:$0xff]
  %v561 = vld [vmem:[%s2 + $0xe8] sm:$0xff]
  %v562 = vld [vmem:[%s2 + $0xf0] sm:$0xff]
  %v563 = vld [vmem:[%s2 + $0xf8] sm:$0xff]
  %v564 = vld [vmem:[%s6] sm:$0xff]
  %v565 = vld [vmem:[%s6 + $0x8] sm:$0xff]
  %v566 = vld [vmem:[%s6 + $0x10] sm:$0xff]
  %v567 = vld [vmem:[%s6 + $0x18] sm:$0xff]
  %vm568 = vcmask 261120
  %v570 = vsel %vm568, %v532, 0
  %v573 = vsel %vm568, %v533, 0
  %v576 = vsel %vm568, %v534, 0
  %v579 = vsel %vm568, %v535, 0
  %v582 = vsel %vm568, %v536, 0
  %v585 = vsel %vm568, %v537, 0
  %v588 = vsel %vm568, %v538, 0
  %v591 = vsel %vm568, %v539, 0
  %v594 = vsel %vm568, %v540, 0
  %v597 = vsel %vm568, %v541, 0
  %v600 = vsel %vm568, %v542, 0
  %v603 = vsel %vm568, %v543, 0
  %v606 = vsel %vm568, %v544, 0
  %v609 = vsel %vm568, %v545, 0
  %v612 = vsel %vm568, %v546, 0
  %v615 = vsel %vm568, %v547, 0
  %v618 = vsel %vm568, %v548, 0
  %v621 = vsel %vm568, %v549, 0
  %v624 = vsel %vm568, %v550, 0
  %v627 = vsel %vm568, %v551, 0
  %v630 = vsel %vm568, %v552, 0
  %v633 = vsel %vm568, %v553, 0
  %v636 = vsel %vm568, %v554, 0
  %v639 = vsel %vm568, %v555, 0
  %v642 = vsel %vm568, %v556, 0
  %v645 = vsel %vm568, %v557, 0
  %v648 = vsel %vm568, %v558, 0
  %v651 = vsel %vm568, %v559, 0
  %v654 = vsel %vm568, %v560, 0
  %v657 = vsel %vm568, %v561, 0
  %v660 = vsel %vm568, %v562, 0
  %v663 = vsel %vm568, %v563, 0
  %665 = vmatprep.subr.mxu0 0.0
  %666 = vmatpush1.msra.mxu0 %v564
  %667 = vmatprep.subr.mxu0 0.0
  %668 = vmatpush1.msra.mxu0 %v565
  %669 = vmatprep.subr.mxu0 0.0
  %670 = vmatpush1.msra.mxu0 %v566
  %671 = vmatprep.subr.mxu0 0.0
  %672 = vmatpush1.msra.mxu0 %v567
  %673 = vmatprep.subr.mxu0 0.0
  %674 = vmatpush1.msra.mxu0 0.0
  %675 = vmatprep.subr.mxu0 0.0
  %676 = vmatpush1.msra.mxu0 0.0
  %677 = vmatprep.subr.mxu0 0.0
  %678 = vmatpush1.msra.mxu0 0.0
  %679 = vmatprep.subr.mxu0 0.0
  %680 = vmatpush1.msra.mxu0 0.0
  %681 = vmatprep.subr.mxu0 0.0
  %682 = vmatpush1.msra.mxu0 0.0
  %683 = vmatprep.subr.mxu0 0.0
  %684 = vmatpush1.msra.mxu0 0.0
  %685 = vmatprep.subr.mxu0 0.0
  %686 = vmatpush1.msra.mxu0 0.0
  %687 = vmatprep.subr.mxu0 0.0
  %688 = vmatpush1.msra.mxu0 0.0
  %689 = vmatprep.subr.mxu0 0.0
  %690 = vmatpush1.msra.mxu0 0.0
  %691 = vmatprep.subr.mxu0 0.0
  %692 = vmatpush1.msra.mxu0 0.0
  %693 = vmatprep.subr.mxu0 0.0
  %694 = vmatpush1.msra.mxu0 0.0
  %695 = vmatprep.subr.mxu0 0.0
  %696 = vmatpush1.msra.mxu0 0.0
  %697 = vmatprep.subr.mxu0 0.0
  %698 = vmatpush1.msra.mxu0 0.0
  %699 = vmatprep.subr.mxu0 0.0
  %700 = vmatpush1.msra.mxu0 0.0
  %701 = vmatprep.subr.mxu0 0.0
  %702 = vmatpush1.msra.mxu0 0.0
  %703 = vmatprep.subr.mxu0 0.0
  %704 = vmatpush1.msra.mxu0 0.0
  %705 = vmatprep.subr.mxu0 0.0
  %706 = vmatpush1.msra.mxu0 0.0
  %707 = vmatprep.subr.mxu0 0.0
  %708 = vmatpush1.msra.mxu0 0.0
  %709 = vmatprep.subr.mxu0 0.0
  %710 = vmatpush1.msra.mxu0 0.0
  %711 = vmatprep.subr.mxu0 0.0
  %712 = vmatpush1.msra.mxu0 0.0
  %713 = vmatprep.subr.mxu0 0.0
  %714 = vmatpush1.msra.mxu0 0.0
  %715 = vmatprep.subr.mxu0 0.0
  %716 = vmatpush1.msra.mxu0 0.0
  %717 = vmatprep.subr.mxu0 0.0
  %718 = vmatpush1.msra.mxu0 0.0
  %719 = vmatprep.subr.mxu0 0.0
  %720 = vmatpush1.msra.mxu0 0.0
  %721 = vmatprep.subr.mxu0 0.0
  %722 = vmatpush1.msra.mxu0 0.0
  %723 = vmatprep.subr.mxu0 0.0
  %724 = vmatpush1.msra.mxu0 0.0
  %725 = vmatprep.subr.mxu0 0.0
  %726 = vmatpush1.msra.mxu0 0.0
  %727 = vmatprep.subr.mxu0 0.0
  %728 = vmatpush1.msra.mxu0 0.0
  %729 = vmatprep.mubr.f32.mxu0 0.0
  %730 = vmatmul.mubr.f32.gmra.mrb[0].mxu0 %v570
  %v731 = vpop.f32.mrb[0].mxu0
  %v732 = vadd.f32 0.0, %v731
  %v733 = vpop.f32.mrb[0].mxu0
  %734 = vmatprep.mubr.f32.mxu0 0.0
  %735 = vmatmul.mubr.f32.gmra.mrb[0].mxu0 %v573
  %v736 = vpop.f32.mrb[0].mxu0
  %v737 = vadd.f32 0.0, %v736
  %v738 = vpop.f32.mrb[0].mxu0
  %739 = vmatprep.mubr.f32.mxu0 0.0
  %740 = vmatmul.mubr.f32.gmra.mrb[0].mxu0 %v576
  %v741 = vpop.f32.mrb[0].mxu0
  %v742 = vadd.f32 0.0, %v741
  %v743 = vpop.f32.mrb[0].mxu0
  %744 = vmatprep.mubr.f32.mxu0 0.0
  %745 = vmatmul.mubr.f32.gmra.mrb[0].mxu0 %v579
  %v746 = vpop.f32.mrb[0].mxu0
  %v747 = vadd.f32 0.0, %v746
  %v748 = vpop.f32.mrb[0].mxu0
  %749 = vmatprep.mubr.f32.mxu0 0.0
  %750 = vmatmul.mubr.f32.gmra.mrb[0].mxu0 %v582
  %v751 = vpop.f32.mrb[0].mxu0
  %v752 = vadd.f32 0.0, %v751
  %v753 = vpop.f32.mrb[0].mxu0
  %754 = vmatprep.mubr.f32.mxu0 0.0
  %755 = vmatmul.mubr.f32.gmra.mrb[0].mxu0 %v585
  %v756 = vpop.f32.mrb[0].mxu0
  %v757 = vadd.f32 0.0, %v756
  %v758 = vpop.f32.mrb[0].mxu0
  %759 = vmatprep.mubr.f32.mxu0 0.0
  %760 = vmatmul.mubr.f32.gmra.mrb[0].mxu0 %v588
  %v761 = vpop.f32.mrb[0].mxu0
  %v762 = vadd.f32 0.0, %v761
  %v763 = vpop.f32.mrb[0].mxu0
  %764 = vmatprep.mubr.f32.mxu0 0.0
  %765 = vmatmul.mubr.f32.gmra.mrb[0].mxu0 %v591
  %v766 = vpop.f32.mrb[0].mxu0
  %v767 = vadd.f32 0.0, %v766
  %v768 = vpop.f32.mrb[0].mxu0
  %769 = vmatprep.mubr.f32.mxu0 0.0
  %770 = vmatmul.mubr.f32.gmra.mrb[0].mxu0 %v594
  %v771 = vpop.f32.mrb[0].mxu0
  %v772 = vadd.f32 0.0, %v771
  %v773 = vpop.f32.mrb[0].mxu0
  %774 = vmatprep.mubr.f32.mxu0 0.0
  %775 = vmatmul.mubr.f32.gmra.mrb[0].mxu0 %v597
  %v776 = vpop.f32.mrb[0].mxu0
  %v777 = vadd.f32 0.0, %v776
  %v778 = vpop.f32.mrb[0].mxu0
  %779 = vmatprep.mubr.f32.mxu0 0.0
  %780 = vmatmul.mubr.f32.gmra.mrb[0].mxu0 %v600
  %v781 = vpop.f32.mrb[0].mxu0
  %v782 = vadd.f32 0.0, %v781
  %v783 = vpop.f32.mrb[0].mxu0
  %784 = vmatprep.mubr.f32.mxu0 0.0
  %785 = vmatmul.mubr.f32.gmra.mrb[0].mxu0 %v603
  %v786 = vpop.f32.mrb[0].mxu0
  %v787 = vadd.f32 0.0, %v786
  %v788 = vpop.f32.mrb[0].mxu0
  %789 = vmatprep.mubr.f32.mxu0 0.0
  %790 = vmatmul.mubr.f32.gmra.mrb[0].mxu0 %v606
  %v791 = vpop.f32.mrb[0].mxu0
  %v792 = vadd.f32 0.0, %v791
  %v793 = vpop.f32.mrb[0].mxu0
  %794 = vmatprep.mubr.f32.mxu0 0.0
  %795 = vmatmul.mubr.f32.gmra.mrb[0].mxu0 %v609
  %v796 = vpop.f32.mrb[0].mxu0
  %v797 = vadd.f32 0.0, %v796
  %v798 = vpop.f32.mrb[0].mxu0
  %799 = vmatprep.mubr.f32.mxu0 0.0
  %800 = vmatmul.mubr.f32.gmra.mrb[0].mxu0 %v612
  %v801 = vpop.f32.mrb[0].mxu0
  %v802 = vadd.f32 0.0, %v801
  %v803 = vpop.f32.mrb[0].mxu0
  %804 = vmatprep.mubr.f32.mxu0 0.0
  %805 = vmatmul.mubr.f32.gmra.mrb[0].mxu0 %v615
  %v806 = vpop.f32.mrb[0].mxu0
  %v807 = vadd.f32 0.0, %v806
  %v808 = vpop.f32.mrb[0].mxu0
  %809 = vmatprep.mubr.f32.mxu0 0.0
  %810 = vmatmul.mubr.f32.gmra.mrb[0].mxu0 %v618
  %v811 = vpop.f32.mrb[0].mxu0
  %v812 = vadd.f32 0.0, %v811
  %v813 = vpop.f32.mrb[0].mxu0
  %814 = vmatprep.mubr.f32.mxu0 0.0
  %815 = vmatmul.mubr.f32.gmra.mrb[0].mxu0 %v621
  %v816 = vpop.f32.mrb[0].mxu0
  %v817 = vadd.f32 0.0, %v816
  %v818 = vpop.f32.mrb[0].mxu0
  %819 = vmatprep.mubr.f32.mxu0 0.0
  %820 = vmatmul.mubr.f32.gmra.mrb[0].mxu0 %v624
  %v821 = vpop.f32.mrb[0].mxu0
  %v822 = vadd.f32 0.0, %v821
  %v823 = vpop.f32.mrb[0].mxu0
  %824 = vmatprep.mubr.f32.mxu0 0.0
  %825 = vmatmul.mubr.f32.gmra.mrb[0].mxu0 %v627
  %v826 = vpop.f32.mrb[0].mxu0
  %v827 = vadd.f32 0.0, %v826
  %v828 = vpop.f32.mrb[0].mxu0
  %829 = vmatprep.mubr.f32.mxu0 0.0
  %830 = vmatmul.mubr.f32.gmra.mrb[0].mxu0 %v630
  %v831 = vpop.f32.mrb[0].mxu0
  %v832 = vadd.f32 0.0, %v831
  %v833 = vpop.f32.mrb[0].mxu0
  %834 = vmatprep.mubr.f32.mxu0 0.0
  %835 = vmatmul.mubr.f32.gmra.mrb[0].mxu0 %v633
  %v836 = vpop.f32.mrb[0].mxu0
  %v837 = vadd.f32 0.0, %v836
  %v838 = vpop.f32.mrb[0].mxu0
  %839 = vmatprep.mubr.f32.mxu0 0.0
  %840 = vmatmul.mubr.f32.gmra.mrb[0].mxu0 %v636
  %v841 = vpop.f32.mrb[0].mxu0
  %v842 = vadd.f32 0.0, %v841
  %v843 = vpop.f32.mrb[0].mxu0
  %844 = vmatprep.mubr.f32.mxu0 0.0
  %845 = vmatmul.mubr.f32.gmra.mrb[0].mxu0 %v639
  %v846 = vpop.f32.mrb[0].mxu0
  %v847 = vadd.f32 0.0, %v846
  %v848 = vpop.f32.mrb[0].mxu0
  %849 = vmatprep.mubr.f32.mxu0 0.0
  %850 = vmatmul.mubr.f32.gmra.mrb[0].mxu0 %v642
  %v851 = vpop.f32.mrb[0].mxu0
  %v852 = vadd.f32 0.0, %v851
  %v853 = vpop.f32.mrb[0].mxu0
  %854 = vmatprep.mubr.f32.mxu0 0.0
  %855 = vmatmul.mubr.f32.gmra.mrb[0].mxu0 %v645
  %v856 = vpop.f32.mrb[0].mxu0
  %v857 = vadd.f32 0.0, %v856
  %v858 = vpop.f32.mrb[0].mxu0
  %859 = vmatprep.mubr.f32.mxu0 0.0
  %860 = vmatmul.mubr.f32.gmra.mrb[0].mxu0 %v648
  %v861 = vpop.f32.mrb[0].mxu0
  %v862 = vadd.f32 0.0, %v861
  %v863 = vpop.f32.mrb[0].mxu0
  %864 = vmatprep.mubr.f32.mxu0 0.0
  %865 = vmatmul.mubr.f32.gmra.mrb[0].mxu0 %v651
  %v866 = vpop.f32.mrb[0].mxu0
  %v867 = vadd.f32 0.0, %v866
  %v868 = vpop.f32.mrb[0].mxu0
  %869 = vmatprep.mubr.f32.mxu0 0.0
  %870 = vmatmul.mubr.f32.gmra.mrb[0].mxu0 %v654
  %v871 = vpop.f32.mrb[0].mxu0
  %v872 = vadd.f32 0.0, %v871
  %v873 = vpop.f32.mrb[0].mxu0
  %874 = vmatprep.mubr.f32.mxu0 0.0
  %875 = vmatmul.mubr.f32.gmra.mrb[0].mxu0 %v657
  %v876 = vpop.f32.mrb[0].mxu0
  %v877 = vadd.f32 0.0, %v876
  %v878 = vpop.f32.mrb[0].mxu0
  %879 = vmatprep.mubr.f32.mxu0 0.0
  %880 = vmatmul.mubr.f32.gmra.mrb[0].mxu0 %v660
  %v881 = vpop.f32.mrb[0].mxu0
  %v882 = vadd.f32 0.0, %v881
  %v883 = vpop.f32.mrb[0].mxu0
  %884 = vmatprep.mubr.f32.mxu0 0.0
  %885 = vmatmul.mubr.f32.gmra.mrb[0].mxu0 %v663
  %v886 = vpop.f32.mrb[0].mxu0
  %v887 = vadd.f32 0.0, %v886
  %v888 = vpop.f32.mrb[0].mxu0
  %889 = vdwg.mxu0
  %v890 = vadd.f32 %v500, %v732
  %v891 = vadd.f32 %v501, %v737
  %v892 = vadd.f32 %v502, %v742
  %v893 = vadd.f32 %v503, %v747
  %v894 = vadd.f32 %v504, %v752
  %v895 = vadd.f32 %v505, %v757
  %v896 = vadd.f32 %v506, %v762
  %v897 = vadd.f32 %v507, %v767
  %v898 = vadd.f32 %v508, %v772
  %v899 = vadd.f32 %v509, %v777
  %v900 = vadd.f32 %v510, %v782
  %v901 = vadd.f32 %v511, %v787
  %v902 = vadd.f32 %v512, %v792
  %v903 = vadd.f32 %v513, %v797
  %v904 = vadd.f32 %v514, %v802
  %v905 = vadd.f32 %v515, %v807
  %v906 = vadd.f32 %v516, %v812
  %v907 = vadd.f32 %v517, %v817
  %v908 = vadd.f32 %v518, %v822
  %v909 = vadd.f32 %v519, %v827
  %v910 = vadd.f32 %v520, %v832
  %v911 = vadd.f32 %v521, %v837
  %v912 = vadd.f32 %v522, %v842
  %v913 = vadd.f32 %v523, %v847
  %v914 = vadd.f32 %v524, %v852
  %v915 = vadd.f32 %v525, %v857
  %v916 = vadd.f32 %v526, %v862
  %v917 = vadd.f32 %v527, %v867
  %v918 = vadd.f32 %v528, %v872
  %v919 = vadd.f32 %v529, %v877
  %v920 = vadd.f32 %v530, %v882
  %v921 = vadd.f32 %v531, %v887
  %v922 = vld [vmem:[%s3] sm:$0xff]
  %v923 = vld [vmem:[%s3 + $0x8] sm:$0xff]
  %v924 = vld [vmem:[%s3 + $0x10] sm:$0xff]
  %v925 = vld [vmem:[%s3 + $0x18] sm:$0xff]
  %v926 = vld [vmem:[%s3 + $0x20] sm:$0xff]
  %v927 = vld [vmem:[%s3 + $0x28] sm:$0xff]
  %v928 = vld [vmem:[%s3 + $0x30] sm:$0xff]
  %v929 = vld [vmem:[%s3 + $0x38] sm:$0xff]
  %v930 = vld [vmem:[%s3 + $0x40] sm:$0xff]
  %v931 = vld [vmem:[%s3 + $0x48] sm:$0xff]
  %v932 = vld [vmem:[%s3 + $0x50] sm:$0xff]
  %v933 = vld [vmem:[%s3 + $0x58] sm:$0xff]
  %v934 = vld [vmem:[%s3 + $0x60] sm:$0xff]
  %v935 = vld [vmem:[%s3 + $0x68] sm:$0xff]
  %v936 = vld [vmem:[%s3 + $0x70] sm:$0xff]
  %v937 = vld [vmem:[%s3 + $0x78] sm:$0xff]
  %v938 = vld [vmem:[%s3 + $0x80] sm:$0xff]
  %v939 = vld [vmem:[%s3 + $0x88] sm:$0xff]
  %v940 = vld [vmem:[%s3 + $0x90] sm:$0xff]
  %v941 = vld [vmem:[%s3 + $0x98] sm:$0xff]
  %v942 = vld [vmem:[%s3 + $0xa0] sm:$0xff]
  %v943 = vld [vmem:[%s3 + $0xa8] sm:$0xff]
  %v944 = vld [vmem:[%s3 + $0xb0] sm:$0xff]
  %v945 = vld [vmem:[%s3 + $0xb8] sm:$0xff]
  %v946 = vld [vmem:[%s3 + $0xc0] sm:$0xff]
  %v947 = vld [vmem:[%s3 + $0xc8] sm:$0xff]
  %v948 = vld [vmem:[%s3 + $0xd0] sm:$0xff]
  %v949 = vld [vmem:[%s3 + $0xd8] sm:$0xff]
  %v950 = vld [vmem:[%s3 + $0xe0] sm:$0xff]
  %v951 = vld [vmem:[%s3 + $0xe8] sm:$0xff]
  %v952 = vld [vmem:[%s3 + $0xf0] sm:$0xff]
  %v953 = vld [vmem:[%s3 + $0xf8] sm:$0xff]
  %v954 = vld [vmem:[%s7] sm:$0xff]
  %v955 = vld [vmem:[%s7 + $0x8] sm:$0xff]
  %v956 = vld [vmem:[%s7 + $0x10] sm:$0xff]
  %v957 = vld [vmem:[%s7 + $0x18] sm:$0xff]
  %v959 = vsel %vm568, %v922, 0
  %v962 = vsel %vm568, %v923, 0
  %v965 = vsel %vm568, %v924, 0
  %v968 = vsel %vm568, %v925, 0
  %v971 = vsel %vm568, %v926, 0
  %v974 = vsel %vm568, %v927, 0
  %v977 = vsel %vm568, %v928, 0
  %v980 = vsel %vm568, %v929, 0
  %v983 = vsel %vm568, %v930, 0
  %v986 = vsel %vm568, %v931, 0
  %v989 = vsel %vm568, %v932, 0
  %v992 = vsel %vm568, %v933, 0
  %v995 = vsel %vm568, %v934, 0
  %v998 = vsel %vm568, %v935, 0
  %v1001 = vsel %vm568, %v936, 0
  %v1004 = vsel %vm568, %v937, 0
  %v1007 = vsel %vm568, %v938, 0
  %v1010 = vsel %vm568, %v939, 0
  %v1013 = vsel %vm568, %v940, 0
  %v1016 = vsel %vm568, %v941, 0
  %v1019 = vsel %vm568, %v942, 0
  %v1022 = vsel %vm568, %v943, 0
  %v1025 = vsel %vm568, %v944, 0
  %v1028 = vsel %vm568, %v945, 0
  %v1031 = vsel %vm568, %v946, 0
  %v1034 = vsel %vm568, %v947, 0
  %v1037 = vsel %vm568, %v948, 0
  %v1040 = vsel %vm568, %v949, 0
  %v1043 = vsel %vm568, %v950, 0
  %v1046 = vsel %vm568, %v951, 0
  %v1049 = vsel %vm568, %v952, 0
  %v1052 = vsel %vm568, %v953, 0
  %1054 = vmatprep.subr.mxu0 0.0
  %1055 = vmatpush1.msra.mxu0 %v954
  %1056 = vmatprep.subr.mxu0 0.0
  %1057 = vmatpush1.msra.mxu0 %v955
  %1058 = vmatprep.subr.mxu0 0.0
  %1059 = vmatpush1.msra.mxu0 %v956
  %1060 = vmatprep.subr.mxu0 0.0
  %1061 = vmatpush1.msra.mxu0 %v957
  %1062 = vmatprep.subr.mxu0 0.0
  %1063 = vmatpush1.msra.mxu0 0.0
  %1064 = vmatprep.subr.mxu0 0.0
  %1065 = vmatpush1.msra.mxu0 0.0
  %1066 = vmatprep.subr.mxu0 0.0
  %1067 = vmatpush1.msra.mxu0 0.0
  %1068 = vmatprep.subr.mxu0 0.0
  %1069 = vmatpush1.msra.mxu0 0.0
  %1070 = vmatprep.subr.mxu0 0.0
  %1071 = vmatpush1.msra.mxu0 0.0
  %1072 = vmatprep.subr.mxu0 0.0
  %1073 = vmatpush1.msra.mxu0 0.0
  %1074 = vmatprep.subr.mxu0 0.0
  %1075 = vmatpush1.msra.mxu0 0.0
  %1076 = vmatprep.subr.mxu0 0.0
  %1077 = vmatpush1.msra.mxu0 0.0
  %1078 = vmatprep.subr.mxu0 0.0
  %1079 = vmatpush1.msra.mxu0 0.0
  %1080 = vmatprep.subr.mxu0 0.0
  %1081 = vmatpush1.msra.mxu0 0.0
  %1082 = vmatprep.subr.mxu0 0.0
  %1083 = vmatpush1.msra.mxu0 0.0
  %1084 = vmatprep.subr.mxu0 0.0
  %1085 = vmatpush1.msra.mxu0 0.0
  %1086 = vmatprep.subr.mxu0 0.0
  %1087 = vmatpush1.msra.mxu0 0.0
  %1088 = vmatprep.subr.mxu0 0.0
  %1089 = vmatpush1.msra.mxu0 0.0
  %1090 = vmatprep.subr.mxu0 0.0
  %1091 = vmatpush1.msra.mxu0 0.0
  %1092 = vmatprep.subr.mxu0 0.0
  %1093 = vmatpush1.msra.mxu0 0.0
  %1094 = vmatprep.subr.mxu0 0.0
  %1095 = vmatpush1.msra.mxu0 0.0
  %1096 = vmatprep.subr.mxu0 0.0
  %1097 = vmatpush1.msra.mxu0 0.0
  %1098 = vmatprep.subr.mxu0 0.0
  %1099 = vmatpush1.msra.mxu0 0.0
  %1100 = vmatprep.subr.mxu0 0.0
  %1101 = vmatpush1.msra.mxu0 0.0
  %1102 = vmatprep.subr.mxu0 0.0
  %1103 = vmatpush1.msra.mxu0 0.0
  %1104 = vmatprep.subr.mxu0 0.0
  %1105 = vmatpush1.msra.mxu0 0.0
  %1106 = vmatprep.subr.mxu0 0.0
  %1107 = vmatpush1.msra.mxu0 0.0
  %1108 = vmatprep.subr.mxu0 0.0
  %1109 = vmatpush1.msra.mxu0 0.0
  %1110 = vmatprep.subr.mxu0 0.0
  %1111 = vmatpush1.msra.mxu0 0.0
  %1112 = vmatprep.subr.mxu0 0.0
  %1113 = vmatpush1.msra.mxu0 0.0
  %1114 = vmatprep.subr.mxu0 0.0
  %1115 = vmatpush1.msra.mxu0 0.0
  %1116 = vmatprep.subr.mxu0 0.0
  %1117 = vmatpush1.msra.mxu0 0.0
  %1118 = vmatprep.mubr.f32.mxu0 0.0
  %1119 = vmatmul.mubr.f32.gmra.mrb[0].mxu0 %v959
  %v1120 = vpop.f32.mrb[0].mxu0
  %v1121 = vadd.f32 0.0, %v1120
  %v1122 = vpop.f32.mrb[0].mxu0
  %1123 = vmatprep.mubr.f32.mxu0 0.0
  %1124 = vmatmul.mubr.f32.gmra.mrb[0].mxu0 %v962
  %v1125 = vpop.f32.mrb[0].mxu0
  %v1126 = vadd.f32 0.0, %v1125
  %v1127 = vpop.f32.mrb[0].mxu0
  %1128 = vmatprep.mubr.f32.mxu0 0.0
  %1129 = vmatmul.mubr.f32.gmra.mrb[0].mxu0 %v965
  %v1130 = vpop.f32.mrb[0].mxu0
  %v1131 = vadd.f32 0.0, %v1130
  %v1132 = vpop.f32.mrb[0].mxu0
  %1133 = vmatprep.mubr.f32.mxu0 0.0
  %1134 = vmatmul.mubr.f32.gmra.mrb[0].mxu0 %v968
  %v1135 = vpop.f32.mrb[0].mxu0
  %v1136 = vadd.f32 0.0, %v1135
  %v1137 = vpop.f32.mrb[0].mxu0
  %1138 = vmatprep.mubr.f32.mxu0 0.0
  %1139 = vmatmul.mubr.f32.gmra.mrb[0].mxu0 %v971
  %v1140 = vpop.f32.mrb[0].mxu0
  %v1141 = vadd.f32 0.0, %v1140
  %v1142 = vpop.f32.mrb[0].mxu0
  %1143 = vmatprep.mubr.f32.mxu0 0.0
  %1144 = vmatmul.mubr.f32.gmra.mrb[0].mxu0 %v974
  %v1145 = vpop.f32.mrb[0].mxu0
  %v1146 = vadd.f32 0.0, %v1145
  %v1147 = vpop.f32.mrb[0].mxu0
  %1148 = vmatprep.mubr.f32.mxu0 0.0
  %1149 = vmatmul.mubr.f32.gmra.mrb[0].mxu0 %v977
  %v1150 = vpop.f32.mrb[0].mxu0
  %v1151 = vadd.f32 0.0, %v1150
  %v1152 = vpop.f32.mrb[0].mxu0
  %1153 = vmatprep.mubr.f32.mxu0 0.0
  %1154 = vmatmul.mubr.f32.gmra.mrb[0].mxu0 %v980
  %v1155 = vpop.f32.mrb[0].mxu0
  %v1156 = vadd.f32 0.0, %v1155
  %v1157 = vpop.f32.mrb[0].mxu0
  %1158 = vmatprep.mubr.f32.mxu0 0.0
  %1159 = vmatmul.mubr.f32.gmra.mrb[0].mxu0 %v983
  %v1160 = vpop.f32.mrb[0].mxu0
  %v1161 = vadd.f32 0.0, %v1160
  %v1162 = vpop.f32.mrb[0].mxu0
  %1163 = vmatprep.mubr.f32.mxu0 0.0
  %1164 = vmatmul.mubr.f32.gmra.mrb[0].mxu0 %v986
  %v1165 = vpop.f32.mrb[0].mxu0
  %v1166 = vadd.f32 0.0, %v1165
  %v1167 = vpop.f32.mrb[0].mxu0
  %1168 = vmatprep.mubr.f32.mxu0 0.0
  %1169 = vmatmul.mubr.f32.gmra.mrb[0].mxu0 %v989
  %v1170 = vpop.f32.mrb[0].mxu0
  %v1171 = vadd.f32 0.0, %v1170
  %v1172 = vpop.f32.mrb[0].mxu0
  %1173 = vmatprep.mubr.f32.mxu0 0.0
  %1174 = vmatmul.mubr.f32.gmra.mrb[0].mxu0 %v992
  %v1175 = vpop.f32.mrb[0].mxu0
  %v1176 = vadd.f32 0.0, %v1175
  %v1177 = vpop.f32.mrb[0].mxu0
  %1178 = vmatprep.mubr.f32.mxu0 0.0
  %1179 = vmatmul.mubr.f32.gmra.mrb[0].mxu0 %v995
  %v1180 = vpop.f32.mrb[0].mxu0
  %v1181 = vadd.f32 0.0, %v1180
  %v1182 = vpop.f32.mrb[0].mxu0
  %1183 = vmatprep.mubr.f32.mxu0 0.0
  %1184 = vmatmul.mubr.f32.gmra.mrb[0].mxu0 %v998
  %v1185 = vpop.f32.mrb[0].mxu0
  %v1186 = vadd.f32 0.0, %v1185
  %v1187 = vpop.f32.mrb[0].mxu0
  %1188 = vmatprep.mubr.f32.mxu0 0.0
  %1189 = vmatmul.mubr.f32.gmra.mrb[0].mxu0 %v1001
  %v1190 = vpop.f32.mrb[0].mxu0
  %v1191 = vadd.f32 0.0, %v1190
  %v1192 = vpop.f32.mrb[0].mxu0
  %1193 = vmatprep.mubr.f32.mxu0 0.0
  %1194 = vmatmul.mubr.f32.gmra.mrb[0].mxu0 %v1004
  %v1195 = vpop.f32.mrb[0].mxu0
  %v1196 = vadd.f32 0.0, %v1195
  %v1197 = vpop.f32.mrb[0].mxu0
  %1198 = vmatprep.mubr.f32.mxu0 0.0
  %1199 = vmatmul.mubr.f32.gmra.mrb[0].mxu0 %v1007
  %v1200 = vpop.f32.mrb[0].mxu0
  %v1201 = vadd.f32 0.0, %v1200
  %v1202 = vpop.f32.mrb[0].mxu0
  %1203 = vmatprep.mubr.f32.mxu0 0.0
  %1204 = vmatmul.mubr.f32.gmra.mrb[0].mxu0 %v1010
  %v1205 = vpop.f32.mrb[0].mxu0
  %v1206 = vadd.f32 0.0, %v1205
  %v1207 = vpop.f32.mrb[0].mxu0
  %1208 = vmatprep.mubr.f32.mxu0 0.0
  %1209 = vmatmul.mubr.f32.gmra.mrb[0].mxu0 %v1013
  %v1210 = vpop.f32.mrb[0].mxu0
  %v1211 = vadd.f32 0.0, %v1210
  %v1212 = vpop.f32.mrb[0].mxu0
  %1213 = vmatprep.mubr.f32.mxu0 0.0
  %1214 = vmatmul.mubr.f32.gmra.mrb[0].mxu0 %v1016
  %v1215 = vpop.f32.mrb[0].mxu0
  %v1216 = vadd.f32 0.0, %v1215
  %v1217 = vpop.f32.mrb[0].mxu0
  %1218 = vmatprep.mubr.f32.mxu0 0.0
  %1219 = vmatmul.mubr.f32.gmra.mrb[0].mxu0 %v1019
  %v1220 = vpop.f32.mrb[0].mxu0
  %v1221 = vadd.f32 0.0, %v1220
  %v1222 = vpop.f32.mrb[0].mxu0
  %1223 = vmatprep.mubr.f32.mxu0 0.0
  %1224 = vmatmul.mubr.f32.gmra.mrb[0].mxu0 %v1022
  %v1225 = vpop.f32.mrb[0].mxu0
  %v1226 = vadd.f32 0.0, %v1225
  %v1227 = vpop.f32.mrb[0].mxu0
  %1228 = vmatprep.mubr.f32.mxu0 0.0
  %1229 = vmatmul.mubr.f32.gmra.mrb[0].mxu0 %v1025
  %v1230 = vpop.f32.mrb[0].mxu0
  %v1231 = vadd.f32 0.0, %v1230
  %v1232 = vpop.f32.mrb[0].mxu0
  %1233 = vmatprep.mubr.f32.mxu0 0.0
  %1234 = vmatmul.mubr.f32.gmra.mrb[0].mxu0 %v1028
  %v1235 = vpop.f32.mrb[0].mxu0
  %v1236 = vadd.f32 0.0, %v1235
  %v1237 = vpop.f32.mrb[0].mxu0
  %1238 = vmatprep.mubr.f32.mxu0 0.0
  %1239 = vmatmul.mubr.f32.gmra.mrb[0].mxu0 %v1031
  %v1240 = vpop.f32.mrb[0].mxu0
  %v1241 = vadd.f32 0.0, %v1240
  %v1242 = vpop.f32.mrb[0].mxu0
  %1243 = vmatprep.mubr.f32.mxu0 0.0
  %1244 = vmatmul.mubr.f32.gmra.mrb[0].mxu0 %v1034
  %v1245 = vpop.f32.mrb[0].mxu0
  %v1246 = vadd.f32 0.0, %v1245
  %v1247 = vpop.f32.mrb[0].mxu0
  %1248 = vmatprep.mubr.f32.mxu0 0.0
  %1249 = vmatmul.mubr.f32.gmra.mrb[0].mxu0 %v1037
  %v1250 = vpop.f32.mrb[0].mxu0
  %v1251 = vadd.f32 0.0, %v1250
  %v1252 = vpop.f32.mrb[0].mxu0
  %1253 = vmatprep.mubr.f32.mxu0 0.0
  %1254 = vmatmul.mubr.f32.gmra.mrb[0].mxu0 %v1040
  %v1255 = vpop.f32.mrb[0].mxu0
  %v1256 = vadd.f32 0.0, %v1255
  %v1257 = vpop.f32.mrb[0].mxu0
  %1258 = vmatprep.mubr.f32.mxu0 0.0
  %1259 = vmatmul.mubr.f32.gmra.mrb[0].mxu0 %v1043
  %v1260 = vpop.f32.mrb[0].mxu0
  %v1261 = vadd.f32 0.0, %v1260
  %v1262 = vpop.f32.mrb[0].mxu0
  %1263 = vmatprep.mubr.f32.mxu0 0.0
  %1264 = vmatmul.mubr.f32.gmra.mrb[0].mxu0 %v1046
  %v1265 = vpop.f32.mrb[0].mxu0
  %v1266 = vadd.f32 0.0, %v1265
  %v1267 = vpop.f32.mrb[0].mxu0
  %1268 = vmatprep.mubr.f32.mxu0 0.0
  %1269 = vmatmul.mubr.f32.gmra.mrb[0].mxu0 %v1049
  %v1270 = vpop.f32.mrb[0].mxu0
  %v1271 = vadd.f32 0.0, %v1270
  %v1272 = vpop.f32.mrb[0].mxu0
  %1273 = vmatprep.mubr.f32.mxu0 0.0
  %1274 = vmatmul.mubr.f32.gmra.mrb[0].mxu0 %v1052
  %v1275 = vpop.f32.mrb[0].mxu0
  %v1276 = vadd.f32 0.0, %v1275
  %v1277 = vpop.f32.mrb[0].mxu0
  %1278 = vdwg.mxu0
  %v1279 = vadd.f32 %v890, %v1121
  %v1280 = vadd.f32 %v891, %v1126
  %v1281 = vadd.f32 %v892, %v1131
  %v1282 = vadd.f32 %v893, %v1136
  %v1283 = vadd.f32 %v894, %v1141
  %v1284 = vadd.f32 %v895, %v1146
  %v1285 = vadd.f32 %v896, %v1151
  %v1286 = vadd.f32 %v897, %v1156
  %v1287 = vadd.f32 %v898, %v1161
  %v1288 = vadd.f32 %v899, %v1166
  %v1289 = vadd.f32 %v900, %v1171
  %v1290 = vadd.f32 %v901, %v1176
  %v1291 = vadd.f32 %v902, %v1181
  %v1292 = vadd.f32 %v903, %v1186
  %v1293 = vadd.f32 %v904, %v1191
  %v1294 = vadd.f32 %v905, %v1196
  %v1295 = vadd.f32 %v906, %v1201
  %v1296 = vadd.f32 %v907, %v1206
  %v1297 = vadd.f32 %v908, %v1211
  %v1298 = vadd.f32 %v909, %v1216
  %v1299 = vadd.f32 %v910, %v1221
  %v1300 = vadd.f32 %v911, %v1226
  %v1301 = vadd.f32 %v912, %v1231
  %v1302 = vadd.f32 %v913, %v1236
  %v1303 = vadd.f32 %v914, %v1241
  %v1304 = vadd.f32 %v915, %v1246
  %v1305 = vadd.f32 %v916, %v1251
  %v1306 = vadd.f32 %v917, %v1256
  %v1307 = vadd.f32 %v918, %v1261
  %v1308 = vadd.f32 %v919, %v1266
  %v1309 = vadd.f32 %v920, %v1271
  %v1310 = vadd.f32 %v921, %v1276
  %v1311 = vld [vmem:[%s8] sm:$0x1]
  %v1313 = vlaneseq
  %v1314 = vshrl.u32 %v1313, 7
  %v1315 = vsub.s32 0, %v1314
  %v1316 = vrot.slane %v1311, %v1315
  %v1318 = vadd.f32 %v1279, %v1316
  %v1319 = vadd.f32 %v1280, %v1316
  %v1320 = vadd.f32 %v1281, %v1316
  %v1321 = vadd.f32 %v1282, %v1316
  %v1322 = vadd.f32 %v1283, %v1316
  %v1323 = vadd.f32 %v1284, %v1316
  %v1324 = vadd.f32 %v1285, %v1316
  %v1325 = vadd.f32 %v1286, %v1316
  %v1326 = vadd.f32 %v1287, %v1316
  %v1327 = vadd.f32 %v1288, %v1316
  %v1328 = vadd.f32 %v1289, %v1316
  %v1329 = vadd.f32 %v1290, %v1316
  %v1330 = vadd.f32 %v1291, %v1316
  %v1331 = vadd.f32 %v1292, %v1316
  %v1332 = vadd.f32 %v1293, %v1316
  %v1333 = vadd.f32 %v1294, %v1316
  %v1334 = vadd.f32 %v1295, %v1316
  %v1335 = vadd.f32 %v1296, %v1316
  %v1336 = vadd.f32 %v1297, %v1316
  %v1337 = vadd.f32 %v1298, %v1316
  %v1338 = vadd.f32 %v1299, %v1316
  %v1339 = vadd.f32 %v1300, %v1316
  %v1340 = vadd.f32 %v1301, %v1316
  %v1341 = vadd.f32 %v1302, %v1316
  %v1342 = vadd.f32 %v1303, %v1316
  %v1343 = vadd.f32 %v1304, %v1316
  %v1344 = vadd.f32 %v1305, %v1316
  %v1345 = vadd.f32 %v1306, %v1316
  %v1346 = vadd.f32 %v1307, %v1316
  %v1347 = vadd.f32 %v1308, %v1316
  %v1348 = vadd.f32 %v1309, %v1316
  %v1349 = vadd.f32 %v1310, %v1316
  %v1350 = vld [vmem:[%s9] sm:$0xff]
  %v1351 = vld [vmem:[%s9 + $0x8] sm:$0xff]
  %v1352 = vld [vmem:[%s9 + $0x10] sm:$0xff]
  %v1353 = vld [vmem:[%s9 + $0x18] sm:$0xff]
  %v1354 = vld [vmem:[%s10] sm:$0x1]
  %v1356 = vlaneseq
  %v1357 = vshrl.u32 %v1356, 7
  %v1358 = vsub.s32 0, %v1357
  %v1359 = vrot.slane %v1354, %v1358
  %v1362 = vsel %vm568, %v1318, 0
  %v1365 = vsel %vm568, %v1319, 0
  %v1368 = vsel %vm568, %v1320, 0
  %v1371 = vsel %vm568, %v1321, 0
  %v1374 = vsel %vm568, %v1322, 0
  %v1377 = vsel %vm568, %v1323, 0
  %v1380 = vsel %vm568, %v1324, 0
  %v1383 = vsel %vm568, %v1325, 0
  %v1386 = vsel %vm568, %v1326, 0
  %v1389 = vsel %vm568, %v1327, 0
  %v1392 = vsel %vm568, %v1328, 0
  %v1395 = vsel %vm568, %v1329, 0
  %v1398 = vsel %vm568, %v1330, 0
  %v1401 = vsel %vm568, %v1331, 0
  %v1404 = vsel %vm568, %v1332, 0
  %v1407 = vsel %vm568, %v1333, 0
  %v1410 = vsel %vm568, %v1334, 0
  %v1413 = vsel %vm568, %v1335, 0
  %v1416 = vsel %vm568, %v1336, 0
  %v1419 = vsel %vm568, %v1337, 0
  %v1422 = vsel %vm568, %v1338, 0
  %v1425 = vsel %vm568, %v1339, 0
  %v1428 = vsel %vm568, %v1340, 0
  %v1431 = vsel %vm568, %v1341, 0
  %v1434 = vsel %vm568, %v1342, 0
  %v1437 = vsel %vm568, %v1343, 0
  %v1440 = vsel %vm568, %v1344, 0
  %v1443 = vsel %vm568, %v1345, 0
  %v1446 = vsel %vm568, %v1346, 0
  %v1449 = vsel %vm568, %v1347, 0
  %v1452 = vsel %vm568, %v1348, 0
  %v1455 = vsel %vm568, %v1349, 0
  %1457 = vmatprep.subr.mxu0 0.0
  %1458 = vmatpush1.msra.mxu0 %v1350
  %1459 = vmatprep.subr.mxu0 0.0
  %1460 = vmatpush1.msra.mxu0 %v1351
  %1461 = vmatprep.subr.mxu0 0.0
  %1462 = vmatpush1.msra.mxu0 %v1352
  %1463 = vmatprep.subr.mxu0 0.0
  %1464 = vmatpush1.msra.mxu0 %v1353
  %1465 = vmatprep.subr.mxu0 0.0
  %1466 = vmatpush1.msra.mxu0 0.0
  %1467 = vmatprep.subr.mxu0 0.0
  %1468 = vmatpush1.msra.mxu0 0.0
  %1469 = vmatprep.subr.mxu0 0.0
  %1470 = vmatpush1.msra.mxu0 0.0
  %1471 = vmatprep.subr.mxu0 0.0
  %1472 = vmatpush1.msra.mxu0 0.0
  %1473 = vmatprep.subr.mxu0 0.0
  %1474 = vmatpush1.msra.mxu0 0.0
  %1475 = vmatprep.subr.mxu0 0.0
  %1476 = vmatpush1.msra.mxu0 0.0
  %1477 = vmatprep.subr.mxu0 0.0
  %1478 = vmatpush1.msra.mxu0 0.0
  %1479 = vmatprep.subr.mxu0 0.0
  %1480 = vmatpush1.msra.mxu0 0.0
  %1481 = vmatprep.subr.mxu0 0.0
  %1482 = vmatpush1.msra.mxu0 0.0
  %1483 = vmatprep.subr.mxu0 0.0
  %1484 = vmatpush1.msra.mxu0 0.0
  %1485 = vmatprep.subr.mxu0 0.0
  %1486 = vmatpush1.msra.mxu0 0.0
  %1487 = vmatprep.subr.mxu0 0.0
  %1488 = vmatpush1.msra.mxu0 0.0
  %1489 = vmatprep.subr.mxu0 0.0
  %1490 = vmatpush1.msra.mxu0 0.0
  %1491 = vmatprep.subr.mxu0 0.0
  %1492 = vmatpush1.msra.mxu0 0.0
  %1493 = vmatprep.subr.mxu0 0.0
  %1494 = vmatpush1.msra.mxu0 0.0
  %1495 = vmatprep.subr.mxu0 0.0
  %1496 = vmatpush1.msra.mxu0 0.0
  %1497 = vmatprep.subr.mxu0 0.0
  %1498 = vmatpush1.msra.mxu0 0.0
  %1499 = vmatprep.subr.mxu0 0.0
  %1500 = vmatpush1.msra.mxu0 0.0
  %1501 = vmatprep.subr.mxu0 0.0
  %1502 = vmatpush1.msra.mxu0 0.0
  %1503 = vmatprep.subr.mxu0 0.0
  %1504 = vmatpush1.msra.mxu0 0.0
  %1505 = vmatprep.subr.mxu0 0.0
  %1506 = vmatpush1.msra.mxu0 0.0
  %1507 = vmatprep.subr.mxu0 0.0
  %1508 = vmatpush1.msra.mxu0 0.0
  %1509 = vmatprep.subr.mxu0 0.0
  %1510 = vmatpush1.msra.mxu0 0.0
  %1511 = vmatprep.subr.mxu0 0.0
  %1512 = vmatpush1.msra.mxu0 0.0
  %1513 = vmatprep.subr.mxu0 0.0
  %1514 = vmatpush1.msra.mxu0 0.0
  %1515 = vmatprep.subr.mxu0 0.0
  %1516 = vmatpush1.msra.mxu0 0.0
  %1517 = vmatprep.subr.mxu0 0.0
  %1518 = vmatpush1.msra.mxu0 0.0
  %1519 = vmatprep.subr.mxu0 0.0
  %1520 = vmatpush1.msra.mxu0 0.0
  %1521 = vmatprep.mubr.f32.mxu0 0.0
  %1522 = vmatmul.mubr.f32.gmra.mrb[0].mxu0 %v1362
  %v1523 = vpop.f32.mrb[0].mxu0
  %v1524 = vadd.f32 %v1359, %v1523
  %v1525 = vpop.f32.mrb[0].mxu0
  %1526 = vmatprep.mubr.f32.mxu0 0.0
  %1527 = vmatmul.mubr.f32.gmra.mrb[0].mxu0 %v1365
  %v1528 = vpop.f32.mrb[0].mxu0
  %v1529 = vadd.f32 %v1359, %v1528
  %v1530 = vpop.f32.mrb[0].mxu0
  %1531 = vmatprep.mubr.f32.mxu0 0.0
  %1532 = vmatmul.mubr.f32.gmra.mrb[0].mxu0 %v1368
  %v1533 = vpop.f32.mrb[0].mxu0
  %v1534 = vadd.f32 %v1359, %v1533
  %v1535 = vpop.f32.mrb[0].mxu0
  %1536 = vmatprep.mubr.f32.mxu0 0.0
  %1537 = vmatmul.mubr.f32.gmra.mrb[0].mxu0 %v1371
  %v1538 = vpop.f32.mrb[0].mxu0
  %v1539 = vadd.f32 %v1359, %v1538
  %v1540 = vpop.f32.mrb[0].mxu0
  %1541 = vmatprep.mubr.f32.mxu0 0.0
  %1542 = vmatmul.mubr.f32.gmra.mrb[0].mxu0 %v1374
  %v1543 = vpop.f32.mrb[0].mxu0
  %v1544 = vadd.f32 %v1359, %v1543
  %v1545 = vpop.f32.mrb[0].mxu0
  %1546 = vmatprep.mubr.f32.mxu0 0.0
  %1547 = vmatmul.mubr.f32.gmra.mrb[0].mxu0 %v1377
  %v1548 = vpop.f32.mrb[0].mxu0
  %v1549 = vadd.f32 %v1359, %v1548
  %v1550 = vpop.f32.mrb[0].mxu0
  %1551 = vmatprep.mubr.f32.mxu0 0.0
  %1552 = vmatmul.mubr.f32.gmra.mrb[0].mxu0 %v1380
  %v1553 = vpop.f32.mrb[0].mxu0
  %v1554 = vadd.f32 %v1359, %v1553
  %v1555 = vpop.f32.mrb[0].mxu0
  %1556 = vmatprep.mubr.f32.mxu0 0.0
  %1557 = vmatmul.mubr.f32.gmra.mrb[0].mxu0 %v1383
  %v1558 = vpop.f32.mrb[0].mxu0
  %v1559 = vadd.f32 %v1359, %v1558
  %v1560 = vpop.f32.mrb[0].mxu0
  %1561 = vmatprep.mubr.f32.mxu0 0.0
  %1562 = vmatmul.mubr.f32.gmra.mrb[0].mxu0 %v1386
  %v1563 = vpop.f32.mrb[0].mxu0
  %v1564 = vadd.f32 %v1359, %v1563
  %v1565 = vpop.f32.mrb[0].mxu0
  %1566 = vmatprep.mubr.f32.mxu0 0.0
  %1567 = vmatmul.mubr.f32.gmra.mrb[0].mxu0 %v1389
  %v1568 = vpop.f32.mrb[0].mxu0
  %v1569 = vadd.f32 %v1359, %v1568
  %v1570 = vpop.f32.mrb[0].mxu0
  %1571 = vmatprep.mubr.f32.mxu0 0.0
  %1572 = vmatmul.mubr.f32.gmra.mrb[0].mxu0 %v1392
  %v1573 = vpop.f32.mrb[0].mxu0
  %v1574 = vadd.f32 %v1359, %v1573
  %v1575 = vpop.f32.mrb[0].mxu0
  %1576 = vmatprep.mubr.f32.mxu0 0.0
  %1577 = vmatmul.mubr.f32.gmra.mrb[0].mxu0 %v1395
  %v1578 = vpop.f32.mrb[0].mxu0
  %v1579 = vadd.f32 %v1359, %v1578
  %v1580 = vpop.f32.mrb[0].mxu0
  %1581 = vmatprep.mubr.f32.mxu0 0.0
  %1582 = vmatmul.mubr.f32.gmra.mrb[0].mxu0 %v1398
  %v1583 = vpop.f32.mrb[0].mxu0
  %v1584 = vadd.f32 %v1359, %v1583
  %v1585 = vpop.f32.mrb[0].mxu0
  %1586 = vmatprep.mubr.f32.mxu0 0.0
  %1587 = vmatmul.mubr.f32.gmra.mrb[0].mxu0 %v1401
  %v1588 = vpop.f32.mrb[0].mxu0
  %v1589 = vadd.f32 %v1359, %v1588
  %v1590 = vpop.f32.mrb[0].mxu0
  %1591 = vmatprep.mubr.f32.mxu0 0.0
  %1592 = vmatmul.mubr.f32.gmra.mrb[0].mxu0 %v1404
  %v1593 = vpop.f32.mrb[0].mxu0
  %v1594 = vadd.f32 %v1359, %v1593
  %v1595 = vpop.f32.mrb[0].mxu0
  %1596 = vmatprep.mubr.f32.mxu0 0.0
  %1597 = vmatmul.mubr.f32.gmra.mrb[0].mxu0 %v1407
  %v1598 = vpop.f32.mrb[0].mxu0
  %v1599 = vadd.f32 %v1359, %v1598
  %v1600 = vpop.f32.mrb[0].mxu0
  %1601 = vmatprep.mubr.f32.mxu0 0.0
  %1602 = vmatmul.mubr.f32.gmra.mrb[0].mxu0 %v1410
  %v1603 = vpop.f32.mrb[0].mxu0
  %v1604 = vadd.f32 %v1359, %v1603
  %v1605 = vpop.f32.mrb[0].mxu0
  %1606 = vmatprep.mubr.f32.mxu0 0.0
  %1607 = vmatmul.mubr.f32.gmra.mrb[0].mxu0 %v1413
  %v1608 = vpop.f32.mrb[0].mxu0
  %v1609 = vadd.f32 %v1359, %v1608
  %v1610 = vpop.f32.mrb[0].mxu0
  %1611 = vmatprep.mubr.f32.mxu0 0.0
  %1612 = vmatmul.mubr.f32.gmra.mrb[0].mxu0 %v1416
  %v1613 = vpop.f32.mrb[0].mxu0
  %v1614 = vadd.f32 %v1359, %v1613
  %v1615 = vpop.f32.mrb[0].mxu0
  %1616 = vmatprep.mubr.f32.mxu0 0.0
  %1617 = vmatmul.mubr.f32.gmra.mrb[0].mxu0 %v1419
  %v1618 = vpop.f32.mrb[0].mxu0
  %v1619 = vadd.f32 %v1359, %v1618
  %v1620 = vpop.f32.mrb[0].mxu0
  %1621 = vmatprep.mubr.f32.mxu0 0.0
  %1622 = vmatmul.mubr.f32.gmra.mrb[0].mxu0 %v1422
  %v1623 = vpop.f32.mrb[0].mxu0
  %v1624 = vadd.f32 %v1359, %v1623
  %v1625 = vpop.f32.mrb[0].mxu0
  %1626 = vmatprep.mubr.f32.mxu0 0.0
  %1627 = vmatmul.mubr.f32.gmra.mrb[0].mxu0 %v1425
  %v1628 = vpop.f32.mrb[0].mxu0
  %v1629 = vadd.f32 %v1359, %v1628
  %v1630 = vpop.f32.mrb[0].mxu0
  %1631 = vmatprep.mubr.f32.mxu0 0.0
  %1632 = vmatmul.mubr.f32.gmra.mrb[0].mxu0 %v1428
  %v1633 = vpop.f32.mrb[0].mxu0
  %v1634 = vadd.f32 %v1359, %v1633
  %v1635 = vpop.f32.mrb[0].mxu0
  %1636 = vmatprep.mubr.f32.mxu0 0.0
  %1637 = vmatmul.mubr.f32.gmra.mrb[0].mxu0 %v1431
  %v1638 = vpop.f32.mrb[0].mxu0
  %v1639 = vadd.f32 %v1359, %v1638
  %v1640 = vpop.f32.mrb[0].mxu0
  %1641 = vmatprep.mubr.f32.mxu0 0.0
  %1642 = vmatmul.mubr.f32.gmra.mrb[0].mxu0 %v1434
  %v1643 = vpop.f32.mrb[0].mxu0
  %v1644 = vadd.f32 %v1359, %v1643
  %v1645 = vpop.f32.mrb[0].mxu0
  %1646 = vmatprep.mubr.f32.mxu0 0.0
  %1647 = vmatmul.mubr.f32.gmra.mrb[0].mxu0 %v1437
  %v1648 = vpop.f32.mrb[0].mxu0
  %v1649 = vadd.f32 %v1359, %v1648
  %v1650 = vpop.f32.mrb[0].mxu0
  %1651 = vmatprep.mubr.f32.mxu0 0.0
  %1652 = vmatmul.mubr.f32.gmra.mrb[0].mxu0 %v1440
  %v1653 = vpop.f32.mrb[0].mxu0
  %v1654 = vadd.f32 %v1359, %v1653
  %v1655 = vpop.f32.mrb[0].mxu0
  %1656 = vmatprep.mubr.f32.mxu0 0.0
  %1657 = vmatmul.mubr.f32.gmra.mrb[0].mxu0 %v1443
  %v1658 = vpop.f32.mrb[0].mxu0
  %v1659 = vadd.f32 %v1359, %v1658
  %v1660 = vpop.f32.mrb[0].mxu0
  %1661 = vmatprep.mubr.f32.mxu0 0.0
  %1662 = vmatmul.mubr.f32.gmra.mrb[0].mxu0 %v1446
  %v1663 = vpop.f32.mrb[0].mxu0
  %v1664 = vadd.f32 %v1359, %v1663
  %v1665 = vpop.f32.mrb[0].mxu0
  %1666 = vmatprep.mubr.f32.mxu0 0.0
  %1667 = vmatmul.mubr.f32.gmra.mrb[0].mxu0 %v1449
  %v1668 = vpop.f32.mrb[0].mxu0
  %v1669 = vadd.f32 %v1359, %v1668
  %v1670 = vpop.f32.mrb[0].mxu0
  %1671 = vmatprep.mubr.f32.mxu0 0.0
  %1672 = vmatmul.mubr.f32.gmra.mrb[0].mxu0 %v1452
  %v1673 = vpop.f32.mrb[0].mxu0
  %v1674 = vadd.f32 %v1359, %v1673
  %v1675 = vpop.f32.mrb[0].mxu0
  %1676 = vmatprep.mubr.f32.mxu0 0.0
  %1677 = vmatmul.mubr.f32.gmra.mrb[0].mxu0 %v1455
  %v1678 = vpop.f32.mrb[0].mxu0
  %v1679 = vadd.f32 %v1359, %v1678
  %v1680 = vpop.f32.mrb[0].mxu0
  %1681 = vdwg.mxu0
  %1682 = vst [vmem:[%s11] sm:$0xff] %v1524
  %1683 = vst [vmem:[%s11 + $0x8] sm:$0xff] %v1529
  %1684 = vst [vmem:[%s11 + $0x10] sm:$0xff] %v1534
  %1685 = vst [vmem:[%s11 + $0x18] sm:$0xff] %v1539
  %1686 = vst [vmem:[%s11 + $0x20] sm:$0xff] %v1544
  %1687 = vst [vmem:[%s11 + $0x28] sm:$0xff] %v1549
  %1688 = vst [vmem:[%s11 + $0x30] sm:$0xff] %v1554
  %1689 = vst [vmem:[%s11 + $0x38] sm:$0xff] %v1559
  %1690 = vst [vmem:[%s11 + $0x40] sm:$0xff] %v1564
  %1691 = vst [vmem:[%s11 + $0x48] sm:$0xff] %v1569
  %1692 = vst [vmem:[%s11 + $0x50] sm:$0xff] %v1574
  %1693 = vst [vmem:[%s11 + $0x58] sm:$0xff] %v1579
  %1694 = vst [vmem:[%s11 + $0x60] sm:$0xff] %v1584
  %1695 = vst [vmem:[%s11 + $0x68] sm:$0xff] %v1589
  %1696 = vst [vmem:[%s11 + $0x70] sm:$0xff] %v1594
  %1697 = vst [vmem:[%s11 + $0x78] sm:$0xff] %v1599
  %1698 = vst [vmem:[%s11 + $0x80] sm:$0xff] %v1604
  %1699 = vst [vmem:[%s11 + $0x88] sm:$0xff] %v1609
  %1700 = vst [vmem:[%s11 + $0x90] sm:$0xff] %v1614
  %1701 = vst [vmem:[%s11 + $0x98] sm:$0xff] %v1619
  %1702 = vst [vmem:[%s11 + $0xa0] sm:$0xff] %v1624
  %1703 = vst [vmem:[%s11 + $0xa8] sm:$0xff] %v1629
  %1704 = vst [vmem:[%s11 + $0xb0] sm:$0xff] %v1634
  %1705 = vst [vmem:[%s11 + $0xb8] sm:$0xff] %v1639
  %1706 = vst [vmem:[%s11 + $0xc0] sm:$0xff] %v1644
  %1707 = vst [vmem:[%s11 + $0xc8] sm:$0xff] %v1649
  %1708 = vst [vmem:[%s11 + $0xd0] sm:$0xff] %v1654
  %1709 = vst [vmem:[%s11 + $0xd8] sm:$0xff] %v1659
  %1710 = vst [vmem:[%s11 + $0xe0] sm:$0xff] %v1664
  %1711 = vst [vmem:[%s11 + $0xe8] sm:$0xff] %v1669
  %1712 = vst [vmem:[%s11 + $0xf0] sm:$0xff] %v1674
  %1713 = vst [vmem:[%s11 + $0xf8] sm:$0xff] %v1679
  // Predicated region
  $region46: #{kepce_gcn_forward.3} parent=0 // pred_check
    _
  $region47: #{kepce_gcn_forward.3} parent=0 // pred_check_branch
    %1715 = sbr.rel (0) target = $region49
  $region48: #{kepce_gcn_forward.3} parent=0 // pred_region
    _
  $region49: #{kepce_gcn_forward.3} parent=0 // pred_fallthru
    _
  // Predicated region
  $region50: #{kepce_gcn_forward.3} parent=0 // pred_check
    _
  $region51: #{kepce_gcn_forward.3} parent=0 // pred_check_branch
    %1717 = sbr.rel (0) target = $region53
  $region52: #{kepce_gcn_forward.3} parent=0 // pred_region
    _
  $region53: #{kepce_gcn_forward.3} parent=0 // pred_fallthru
    _

</llo_original>
